<compile_context>
chip_gen: v7x
topology: tpu7x:2x2x1
jax: 0.10.0
libtpu: 0.0.40
codegen_flags: <defaults>
</compile_context>

<pallas_src>
import jax
import jax.numpy as jnp
from jax.experimental import pallas as pl
from jax.experimental.pallas import tpu as pltpu


def _round_up(x: int, m: int) -> int:
    return (x + m - 1) // m * m


# ---------------------------------------------------------------------------
# Kernel body.  Grid = (batch tiles, output-N tiles).  Layers 1-2 depend only
# on the batch tile, so they run once per batch tile (first N step) and h5 is
# cached in VMEM scratch; layer 3 + tanh run per (batch tile, N tile).
# ---------------------------------------------------------------------------
def decoder_kernel(x_ref, w4_ref, b4_ref, w5_ref, b5_ref, w6_ref, b6_ref,
                   o_ref, h5_ref):
    @pl.when(pl.program_id(1) == 0)
    def _():
        h4 = jnp.dot(x_ref[...], w4_ref[...],
                     preferred_element_type=jnp.float32) + b4_ref[...]
        h4 = jnp.maximum(h4, 0.0)                          # ReLU (f32, VPU)
        h5 = jnp.dot(h4.astype(jnp.bfloat16), w5_ref[...],
                     preferred_element_type=jnp.float32) + b5_ref[...]
        h5 = jnp.maximum(h5, 0.0)                          # ReLU (f32, VPU)
        h5_ref[...] = h5.astype(jnp.bfloat16)              # MXU operand dtype

    h6 = jnp.dot(h5_ref[...], w6_ref[...],
                 preferred_element_type=jnp.float32) + b6_ref[...]
    o_ref[...] = jnp.tanh(h6).astype(o_ref.dtype)          # tanh (f32, EUP)


def _pick_tm(B: int) -> int:
    # Small batches: one exact tile (16-row granule keeps bf16 stores sublane
    # aligned) -> no wasted MXU rows, no wrapper pad beyond <=15 rows.
    if B <= 256:
        return max(16, _round_up(B, 16))
    # Large batches: 256-row tiles fill a v6e/v7x 256-wide MXU pass (2 passes on
    # v5e) and guarantee >= 2 grid steps so the v7x second TensorCore is used.
    return 256


def _pick_tn(wh_pad: int) -> int:
    # Keep the W6 block (h2 x tn bf16) and out tiles a few MiB so large
    # width*height stays well inside v7x's 64-MiB/TC VMEM.
    return wh_pad if wh_pad <= 2048 else 2048


def decoder_forward(x, prepared_params, out_dim, *, tm=None, tn=None,
                    out_dtype=jnp.bfloat16):
    """x: (B, 50) f32; prepared_params from prepare_decoder_params.

    Returns (B, out_dim) with out_dim = width * height (bf16 by default).
    """
    w4, b4, w5, b5, w6, b6 = prepared_params
    B, d_in_raw = x.shape
    d_in = w4.shape[0]          # padded input features (64)
    h1 = w4.shape[1]            # 512
    h2 = w5.shape[1]            # 1024
    wh = w6.shape[1]            # padded output features (multiple of 128)
    assert d_in_raw <= d_in and out_dim <= wh

    tm = _pick_tm(B) if tm is None else tm
    tn = _pick_tn(wh) if tn is None else tn
    assert wh % tn == 0 and tn % 128 == 0

    # Single fused cast+pad: kernel DMAs bf16 tiles; padding is inert (zero
    # weight rows, ReLU(0)=0, padded batch rows sliced off below).
    Bp = _round_up(B, tm)
    xp = jnp.zeros((Bp, d_in), jnp.bfloat16).at[:B, :d_in_raw].set(
        x.astype(jnp.bfloat16))

    grid = (Bp // tm, wh // tn)

    # VMEM footprint: every block is double-buffered by the pipeline (constant
    # -index blocks are DMA'd only once; the 2nd copy is just space), plus the
    # h5 scratch and f32 intermediates.  1.5x headroom, clamped to <= 32 MiB.
    out_bytes = jnp.dtype(out_dtype).itemsize
    blk_bytes = (
        2 * tm * d_in * 2                                   # x tiles (bf16)
        + 2 * (d_in * h1 + h1 * h2 + h2 * tn) * 2           # weight blocks (bf16)
        + 2 * (h1 + h2 + tn) * 4                            # bias blocks (f32)
        + 2 * tm * tn * out_bytes                           # out tiles
        + tm * h2 * 2                                       # h5 scratch (bf16)
        + tm * (h1 + h2 + tn) * 4                           # f32 intermediates
    )
    vmem_limit = int(min(32 << 20, max(16 << 20, (3 * blk_bytes) // 2)))

    const = lambda i, j: (0, 0)
    in_specs = [
        pl.BlockSpec((tm, d_in), lambda i, j: (i, 0)),      # x tile
        pl.BlockSpec((d_in, h1), const), pl.BlockSpec((1, h1), const),  # W4, b4
        pl.BlockSpec((h1, h2), const),   pl.BlockSpec((1, h2), const),  # W5, b5
        pl.BlockSpec((h2, tn), lambda i, j: (0, j)),        # W6 N-tile
        pl.BlockSpec((1, tn),  lambda i, j: (0, j)),        # b6 N-tile
    ]
    out_specs = pl.BlockSpec((tm, tn), lambda i, j: (i, j))

    out_padded = pl.pallas_call(
        decoder_kernel,
        out_shape=jax.ShapeDtypeStruct((Bp, wh), out_dtype),
        grid_spec=pltpu.PrefetchScalarGridSpec(
            num_scalar_prefetch=0,
            grid=grid,
            in_specs=in_specs,
            out_specs=out_specs,
            scratch_shapes=[pltpu.VMEM((tm, h2), jnp.bfloat16)],
        ),
        compiler_params=pltpu.CompilerParams(
            dimension_semantics=("parallel", "arbitrary"),  # batch || , N seq
            vmem_limit_bytes=vmem_limit,
        ),
    )(xp, w4, b4, w5, b5, w6, b6)

    return out_padded[:B, :out_dim]


def init_decoder_params(key, width, height):
    """Synthetic nn.Linear-style init; weights stored transposed as (in, out), f32."""
    wh = width * height
    dims = [(50, 500), (500, 1000), (1000, wh)]
    keys = jax.random.split(key, 2 * len(dims))
    params = []
    for li, (d_in, d_out) in enumerate(dims):
        bound = 1.0 / float(d_in) ** 0.5            # PyTorch default uniform bound
        w = jax.random.uniform(keys[2 * li], (d_in, d_out), jnp.float32, -bound, bound)
        b = jax.random.uniform(keys[2 * li + 1], (1, d_out), jnp.float32, -bound, bound)
        params += [w, b]
    return tuple(params)


def prepare_decoder_params(raw_params, *, d_in_pad=64, h1_pad=512, h2_pad=1024):
    """Zero-pad to lane/sublane-friendly dims; weights bf16, biases f32.

    Zero padding is inert: padded weight rows/cols and bias entries are zero,
    so padded channels carry ReLU(0)=0 / tanh(0)=0 and are sliced off.
    """
    w4, b4, w5, b5, w6, b6 = raw_params
    out_dim = w6.shape[1]
    wh_pad = _round_up(out_dim, 128)

    def pad2(a, rows, cols, dtype):
        z = jnp.zeros((rows, cols), dtype)
        return z.at[:a.shape[0], :a.shape[1]].set(a.astype(dtype))

    prepared = (
        pad2(w4, d_in_pad, h1_pad, jnp.bfloat16), pad2(b4, 1, h1_pad, jnp.float32),
        pad2(w5, h1_pad, h2_pad, jnp.bfloat16),   pad2(b5, 1, h2_pad, jnp.float32),
        pad2(w6, h2_pad, wh_pad, jnp.bfloat16),   pad2(b6, 1, wh_pad, jnp.float32),
    )
    return prepared, out_dim


def decoder_reference_f32(x, raw_params):
    w4, b4, w5, b5, w6, b6 = raw_params
    h4 = jax.nn.relu(x @ w4 + b4)
    h5 = jax.nn.relu(h4 @ w5 + b5)
    return jnp.tanh(h5 @ w6 + b6)


def decoder_reference_bf16(x, raw_params):
    """Mirrors the kernel's bf16-operand / f32-accumulate matmul numerics."""
    w4, b4, w5, b5, w6, b6 = raw_params
    bf, f32 = jnp.bfloat16, jnp.float32
    h4 = jax.nn.relu(jnp.dot(x.astype(bf), w4.astype(bf), preferred_element_type=f32) + b4)
    h5 = jax.nn.relu(jnp.dot(h4.astype(bf), w5.astype(bf), preferred_element_type=f32) + b5)
    return jnp.tanh(jnp.dot(h5.astype(bf), w6.astype(bf), preferred_element_type=f32) + b6)


if __name__ == "__main__":
    width, height = 16, 16     # output dim 256 (already a multiple of 128)
    batch = 64                 # small demo batch -> one exact 64-row tile (no pad)

    key = jax.random.PRNGKey(0)
    kx, kp = jax.random.split(key)
    x = jax.random.normal(kx, (batch, 50), dtype=jnp.float32)

    raw_params = init_decoder_params(kp, width, height)
    params, out_dim = prepare_decoder_params(raw_params)

    out = decoder_forward(x, params, out_dim)          # bf16 output by default
    out = jax.block_until_ready(out)
    assert out.shape == (batch, width * height)

    out_f32 = out.astype(jnp.float32)
    # Tight check vs a reference with identical bf16-operand / f32-accumulate
    # matmul numerics (remaining diff is the bf16 output store of tanh in [-1,1]).
    ref_bf16 = decoder_reference_bf16(x, raw_params)
    assert jnp.allclose(out_f32, ref_bf16, atol=1e-2, rtol=1e-2), \
        float(jnp.max(jnp.abs(out_f32 - ref_bf16)))
    # Loose check vs the pure-f32 PyTorch-equivalent forward.
    ref_f32 = decoder_reference_f32(x, raw_params)
    assert jnp.allclose(out_f32, ref_f32, atol=6e-2), \
        float(jnp.max(jnp.abs(out_f32 - ref_f32)))

    print("KERNEL_OK")
</pallas_src>

<mosaic_0001>
module attributes {stable_mosaic.version = 11 : i64} {
  func.func @decoder_kernel(%arg0: i32, %arg1: i32, %arg2: memref<64x64xbf16, #tpu.memory_space<vmem>>, %arg3: memref<64x512xbf16, #tpu.memory_space<vmem>>, %arg4: memref<1x512xf32, #tpu.memory_space<vmem>>, %arg5: memref<512x1024xbf16, #tpu.memory_space<vmem>>, %arg6: memref<1x1024xf32, #tpu.memory_space<vmem>>, %arg7: memref<1024x256xbf16, #tpu.memory_space<vmem>>, %arg8: memref<1x256xf32, #tpu.memory_space<vmem>>, %arg9: memref<64x256xbf16, #tpu.memory_space<vmem>>, %arg10: memref<64x1024xbf16, #tpu.memory_space<vmem>>) attributes {dimension_semantics = [#tpu.dimension_semantics<parallel>, #tpu.dimension_semantics<arbitrary>], iteration_bounds = array<i64: 1, 1>, scalar_prefetch = 0 : i64, scratch_operands = 1 : i64, tpu.core_type = #tpu.core_type<tc>, window_params = [{transform_indices = @transform_0, window_bounds = array<i64: 64, 64>}, {pipeline_mode = #tpu.pipeline_mode<synchronous>, transform_indices = @transform_1, window_bounds = array<i64: 64, 512>}, {pipeline_mode = #tpu.pipeline_mode<synchronous>, transform_indices = @transform_2, window_bounds = array<i64: 1, 512>}, {pipeline_mode = #tpu.pipeline_mode<synchronous>, transform_indices = @transform_3, window_bounds = array<i64: 512, 1024>}, {pipeline_mode = #tpu.pipeline_mode<synchronous>, transform_indices = @transform_4, window_bounds = array<i64: 1, 1024>}, {transform_indices = @transform_5, window_bounds = array<i64: 1024, 256>}, {transform_indices = @transform_6, window_bounds = array<i64: 1, 256>}, {transform_indices = @transform_7, window_bounds = array<i64: 64, 256>}]} {
    %c0_i32 = arith.constant 0 : i32
    %0 = arith.cmpi eq, %arg1, %c0_i32 : i32
    %1 = arith.extui %0 : i1 to i32
    %c0_i32_0 = arith.constant 0 : i32
    %2 = arith.cmpi ne, %1, %c0_i32_0 : i32
    scf.if %2 {
      %c0_8 = arith.constant 0 : index
      %c0_9 = arith.constant 0 : index
      %12 = vector.load %arg2[%c0_8, %c0_9] : memref<64x64xbf16, #tpu.memory_space<vmem>>, vector<64x64xbf16>
      %c0_10 = arith.constant 0 : index
      %c0_11 = arith.constant 0 : index
      %13 = vector.load %arg3[%c0_10, %c0_11] : memref<64x512xbf16, #tpu.memory_space<vmem>>, vector<64x512xbf16>
      %cst_12 = arith.constant dense<0.000000e+00> : vector<64x512xf32>
      %14 = tpu.matmul %12, %13, %cst_12 {dimension_numbers = #tpu.dot_dimension_numbers<[1], [0], [0], [1], [0, 0, 1, 1], [], []>} : vector<64x64xbf16>, vector<64x512xbf16>, vector<64x512xf32> -> vector<64x512xf32>
      %c0_13 = arith.constant 0 : index
      %c0_14 = arith.constant 0 : index
      %15 = vector.load %arg4[%c0_13, %c0_14] : memref<1x512xf32, #tpu.memory_space<vmem>>, vector<1x512xf32>
      %16 = vector.broadcast %15 : vector<1x512xf32> to vector<64x512xf32>
      %17 = arith.addf %14, %16 : vector<64x512xf32>
      %cst_15 = arith.constant 0.000000e+00 : f32
      %18 = vector.broadcast %cst_15 : f32 to vector<64x512xf32>
      %19 = arith.maximumf %17, %18 : vector<64x512xf32>
      %20 = arith.truncf %19 : vector<64x512xf32> to vector<64x512xbf16>
      %c0_16 = arith.constant 0 : index
      %c0_17 = arith.constant 0 : index
      %21 = vector.load %arg5[%c0_16, %c0_17] : memref<512x1024xbf16, #tpu.memory_space<vmem>>, vector<512x1024xbf16>
      %cst_18 = arith.constant dense<0.000000e+00> : vector<64x1024xf32>
      %22 = tpu.matmul %20, %21, %cst_18 {dimension_numbers = #tpu.dot_dimension_numbers<[1], [0], [0], [1], [0, 0, 1, 1], [], []>} : vector<64x512xbf16>, vector<512x1024xbf16>, vector<64x1024xf32> -> vector<64x1024xf32>
      %c0_19 = arith.constant 0 : index
      %c0_20 = arith.constant 0 : index
      %23 = vector.load %arg6[%c0_19, %c0_20] : memref<1x1024xf32, #tpu.memory_space<vmem>>, vector<1x1024xf32>
      %24 = vector.broadcast %23 : vector<1x1024xf32> to vector<64x1024xf32>
      %25 = arith.addf %22, %24 : vector<64x1024xf32>
      %cst_21 = arith.constant 0.000000e+00 : f32
      %26 = vector.broadcast %cst_21 : f32 to vector<64x1024xf32>
      %27 = arith.maximumf %25, %26 : vector<64x1024xf32>
      %28 = arith.truncf %27 : vector<64x1024xf32> to vector<64x1024xbf16>
      %c0_22 = arith.constant 0 : index
      %c0_23 = arith.constant 0 : index
      %29 = vector.load %arg10[%c0_22, %c0_23] : memref<64x1024xbf16, #tpu.memory_space<vmem>>, vector<64x1024xbf16>
      tpu.vector_store %arg10[%c0_22, %c0_23], %28 {strides = array<i32>} : memref<64x1024xbf16, #tpu.memory_space<vmem>>, vector<64x1024xbf16>,
    } else {
    }
    %c0 = arith.constant 0 : index
    %c0_1 = arith.constant 0 : index
    %3 = vector.load %arg10[%c0, %c0_1] : memref<64x1024xbf16, #tpu.memory_space<vmem>>, vector<64x1024xbf16>
    %c0_2 = arith.constant 0 : index
    %c0_3 = arith.constant 0 : index
    %4 = vector.load %arg7[%c0_2, %c0_3] : memref<1024x256xbf16, #tpu.memory_space<vmem>>, vector<1024x256xbf16>
    %cst = arith.constant dense<0.000000e+00> : vector<64x256xf32>
    %5 = tpu.matmul %3, %4, %cst {dimension_numbers = #tpu.dot_dimension_numbers<[1], [0], [0], [1], [0, 0, 1, 1], [], []>} : vector<64x1024xbf16>, vector<1024x256xbf16>, vector<64x256xf32> -> vector<64x256xf32>
    %c0_4 = arith.constant 0 : index
    %c0_5 = arith.constant 0 : index
    %6 = vector.load %arg8[%c0_4, %c0_5] : memref<1x256xf32, #tpu.memory_space<vmem>>, vector<1x256xf32>
    %7 = vector.broadcast %6 : vector<1x256xf32> to vector<64x256xf32>
    %8 = arith.addf %5, %7 : vector<64x256xf32>
    %9 = math.tanh %8 : vector<64x256xf32>
    %10 = arith.truncf %9 : vector<64x256xf32> to vector<64x256xbf16>
    %c0_6 = arith.constant 0 : index
    %c0_7 = arith.constant 0 : index
    %11 = vector.load %arg9[%c0_6, %c0_7] : memref<64x256xbf16, #tpu.memory_space<vmem>>, vector<64x256xbf16>
    tpu.vector_store %arg9[%c0_6, %c0_7], %10 {strides = array<i32>} : memref<64x256xbf16, #tpu.memory_space<vmem>>, vector<64x256xbf16>,
    return
  }
  func.func @transform_0(%arg0: i32, %arg1: i32) -> (i32, i32) {
    %c0_i32 = arith.constant 0 : i32
    %c0_i32_0 = arith.constant 0 : i32
    return %arg0, %c0_i32 : i32, i32
  }
  func.func @transform_1(%arg0: i32, %arg1: i32) -> (i32, i32) {
    %c0_i32 = arith.constant 0 : i32
    %c0_i32_0 = arith.constant 0 : i32
    %c0_i32_1 = arith.constant 0 : i32
    return %c0_i32, %c0_i32_0 : i32, i32
  }
  func.func @transform_2(%arg0: i32, %arg1: i32) -> (i32, i32) {
    %c0_i32 = arith.constant 0 : i32
    %c0_i32_0 = arith.constant 0 : i32
    %c0_i32_1 = arith.constant 0 : i32
    return %c0_i32, %c0_i32_0 : i32, i32
  }
  func.func @transform_3(%arg0: i32, %arg1: i32) -> (i32, i32) {
    %c0_i32 = arith.constant 0 : i32
    %c0_i32_0 = arith.constant 0 : i32
    %c0_i32_1 = arith.constant 0 : i32
    return %c0_i32, %c0_i32_0 : i32, i32
  }
  func.func @transform_4(%arg0: i32, %arg1: i32) -> (i32, i32) {
    %c0_i32 = arith.constant 0 : i32
    %c0_i32_0 = arith.constant 0 : i32
    %c0_i32_1 = arith.constant 0 : i32
    return %c0_i32, %c0_i32_0 : i32, i32
  }
  func.func @transform_5(%arg0: i32, %arg1: i32) -> (i32, i32) {
    %c0_i32 = arith.constant 0 : i32
    %c0_i32_0 = arith.constant 0 : i32
    return %c0_i32, %arg1 : i32, i32
  }
  func.func @transform_6(%arg0: i32, %arg1: i32) -> (i32, i32) {
    %c0_i32 = arith.constant 0 : i32
    %c0_i32_0 = arith.constant 0 : i32
    return %c0_i32, %arg1 : i32, i32
  }
  func.func @transform_7(%arg0: i32, %arg1: i32) -> (i32, i32) {
    %c0_i32 = arith.constant 0 : i32
    return %arg0, %arg1 : i32, i32
  }
}

</mosaic_0001>

<llo_original>
// kernel: tpu_custom_call.1
$region0: #{tpu_custom_call.1}
  #allocation0 [shape = 'u32[]', space=smem, size = 0x4, offset = 0x4, fixed_abs, tag = 'smem constant byte address 0x4 - core index']
  #allocation1 [shape = 'u32[144,128]{1,0:T(1,128)}', space=vmem, size = 0x12000, scoped, tag = 'internal scratch']
  #allocation2 [shape = 'bf16[64,1024]{1,0:T(16,128)(2,1)}', space=vmem, size = 0x20000, scoped, tag = 'scratch operand']
  %s0 = inlined_call_operand.hbm [shape: bf16[64,64], index: 0, kind: input, shape index: {}]
  %s1 = inlined_call_operand.hbm [shape: bf16[64,512], index: 1, kind: input, shape index: {}]
  %s2 = inlined_call_operand.vmem [shape: f32[1,512], index: 2, kind: input, shape index: {}]
  %s3 = inlined_call_operand.hbm [shape: bf16[512,1024], index: 3, kind: input, shape index: {}]
  %s4 = inlined_call_operand.vmem [shape: f32[1,1024], index: 4, kind: input, shape index: {}]
  %s5 = inlined_call_operand.hbm [shape: bf16[1024,256], index: 5, kind: input, shape index: {}]
  %s6 = inlined_call_operand.vmem [shape: f32[1,256], index: 6, kind: input, shape index: {}]
  %s7 = inlined_call_operand.hbm [shape: bf16[64,256], index: 7, kind: output, shape index: {}]
  %s8 = sld [smem:[#allocation0]]
  $region58: #{tpu_custom_call.1} parent=0
    _
  %s10 = ssub.s32 1, %s8
  %s11 = scalar_select 0, %s10, %s8
  $region1: #{tpu_custom_call.1} parent=0
    #allocation3 [shape = 'u8[16384]{0}', space=vmem, size = 0x4000, scoped, tag = 'input window, operand 0, single buffered']
    #allocation4 [shape = 's32[1]{0}', space=sflag, size = 0x4, scoped, tag = 'scoped memory for tpu_custom_call.1']
    #allocation5 [shape = 's32[1]{0}', space=sflag, size = 0x4, scoped, tag = 'scoped memory for tpu_custom_call.1']
    #allocation6 [shape = 'u8[65536]{0}', space=vmem, size = 0x10000, scoped, tag = 'input window, operand 1, single buffered']
    #allocation7 [shape = 's32[1]{0}', space=sflag, size = 0x4, scoped, tag = 'scoped memory for tpu_custom_call.1']
    #allocation8 [shape = 'u8[1048576]{0}', space=vmem, size = 0x100000, scoped, tag = 'input window, operand 3, single buffered']
    #allocation9 [shape = 'u8[524288]{0}', space=vmem, size = 0x80000, scoped, tag = 'input window, operand 5, single buffered']
    #allocation10 [shape = 's32[1]{0}', space=sflag, size = 0x4, scoped, tag = 'scoped memory for tpu_custom_call.1']
    #allocation11 [shape = 'u8[32768]{0}', space=vmem, size = 0x8000, scoped, tag = 'output window, operand 0, single buffered']
    %12 = vsyncpa [#allocation4], 0
    %13 = vsyncpa [#allocation7], 0
    %14 = vsyncpa [#allocation10], 0
    %15 = vsyncpa [#allocation5], 0
    // Predicated region
    $region2: #{tpu_custom_call.1} parent=1 // pred_check
      _
    $region3: #{tpu_custom_call.1} parent=1 // pred_check_branch
      %17 = sbr.rel (0) target = $region5
    $region4: #{tpu_custom_call.1} parent=1 // pred_region
      %s19 = ssub.s32 512, 512
      %20 = vsyncadd [#allocation4], %s19
      %s21 = sshll.u32 [#allocation3], 4
      %s22 = int_to_ptr.vmem [resolvable:$true] %s21
      %27 = dma.hbm_to_vmem [thread:$0]  %s0, 512, %s22, [#allocation4], 64, 64, 4
    $region5: #{tpu_custom_call.1} parent=1 // pred_fallthru
      _
    // Predicated region
    $region6: #{tpu_custom_call.1} parent=1 // pred_check
      _
    $region7: #{tpu_custom_call.1} parent=1 // pred_check_branch
      %29 = sbr.rel (0) target = $region9
    $region8: #{tpu_custom_call.1} parent=1 // pred_region
      %s31 = ssub.s32 2048, 2048
      %32 = vsyncadd [#allocation7], %s31
      %s33 = sshll.u32 [#allocation6], 4
      %s34 = int_to_ptr.vmem [resolvable:$true] %s33
      %39 = dma.hbm_to_vmem [thread:$0]  %s1, 2048, %s34, [#allocation7], 256, 256, 16
    $region9: #{tpu_custom_call.1} parent=1 // pred_fallthru
      _
    // Predicated region
    $region10: #{tpu_custom_call.1} parent=1 // pred_check
      _
    $region11: #{tpu_custom_call.1} parent=1 // pred_check_branch
      %41 = sbr.rel (0) target = $region13
    $region12: #{tpu_custom_call.1} parent=1 // pred_region
      _
    $region13: #{tpu_custom_call.1} parent=1 // pred_fallthru
      _
    // Predicated region
    $region14: #{tpu_custom_call.1} parent=1 // pred_check
      _
    $region15: #{tpu_custom_call.1} parent=1 // pred_check_branch
      %43 = sbr.rel (0) target = $region17
    $region16: #{tpu_custom_call.1} parent=1 // pred_region
      %s45 = ssub.s32 32768, 32768
      %46 = vsyncadd [#allocation7], %s45
      %s47 = sshll.u32 [#allocation8], 4
      %s48 = int_to_ptr.vmem [resolvable:$true] %s47
      %53 = dma.hbm_to_vmem [thread:$0]  %s3, 32768, %s48, [#allocation7], 512, 512, 32
    $region17: #{tpu_custom_call.1} parent=1 // pred_fallthru
      _
    // Predicated region
    $region18: #{tpu_custom_call.1} parent=1 // pred_check
      _
    $region19: #{tpu_custom_call.1} parent=1 // pred_check_branch
      %55 = sbr.rel (0) target = $region21
    $region20: #{tpu_custom_call.1} parent=1 // pred_region
      _
    $region21: #{tpu_custom_call.1} parent=1 // pred_fallthru
      _
    // Predicated region
    $region22: #{tpu_custom_call.1} parent=1 // pred_check
      _
    $region23: #{tpu_custom_call.1} parent=1 // pred_check_branch
      %57 = sbr.rel (0) target = $region25
    $region24: #{tpu_custom_call.1} parent=1 // pred_region
      %s59 = ssub.s32 16384, 16384
      %60 = vsyncadd [#allocation10], %s59
      %s61 = sshll.u32 [#allocation9], 4
      %s62 = int_to_ptr.vmem [resolvable:$true] %s61
      %67 = dma.hbm_to_vmem [thread:$0]  %s5, 16384, %s62, [#allocation10], 128, 128, 8
    $region25: #{tpu_custom_call.1} parent=1 // pred_fallthru
      _
    // Predicated region
    $region26: #{tpu_custom_call.1} parent=1 // pred_check
      _
    $region27: #{tpu_custom_call.1} parent=1 // pred_check_branch
      %69 = sbr.rel (0) target = $region29
    $region28: #{tpu_custom_call.1} parent=1 // pred_region
      _
    $region29: #{tpu_custom_call.1} parent=1 // pred_fallthru
      _
    // Predicated region
    $region30: #{tpu_custom_call.1} parent=1 // pred_check
      _
    $region31: #{tpu_custom_call.1} parent=1 // pred_check_branch
      %71 = sbr.rel (0) target = $region33
    $region32: #{tpu_custom_call.1} parent=1 // pred_region
      %72 = dma.done [#allocation4], 512
    $region33: #{tpu_custom_call.1} parent=1 // pred_fallthru
      _
    // Predicated region
    $region34: #{tpu_custom_call.1} parent=1 // pred_check
      _
    $region35: #{tpu_custom_call.1} parent=1 // pred_check_branch
      %74 = sbr.rel (0) target = $region37
    $region36: #{tpu_custom_call.1} parent=1 // pred_region
      %75 = dma.done [#allocation7], 2048
    $region37: #{tpu_custom_call.1} parent=1 // pred_fallthru
      _
    // Predicated region
    $region38: #{tpu_custom_call.1} parent=1 // pred_check
      _
    $region39: #{tpu_custom_call.1} parent=1 // pred_check_branch
      %77 = sbr.rel (0) target = $region41
    $region40: #{tpu_custom_call.1} parent=1 // pred_region
      %78 = dma.done [#allocation7], 32768
    $region41: #{tpu_custom_call.1} parent=1 // pred_fallthru
      _
    // Predicated region
    $region42: #{tpu_custom_call.1} parent=1 // pred_check
      _
    $region43: #{tpu_custom_call.1} parent=1 // pred_check_branch
      %80 = sbr.rel (0) target = $region45
    $region44: #{tpu_custom_call.1} parent=1 // pred_region
      %81 = dma.done [#allocation10], 16384
    $region45: #{tpu_custom_call.1} parent=1 // pred_fallthru
      _
    %p83 = scmp.eq.s32.totalorder 0, 0
    // Predicated region
    $region46: #{tpu_custom_call.1} parent=1 // pred_check
      %p84 = pneg %p83
    $region47: #{tpu_custom_call.1} parent=1 // pred_check_branch
      %86 = sbr.rel (%p84) target = $region49
    $region48: #{tpu_custom_call.1} parent=1 // pred_region
      %v87 = vld [vmem:[#allocation3] sm:$0xf]
      %v88 = vld [vmem:[#allocation3 + $0x4] sm:$0xf]
      %v89 = vld [vmem:[#allocation3 + $0x8] sm:$0xf]
      %v90 = vld [vmem:[#allocation3 + $0xc] sm:$0xf]
      %v91 = vld [vmem:[#allocation3 + $0x10] sm:$0xf]
      %v92 = vld [vmem:[#allocation3 + $0x14] sm:$0xf]
      %v93 = vld [vmem:[#allocation3 + $0x18] sm:$0xf]
      %v94 = vld [vmem:[#allocation3 + $0x1c] sm:$0xf]
      %v95 = vld [vmem:[#allocation6] sm:$0xff]
      %v96 = vld [vmem:[#allocation6 + $0x8] sm:$0xff]
      %v97 = vld [vmem:[#allocation6 + $0x10] sm:$0xff]
      %v98 = vld [vmem:[#allocation6 + $0x18] sm:$0xff]
      %v99 = vld [vmem:[#allocation6 + $0x20] sm:$0xff]
      %v100 = vld [vmem:[#allocation6 + $0x28] sm:$0xff]
      %v101 = vld [vmem:[#allocation6 + $0x30] sm:$0xff]
      %v102 = vld [vmem:[#allocation6 + $0x38] sm:$0xff]
      %v103 = vld [vmem:[#allocation6 + $0x40] sm:$0xff]
      %v104 = vld [vmem:[#allocation6 + $0x48] sm:$0xff]
      %v105 = vld [vmem:[#allocation6 + $0x50] sm:$0xff]
      %v106 = vld [vmem:[#allocation6 + $0x58] sm:$0xff]
      %v107 = vld [vmem:[#allocation6 + $0x60] sm:$0xff]
      %v108 = vld [vmem:[#allocation6 + $0x68] sm:$0xff]
      %v109 = vld [vmem:[#allocation6 + $0x70] sm:$0xff]
      %v110 = vld [vmem:[#allocation6 + $0x78] sm:$0xff]
      %v111 = vld [vmem:[%s2] sm:$0xf]
      %v113 = vlaneseq
      %v114 = vshrl.u32 %v113, 7
      %v115 = vsub.s32 0, %v114
      %v116 = vrot.slane %v111, %v115
      %v117 = vlaneseq
      %v118 = vshrl.u32 %v117, 7
      %v119 = vsub.s32 1, %v118
      %v120 = vrot.slane %v111, %v119
      %v121 = vlaneseq
      %v122 = vshrl.u32 %v121, 7
      %v123 = vsub.s32 2, %v122
      %v124 = vrot.slane %v111, %v123
      %v125 = vlaneseq
      %v126 = vshrl.u32 %v125, 7
      %v127 = vsub.s32 3, %v126
      %v128 = vrot.slane %v111, %v127
      %v141 = vunpack.c.l.b16 %v87
      %v142 = vunpack.c.l.b16 %v88
      %v143 = vunpack.c.l.b16 %v89
      %v144 = vunpack.c.l.b16 %v90
      %v145 = vunpack.c.l.b16 %v91
      %v146 = vunpack.c.l.b16 %v92
      %v147 = vunpack.c.l.b16 %v93
      %v148 = vunpack.c.l.b16 %v94
      %v149 = vpack.c.b16 %v142, %v141
      %v150 = vpack.c.b16 %v144, %v143
      %v151 = vpack.c.b16 %v146, %v145
      %v152 = vpack.c.b16 %v148, %v147
      %v169 = vunpack.c.l.b16 %v95
      %v170 = vunpack.c.h.b16 %v95
      %v171 = vunpack.c.l.b16 %v96
      %v172 = vunpack.c.h.b16 %v96
      %v173 = vunpack.c.l.b16 %v97
      %v174 = vunpack.c.h.b16 %v97
      %v175 = vunpack.c.l.b16 %v98
      %v176 = vunpack.c.h.b16 %v98
      %v177 = vunpack.c.l.b16 %v99
      %v178 = vunpack.c.h.b16 %v99
      %v179 = vunpack.c.l.b16 %v100
      %v180 = vunpack.c.h.b16 %v100
      %v181 = vunpack.c.l.b16 %v101
      %v182 = vunpack.c.h.b16 %v101
      %v183 = vunpack.c.l.b16 %v102
      %v184 = vunpack.c.h.b16 %v102
      %v185 = vunpack.c.l.b16 %v103
      %v186 = vunpack.c.h.b16 %v103
      %v187 = vunpack.c.l.b16 %v104
      %v188 = vunpack.c.h.b16 %v104
      %v189 = vunpack.c.l.b16 %v105
      %v190 = vunpack.c.h.b16 %v105
      %v191 = vunpack.c.l.b16 %v106
      %v192 = vunpack.c.h.b16 %v106
      %v193 = vunpack.c.l.b16 %v107
      %v194 = vunpack.c.h.b16 %v107
      %v195 = vunpack.c.l.b16 %v108
      %v196 = vunpack.c.h.b16 %v108
      %v197 = vunpack.c.l.b16 %v109
      %v198 = vunpack.c.h.b16 %v109
      %v199 = vunpack.c.l.b16 %v110
      %v200 = vunpack.c.h.b16 %v110
      %v201 = vpack.c.b16 %v173, %v169
      %v202 = vpack.c.b16 %v174, %v170
      %v203 = vpack.c.b16 %v175, %v171
      %v204 = vpack.c.b16 %v176, %v172
      %v205 = vpack.c.b16 %v181, %v177
      %v206 = vpack.c.b16 %v182, %v178
      %v207 = vpack.c.b16 %v183, %v179
      %v208 = vpack.c.b16 %v184, %v180
      %v209 = vpack.c.b16 %v189, %v185
      %v210 = vpack.c.b16 %v190, %v186
      %v211 = vpack.c.b16 %v191, %v187
      %v212 = vpack.c.b16 %v192, %v188
      %v213 = vpack.c.b16 %v197, %v193
      %v214 = vpack.c.b16 %v198, %v194
      %v215 = vpack.c.b16 %v199, %v195
      %v216 = vpack.c.b16 %v200, %v196
      %vm233 = vcmask 523264
      %v235 = vsel %vm233, %v149, 0
      %v238 = vsel %vm233, %v150, 0
      %v241 = vsel %vm233, %v151, 0
      %v244 = vsel %vm233, %v152, 0
      %246 = vmatprep.subr.bf16.mxu0 %v202
      %247 = vmatpush1.bf16.msra.mxu0 %v201
      %248 = vmatprep.subr.bf16.mxu0 %v206
      %249 = vmatpush1.bf16.msra.mxu0 %v205
      %250 = vmatprep.subr.bf16.mxu0 %v210
      %251 = vmatpush1.bf16.msra.mxu0 %v209
      %252 = vmatprep.subr.bf16.mxu0 %v214
      %253 = vmatpush1.bf16.msra.mxu0 %v213
      %254 = vmatprep.subr.bf16.mxu0 0
      %255 = vmatpush1.bf16.msra.mxu0 0
      %256 = vmatprep.subr.bf16.mxu0 0
      %257 = vmatpush1.bf16.msra.mxu0 0
      %258 = vmatprep.subr.bf16.mxu0 0
      %259 = vmatpush1.bf16.msra.mxu0 0
      %260 = vmatprep.subr.bf16.mxu0 0
      %261 = vmatpush1.bf16.msra.mxu0 0
      %262 = vmatprep.subr.bf16.mxu0 0
      %263 = vmatpush1.bf16.msra.mxu0 0
      %264 = vmatprep.subr.bf16.mxu0 0
      %265 = vmatpush1.bf16.msra.mxu0 0
      %266 = vmatprep.subr.bf16.mxu0 0
      %267 = vmatpush1.bf16.msra.mxu0 0
      %268 = vmatprep.subr.bf16.mxu0 0
      %269 = vmatpush1.bf16.msra.mxu0 0
      %270 = vmatprep.subr.bf16.mxu0 0
      %271 = vmatpush1.bf16.msra.mxu0 0
      %272 = vmatprep.subr.bf16.mxu0 0
      %273 = vmatpush1.bf16.msra.mxu0 0
      %274 = vmatprep.subr.bf16.mxu0 0
      %275 = vmatpush1.bf16.msra.mxu0 0
      %276 = vmatprep.subr.bf16.mxu0 0
      %277 = vmatpush1.bf16.msra.mxu0 0
      %278 = vmatprep.mubr.bf16.mxu0 0
      %279 = vmatmul.mubr.bf16.gmra.mrb[0].mxu0 %v235
      %v280 = vpop.f32.mrb[0].mxu0
      %v281 = vadd.f32 %v116, %v280
      %v282 = vpop.f32.mrb[0].mxu0
      %v283 = vadd.f32 %v120, %v282
      %v284 = vpop.f32.mrb[0].mxu0
      %v285 = vadd.f32 %v116, %v284
      %v286 = vpop.f32.mrb[0].mxu0
      %v287 = vadd.f32 %v120, %v286
      %288 = vmatprep.mubr.bf16.mxu0 0
      %289 = vmatmul.mubr.bf16.gmra.mrb[0].mxu0 %v238
      %v290 = vpop.f32.mrb[0].mxu0
      %v291 = vadd.f32 %v116, %v290
      %v292 = vpop.f32.mrb[0].mxu0
      %v293 = vadd.f32 %v120, %v292
      %v294 = vpop.f32.mrb[0].mxu0
      %v295 = vadd.f32 %v116, %v294
      %v296 = vpop.f32.mrb[0].mxu0
      %v297 = vadd.f32 %v120, %v296
      %298 = vmatprep.mubr.bf16.mxu0 0
      %299 = vmatmul.mubr.bf16.gmra.mrb[0].mxu0 %v241
      %v300 = vpop.f32.mrb[0].mxu0
      %v301 = vadd.f32 %v116, %v300
      %v302 = vpop.f32.mrb[0].mxu0
      %v303 = vadd.f32 %v120, %v302
      %v304 = vpop.f32.mrb[0].mxu0
      %v305 = vadd.f32 %v116, %v304
      %v306 = vpop.f32.mrb[0].mxu0
      %v307 = vadd.f32 %v120, %v306
      %308 = vmatprep.mubr.bf16.mxu0 0
      %309 = vmatmul.mubr.bf16.gmra.mrb[0].mxu0 %v244
      %v310 = vpop.f32.mrb[0].mxu0
      %v311 = vadd.f32 %v116, %v310
      %v312 = vpop.f32.mrb[0].mxu0
      %v313 = vadd.f32 %v120, %v312
      %v314 = vpop.f32.mrb[0].mxu0
      %v315 = vadd.f32 %v116, %v314
      %v316 = vpop.f32.mrb[0].mxu0
      %v317 = vadd.f32 %v120, %v316
      %318 = vdwg.mxu0
      %319 = vmatprep.subr.bf16.mxu0 %v204
      %320 = vmatpush1.bf16.msra.mxu0 %v203
      %321 = vmatprep.subr.bf16.mxu0 %v208
      %322 = vmatpush1.bf16.msra.mxu0 %v207
      %323 = vmatprep.subr.bf16.mxu0 %v212
      %324 = vmatpush1.bf16.msra.mxu0 %v211
      %325 = vmatprep.subr.bf16.mxu0 %v216
      %326 = vmatpush1.bf16.msra.mxu0 %v215
      %327 = vmatprep.subr.bf16.mxu0 0
      %328 = vmatpush1.bf16.msra.mxu0 0
      %329 = vmatprep.subr.bf16.mxu0 0
      %330 = vmatpush1.bf16.msra.mxu0 0
      %331 = vmatprep.subr.bf16.mxu0 0
      %332 = vmatpush1.bf16.msra.mxu0 0
      %333 = vmatprep.subr.bf16.mxu0 0
      %334 = vmatpush1.bf16.msra.mxu0 0
      %335 = vmatprep.subr.bf16.mxu0 0
      %336 = vmatpush1.bf16.msra.mxu0 0
      %337 = vmatprep.subr.bf16.mxu0 0
      %338 = vmatpush1.bf16.msra.mxu0 0
      %339 = vmatprep.subr.bf16.mxu0 0
      %340 = vmatpush1.bf16.msra.mxu0 0
      %341 = vmatprep.subr.bf16.mxu0 0
      %342 = vmatpush1.bf16.msra.mxu0 0
      %343 = vmatprep.subr.bf16.mxu0 0
      %344 = vmatpush1.bf16.msra.mxu0 0
      %345 = vmatprep.subr.bf16.mxu0 0
      %346 = vmatpush1.bf16.msra.mxu0 0
      %347 = vmatprep.subr.bf16.mxu0 0
      %348 = vmatpush1.bf16.msra.mxu0 0
      %349 = vmatprep.subr.bf16.mxu0 0
      %350 = vmatpush1.bf16.msra.mxu0 0
      %351 = vmatprep.mubr.bf16.mxu0 0
      %352 = vmatmul.mubr.bf16.gmra.mrb[0].mxu0 %v235
      %v353 = vpop.f32.mrb[0].mxu0
      %v354 = vadd.f32 %v124, %v353
      %v355 = vpop.f32.mrb[0].mxu0
      %v356 = vadd.f32 %v128, %v355
      %v357 = vpop.f32.mrb[0].mxu0
      %v358 = vadd.f32 %v124, %v357
      %v359 = vpop.f32.mrb[0].mxu0
      %v360 = vadd.f32 %v128, %v359
      %361 = vmatprep.mubr.bf16.mxu0 0
      %362 = vmatmul.mubr.bf16.gmra.mrb[0].mxu0 %v238
      %v363 = vpop.f32.mrb[0].mxu0
      %v364 = vadd.f32 %v124, %v363
      %v365 = vpop.f32.mrb[0].mxu0
      %v366 = vadd.f32 %v128, %v365
      %v367 = vpop.f32.mrb[0].mxu0
      %v368 = vadd.f32 %v124, %v367
      %v369 = vpop.f32.mrb[0].mxu0
      %v370 = vadd.f32 %v128, %v369
      %371 = vmatprep.mubr.bf16.mxu0 0
      %372 = vmatmul.mubr.bf16.gmra.mrb[0].mxu0 %v241
      %v373 = vpop.f32.mrb[0].mxu0
      %v374 = vadd.f32 %v124, %v373
      %v375 = vpop.f32.mrb[0].mxu0
      %v376 = vadd.f32 %v128, %v375
      %v377 = vpop.f32.mrb[0].mxu0
      %v378 = vadd.f32 %v124, %v377
      %v379 = vpop.f32.mrb[0].mxu0
      %v380 = vadd.f32 %v128, %v379
      %381 = vmatprep.mubr.bf16.mxu0 0
      %382 = vmatmul.mubr.bf16.gmra.mrb[0].mxu0 %v244
      %v383 = vpop.f32.mrb[0].mxu0
      %v384 = vadd.f32 %v124, %v383
      %v385 = vpop.f32.mrb[0].mxu0
      %v386 = vadd.f32 %v128, %v385
      %v387 = vpop.f32.mrb[0].mxu0
      %v388 = vadd.f32 %v124, %v387
      %v389 = vpop.f32.mrb[0].mxu0
      %v390 = vadd.f32 %v128, %v389
      %391 = vdwg.mxu0
      %v392 = vmax.f32 %v281, 0.0
      %v393 = vmax.f32 %v283, 0.0
      %v394 = vmax.f32 %v354, 0.0
      %v395 = vmax.f32 %v356, 0.0
      %v396 = vmax.f32 %v285, 0.0
      %v397 = vmax.f32 %v287, 0.0
      %v398 = vmax.f32 %v358, 0.0
      %v399 = vmax.f32 %v360, 0.0
      %v400 = vmax.f32 %v291, 0.0
      %v401 = vmax.f32 %v293, 0.0
      %v402 = vmax.f32 %v364, 0.0
      %v403 = vmax.f32 %v366, 0.0
      %v404 = vmax.f32 %v295, 0.0
      %v405 = vmax.f32 %v297, 0.0
      %v406 = vmax.f32 %v368, 0.0
      %v407 = vmax.f32 %v370, 0.0
      %v408 = vmax.f32 %v301, 0.0
      %v409 = vmax.f32 %v303, 0.0
      %v410 = vmax.f32 %v374, 0.0
      %v411 = vmax.f32 %v376, 0.0
      %v412 = vmax.f32 %v305, 0.0
      %v413 = vmax.f32 %v307, 0.0
      %v414 = vmax.f32 %v378, 0.0
      %v415 = vmax.f32 %v380, 0.0
      %v416 = vmax.f32 %v311, 0.0
      %v417 = vmax.f32 %v313, 0.0
      %v418 = vmax.f32 %v384, 0.0
      %v419 = vmax.f32 %v386, 0.0
      %v420 = vmax.f32 %v315, 0.0
      %v421 = vmax.f32 %v317, 0.0
      %v422 = vmax.f32 %v388, 0.0
      %v423 = vmax.f32 %v390, 0.0
      %v424 = vpack.c.bf16 %v396, %v392
      %v425 = vpack.c.bf16 %v397, %v393
      %v426 = vpack.c.bf16 %v398, %v394
      %v427 = vpack.c.bf16 %v399, %v395
      %v428 = vpack.c.bf16 %v404, %v400
      %v429 = vpack.c.bf16 %v405, %v401
      %v430 = vpack.c.bf16 %v406, %v402
      %v431 = vpack.c.bf16 %v407, %v403
      %v432 = vpack.c.bf16 %v412, %v408
      %v433 = vpack.c.bf16 %v413, %v409
      %v434 = vpack.c.bf16 %v414, %v410
      %v435 = vpack.c.bf16 %v415, %v411
      %v436 = vpack.c.bf16 %v420, %v416
      %v437 = vpack.c.bf16 %v421, %v417
      %v438 = vpack.c.bf16 %v422, %v418
      %v439 = vpack.c.bf16 %v423, %v419
      %v440 = vld [vmem:[#allocation8] sm:$0xff]
      %v441 = vld [vmem:[#allocation8 + $0x8] sm:$0xff]
      %v442 = vld [vmem:[#allocation8 + $0x10] sm:$0xff]
      %v443 = vld [vmem:[#allocation8 + $0x18] sm:$0xff]
      %v444 = vld [vmem:[#allocation8 + $0x20] sm:$0xff]
      %v445 = vld [vmem:[#allocation8 + $0x28] sm:$0xff]
      %v446 = vld [vmem:[#allocation8 + $0x30] sm:$0xff]
      %v447 = vld [vmem:[#allocation8 + $0x38] sm:$0xff]
      %v448 = vld [vmem:[#allocation8 + $0x40] sm:$0xff]
      %v449 = vld [vmem:[#allocation8 + $0x48] sm:$0xff]
      %v450 = vld [vmem:[#allocation8 + $0x50] sm:$0xff]
      %v451 = vld [vmem:[#allocation8 + $0x58] sm:$0xff]
      %v452 = vld [vmem:[#allocation8 + $0x60] sm:$0xff]
      %v453 = vld [vmem:[#allocation8 + $0x68] sm:$0xff]
      %v454 = vld [vmem:[#allocation8 + $0x70] sm:$0xff]
      %v455 = vld [vmem:[#allocation8 + $0x78] sm:$0xff]
      %v456 = vld [vmem:[#allocation8 + $0x80] sm:$0xff]
      %v457 = vld [vmem:[#allocation8 + $0x88] sm:$0xff]
      %v458 = vld [vmem:[#allocation8 + $0x90] sm:$0xff]
      %v459 = vld [vmem:[#allocation8 + $0x98] sm:$0xff]
      %v460 = vld [vmem:[#allocation8 + $0xa0] sm:$0xff]
      %v461 = vld [vmem:[#allocation8 + $0xa8] sm:$0xff]
      %v462 = vld [vmem:[#allocation8 + $0xb0] sm:$0xff]
      %v463 = vld [vmem:[#allocation8 + $0xb8] sm:$0xff]
      %v464 = vld [vmem:[#allocation8 + $0xc0] sm:$0xff]
      %v465 = vld [vmem:[#allocation8 + $0xc8] sm:$0xff]
      %v466 = vld [vmem:[#allocation8 + $0xd0] sm:$0xff]
      %v467 = vld [vmem:[#allocation8 + $0xd8] sm:$0xff]
      %v468 = vld [vmem:[#allocation8 + $0xe0] sm:$0xff]
      %v469 = vld [vmem:[#allocation8 + $0xe8] sm:$0xff]
      %v470 = vld [vmem:[#allocation8 + $0xf0] sm:$0xff]
      %v471 = vld [vmem:[#allocation8 + $0xf8] sm:$0xff]
      %v472 = vld [vmem:[#allocation8 + $0x100] sm:$0xff]
      %v473 = vld [vmem:[#allocation8 + $0x108] sm:$0xff]
      %v474 = vld [vmem:[#allocation8 + $0x110] sm:$0xff]
      %v475 = vld [vmem:[#allocation8 + $0x118] sm:$0xff]
      %v476 = vld [vmem:[#allocation8 + $0x120] sm:$0xff]
      %v477 = vld [vmem:[#allocation8 + $0x128] sm:$0xff]
      %v478 = vld [vmem:[#allocation8 + $0x130] sm:$0xff]
      %v479 = vld [vmem:[#allocation8 + $0x138] sm:$0xff]
      %v480 = vld [vmem:[#allocation8 + $0x140] sm:$0xff]
      %v481 = vld [vmem:[#allocation8 + $0x148] sm:$0xff]
      %v482 = vld [vmem:[#allocation8 + $0x150] sm:$0xff]
      %v483 = vld [vmem:[#allocation8 + $0x158] sm:$0xff]
      %v484 = vld [vmem:[#allocation8 + $0x160] sm:$0xff]
      %v485 = vld [vmem:[#allocation8 + $0x168] sm:$0xff]
      %v486 = vld [vmem:[#allocation8 + $0x170] sm:$0xff]
      %v487 = vld [vmem:[#allocation8 + $0x178] sm:$0xff]
      %v488 = vld [vmem:[#allocation8 + $0x180] sm:$0xff]
      %v489 = vld [vmem:[#allocation8 + $0x188] sm:$0xff]
      %v490 = vld [vmem:[#allocation8 + $0x190] sm:$0xff]
      %v491 = vld [vmem:[#allocation8 + $0x198] sm:$0xff]
      %v492 = vld [vmem:[#allocation8 + $0x1a0] sm:$0xff]
      %v493 = vld [vmem:[#allocation8 + $0x1a8] sm:$0xff]
      %v494 = vld [vmem:[#allocation8 + $0x1b0] sm:$0xff]
      %v495 = vld [vmem:[#allocation8 + $0x1b8] sm:$0xff]
      %v496 = vld [vmem:[#allocation8 + $0x1c0] sm:$0xff]
      %v497 = vld [vmem:[#allocation8 + $0x1c8] sm:$0xff]
      %v498 = vld [vmem:[#allocation8 + $0x1d0] sm:$0xff]
      %v499 = vld [vmem:[#allocation8 + $0x1d8] sm:$0xff]
      %v500 = vld [vmem:[#allocation8 + $0x1e0] sm:$0xff]
      %v501 = vld [vmem:[#allocation8 + $0x1e8] sm:$0xff]
      %v502 = vld [vmem:[#allocation8 + $0x1f0] sm:$0xff]
      %v503 = vld [vmem:[#allocation8 + $0x1f8] sm:$0xff]
      %v504 = vld [vmem:[#allocation8 + $0x200] sm:$0xff]
      %v505 = vld [vmem:[#allocation8 + $0x208] sm:$0xff]
      %v506 = vld [vmem:[#allocation8 + $0x210] sm:$0xff]
      %v507 = vld [vmem:[#allocation8 + $0x218] sm:$0xff]
      %v508 = vld [vmem:[#allocation8 + $0x220] sm:$0xff]
      %v509 = vld [vmem:[#allocation8 + $0x228] sm:$0xff]
      %v510 = vld [vmem:[#allocation8 + $0x230] sm:$0xff]
      %v511 = vld [vmem:[#allocation8 + $0x238] sm:$0xff]
      %v512 = vld [vmem:[#allocation8 + $0x240] sm:$0xff]
      %v513 = vld [vmem:[#allocation8 + $0x248] sm:$0xff]
      %v514 = vld [vmem:[#allocation8 + $0x250] sm:$0xff]
      %v515 = vld [vmem:[#allocation8 + $0x258] sm:$0xff]
      %v516 = vld [vmem:[#allocation8 + $0x260] sm:$0xff]
      %v517 = vld [vmem:[#allocation8 + $0x268] sm:$0xff]
      %v518 = vld [vmem:[#allocation8 + $0x270] sm:$0xff]
      %v519 = vld [vmem:[#allocation8 + $0x278] sm:$0xff]
      %v520 = vld [vmem:[#allocation8 + $0x280] sm:$0xff]
      %v521 = vld [vmem:[#allocation8 + $0x288] sm:$0xff]
      %v522 = vld [vmem:[#allocation8 + $0x290] sm:$0xff]
      %v523 = vld [vmem:[#allocation8 + $0x298] sm:$0xff]
      %v524 = vld [vmem:[#allocation8 + $0x2a0] sm:$0xff]
      %v525 = vld [vmem:[#allocation8 + $0x2a8] sm:$0xff]
      %v526 = vld [vmem:[#allocation8 + $0x2b0] sm:$0xff]
      %v527 = vld [vmem:[#allocation8 + $0x2b8] sm:$0xff]
      %v528 = vld [vmem:[#allocation8 + $0x2c0] sm:$0xff]
      %v529 = vld [vmem:[#allocation8 + $0x2c8] sm:$0xff]
      %v530 = vld [vmem:[#allocation8 + $0x2d0] sm:$0xff]
      %v531 = vld [vmem:[#allocation8 + $0x2d8] sm:$0xff]
      %v532 = vld [vmem:[#allocation8 + $0x2e0] sm:$0xff]
      %v533 = vld [vmem:[#allocation8 + $0x2e8] sm:$0xff]
      %v534 = vld [vmem:[#allocation8 + $0x2f0] sm:$0xff]
      %v535 = vld [vmem:[#allocation8 + $0x2f8] sm:$0xff]
      %v536 = vld [vmem:[#allocation8 + $0x300] sm:$0xff]
      %v537 = vld [vmem:[#allocation8 + $0x308] sm:$0xff]
      %v538 = vld [vmem:[#allocation8 + $0x310] sm:$0xff]
      %v539 = vld [vmem:[#allocation8 + $0x318] sm:$0xff]
      %v540 = vld [vmem:[#allocation8 + $0x320] sm:$0xff]
      %v541 = vld [vmem:[#allocation8 + $0x328] sm:$0xff]
      %v542 = vld [vmem:[#allocation8 + $0x330] sm:$0xff]
      %v543 = vld [vmem:[#allocation8 + $0x338] sm:$0xff]
      %v544 = vld [vmem:[#allocation8 + $0x340] sm:$0xff]
      %v545 = vld [vmem:[#allocation8 + $0x348] sm:$0xff]
      %v546 = vld [vmem:[#allocation8 + $0x350] sm:$0xff]
      %v547 = vld [vmem:[#allocation8 + $0x358] sm:$0xff]
      %v548 = vld [vmem:[#allocation8 + $0x360] sm:$0xff]
      %v549 = vld [vmem:[#allocation8 + $0x368] sm:$0xff]
      %v550 = vld [vmem:[#allocation8 + $0x370] sm:$0xff]
      %v551 = vld [vmem:[#allocation8 + $0x378] sm:$0xff]
      %v552 = vld [vmem:[#allocation8 + $0x380] sm:$0xff]
      %v553 = vld [vmem:[#allocation8 + $0x388] sm:$0xff]
      %v554 = vld [vmem:[#allocation8 + $0x390] sm:$0xff]
      %v555 = vld [vmem:[#allocation8 + $0x398] sm:$0xff]
      %v556 = vld [vmem:[#allocation8 + $0x3a0] sm:$0xff]
      %v557 = vld [vmem:[#allocation8 + $0x3a8] sm:$0xff]
      %v558 = vld [vmem:[#allocation8 + $0x3b0] sm:$0xff]
      %v559 = vld [vmem:[#allocation8 + $0x3b8] sm:$0xff]
      %v560 = vld [vmem:[#allocation8 + $0x3c0] sm:$0xff]
      %v561 = vld [vmem:[#allocation8 + $0x3c8] sm:$0xff]
      %v562 = vld [vmem:[#allocation8 + $0x3d0] sm:$0xff]
      %v563 = vld [vmem:[#allocation8 + $0x3d8] sm:$0xff]
      %v564 = vld [vmem:[#allocation8 + $0x3e0] sm:$0xff]
      %v565 = vld [vmem:[#allocation8 + $0x3e8] sm:$0xff]
      %v566 = vld [vmem:[#allocation8 + $0x3f0] sm:$0xff]
      %v567 = vld [vmem:[#allocation8 + $0x3f8] sm:$0xff]
      %v568 = vld [vmem:[#allocation8 + $0x400] sm:$0xff]
      %v569 = vld [vmem:[#allocation8 + $0x408] sm:$0xff]
      %v570 = vld [vmem:[#allocation8 + $0x410] sm:$0xff]
      %v571 = vld [vmem:[#allocation8 + $0x418] sm:$0xff]
      %v572 = vld [vmem:[#allocation8 + $0x420] sm:$0xff]
      %v573 = vld [vmem:[#allocation8 + $0x428] sm:$0xff]
      %v574 = vld [vmem:[#allocation8 + $0x430] sm:$0xff]
      %v575 = vld [vmem:[#allocation8 + $0x438] sm:$0xff]
      %v576 = vld [vmem:[#allocation8 + $0x440] sm:$0xff]
      %v577 = vld [vmem:[#allocation8 + $0x448] sm:$0xff]
      %v578 = vld [vmem:[#allocation8 + $0x450] sm:$0xff]
      %v579 = vld [vmem:[#allocation8 + $0x458] sm:$0xff]
      %v580 = vld [vmem:[#allocation8 + $0x460] sm:$0xff]
      %v581 = vld [vmem:[#allocation8 + $0x468] sm:$0xff]
      %v582 = vld [vmem:[#allocation8 + $0x470] sm:$0xff]
      %v583 = vld [vmem:[#allocation8 + $0x478] sm:$0xff]
      %v584 = vld [vmem:[#allocation8 + $0x480] sm:$0xff]
      %v585 = vld [vmem:[#allocation8 + $0x488] sm:$0xff]
      %v586 = vld [vmem:[#allocation8 + $0x490] sm:$0xff]
      %v587 = vld [vmem:[#allocation8 + $0x498] sm:$0xff]
      %v588 = vld [vmem:[#allocation8 + $0x4a0] sm:$0xff]
      %v589 = vld [vmem:[#allocation8 + $0x4a8] sm:$0xff]
      %v590 = vld [vmem:[#allocation8 + $0x4b0] sm:$0xff]
      %v591 = vld [vmem:[#allocation8 + $0x4b8] sm:$0xff]
      %v592 = vld [vmem:[#allocation8 + $0x4c0] sm:$0xff]
      %v593 = vld [vmem:[#allocation8 + $0x4c8] sm:$0xff]
      %v594 = vld [vmem:[#allocation8 + $0x4d0] sm:$0xff]
      %v595 = vld [vmem:[#allocation8 + $0x4d8] sm:$0xff]
      %v596 = vld [vmem:[#allocation8 + $0x4e0] sm:$0xff]
      %v597 = vld [vmem:[#allocation8 + $0x4e8] sm:$0xff]
      %v598 = vld [vmem:[#allocation8 + $0x4f0] sm:$0xff]
      %v599 = vld [vmem:[#allocation8 + $0x4f8] sm:$0xff]
      %v600 = vld [vmem:[#allocation8 + $0x500] sm:$0xff]
      %v601 = vld [vmem:[#allocation8 + $0x508] sm:$0xff]
      %v602 = vld [vmem:[#allocation8 + $0x510] sm:$0xff]
      %v603 = vld [vmem:[#allocation8 + $0x518] sm:$0xff]
      %v604 = vld [vmem:[#allocation8 + $0x520] sm:$0xff]
      %v605 = vld [vmem:[#allocation8 + $0x528] sm:$0xff]
      %v606 = vld [vmem:[#allocation8 + $0x530] sm:$0xff]
      %v607 = vld [vmem:[#allocation8 + $0x538] sm:$0xff]
      %v608 = vld [vmem:[#allocation8 + $0x540] sm:$0xff]
      %v609 = vld [vmem:[#allocation8 + $0x548] sm:$0xff]
      %v610 = vld [vmem:[#allocation8 + $0x550] sm:$0xff]
      %v611 = vld [vmem:[#allocation8 + $0x558] sm:$0xff]
      %v612 = vld [vmem:[#allocation8 + $0x560] sm:$0xff]
      %v613 = vld [vmem:[#allocation8 + $0x568] sm:$0xff]
      %v614 = vld [vmem:[#allocation8 + $0x570] sm:$0xff]
      %v615 = vld [vmem:[#allocation8 + $0x578] sm:$0xff]
      %v616 = vld [vmem:[#allocation8 + $0x580] sm:$0xff]
      %v617 = vld [vmem:[#allocation8 + $0x588] sm:$0xff]
      %v618 = vld [vmem:[#allocation8 + $0x590] sm:$0xff]
      %v619 = vld [vmem:[#allocation8 + $0x598] sm:$0xff]
      %v620 = vld [vmem:[#allocation8 + $0x5a0] sm:$0xff]
      %v621 = vld [vmem:[#allocation8 + $0x5a8] sm:$0xff]
      %v622 = vld [vmem:[#allocation8 + $0x5b0] sm:$0xff]
      %v623 = vld [vmem:[#allocation8 + $0x5b8] sm:$0xff]
      %v624 = vld [vmem:[#allocation8 + $0x5c0] sm:$0xff]
      %v625 = vld [vmem:[#allocation8 + $0x5c8] sm:$0xff]
      %v626 = vld [vmem:[#allocation8 + $0x5d0] sm:$0xff]
      %v627 = vld [vmem:[#allocation8 + $0x5d8] sm:$0xff]
      %v628 = vld [vmem:[#allocation8 + $0x5e0] sm:$0xff]
      %v629 = vld [vmem:[#allocation8 + $0x5e8] sm:$0xff]
      %v630 = vld [vmem:[#allocation8 + $0x5f0] sm:$0xff]
      %v631 = vld [vmem:[#allocation8 + $0x5f8] sm:$0xff]
      %v632 = vld [vmem:[#allocation8 + $0x600] sm:$0xff]
      %v633 = vld [vmem:[#allocation8 + $0x608] sm:$0xff]
      %v634 = vld [vmem:[#allocation8 + $0x610] sm:$0xff]
      %v635 = vld [vmem:[#allocation8 + $0x618] sm:$0xff]
      %v636 = vld [vmem:[#allocation8 + $0x620] sm:$0xff]
      %v637 = vld [vmem:[#allocation8 + $0x628] sm:$0xff]
      %v638 = vld [vmem:[#allocation8 + $0x630] sm:$0xff]
      %v639 = vld [vmem:[#allocation8 + $0x638] sm:$0xff]
      %v640 = vld [vmem:[#allocation8 + $0x640] sm:$0xff]
      %v641 = vld [vmem:[#allocation8 + $0x648] sm:$0xff]
      %v642 = vld [vmem:[#allocation8 + $0x650] sm:$0xff]
      %v643 = vld [vmem:[#allocation8 + $0x658] sm:$0xff]
      %v644 = vld [vmem:[#allocation8 + $0x660] sm:$0xff]
      %v645 = vld [vmem:[#allocation8 + $0x668] sm:$0xff]
      %v646 = vld [vmem:[#allocation8 + $0x670] sm:$0xff]
      %v647 = vld [vmem:[#allocation8 + $0x678] sm:$0xff]
      %v648 = vld [vmem:[#allocation8 + $0x680] sm:$0xff]
      %v649 = vld [vmem:[#allocation8 + $0x688] sm:$0xff]
      %v650 = vld [vmem:[#allocation8 + $0x690] sm:$0xff]
      %v651 = vld [vmem:[#allocation8 + $0x698] sm:$0xff]
      %v652 = vld [vmem:[#allocation8 + $0x6a0] sm:$0xff]
      %v653 = vld [vmem:[#allocation8 + $0x6a8] sm:$0xff]
      %v654 = vld [vmem:[#allocation8 + $0x6b0] sm:$0xff]
      %v655 = vld [vmem:[#allocation8 + $0x6b8] sm:$0xff]
      %v656 = vld [vmem:[#allocation8 + $0x6c0] sm:$0xff]
      %v657 = vld [vmem:[#allocation8 + $0x6c8] sm:$0xff]
      %v658 = vld [vmem:[#allocation8 + $0x6d0] sm:$0xff]
      %v659 = vld [vmem:[#allocation8 + $0x6d8] sm:$0xff]
      %v660 = vld [vmem:[#allocation8 + $0x6e0] sm:$0xff]
      %v661 = vld [vmem:[#allocation8 + $0x6e8] sm:$0xff]
      %v662 = vld [vmem:[#allocation8 + $0x6f0] sm:$0xff]
      %v663 = vld [vmem:[#allocation8 + $0x6f8] sm:$0xff]
      %v664 = vld [vmem:[#allocation8 + $0x700] sm:$0xff]
      %v665 = vld [vmem:[#allocation8 + $0x708] sm:$0xff]
      %v666 = vld [vmem:[#allocation8 + $0x710] sm:$0xff]
      %v667 = vld [vmem:[#allocation8 + $0x718] sm:$0xff]
      %v668 = vld [vmem:[#allocation8 + $0x720] sm:$0xff]
      %v669 = vld [vmem:[#allocation8 + $0x728] sm:$0xff]
      %v670 = vld [vmem:[#allocation8 + $0x730] sm:$0xff]
      %v671 = vld [vmem:[#allocation8 + $0x738] sm:$0xff]
      %v672 = vld [vmem:[#allocation8 + $0x740] sm:$0xff]
      %v673 = vld [vmem:[#allocation8 + $0x748] sm:$0xff]
      %v674 = vld [vmem:[#allocation8 + $0x750] sm:$0xff]
      %v675 = vld [vmem:[#allocation8 + $0x758] sm:$0xff]
      %v676 = vld [vmem:[#allocation8 + $0x760] sm:$0xff]
      %v677 = vld [vmem:[#allocation8 + $0x768] sm:$0xff]
      %v678 = vld [vmem:[#allocation8 + $0x770] sm:$0xff]
      %v679 = vld [vmem:[#allocation8 + $0x778] sm:$0xff]
      %v680 = vld [vmem:[#allocation8 + $0x780] sm:$0xff]
      %v681 = vld [vmem:[#allocation8 + $0x788] sm:$0xff]
      %v682 = vld [vmem:[#allocation8 + $0x790] sm:$0xff]
      %v683 = vld [vmem:[#allocation8 + $0x798] sm:$0xff]
      %v684 = vld [vmem:[#allocation8 + $0x7a0] sm:$0xff]
      %v685 = vld [vmem:[#allocation8 + $0x7a8] sm:$0xff]
      %v686 = vld [vmem:[#allocation8 + $0x7b0] sm:$0xff]
      %v687 = vld [vmem:[#allocation8 + $0x7b8] sm:$0xff]
      %v688 = vld [vmem:[#allocation8 + $0x7c0] sm:$0xff]
      %v689 = vld [vmem:[#allocation8 + $0x7c8] sm:$0xff]
      %v690 = vld [vmem:[#allocation8 + $0x7d0] sm:$0xff]
      %v691 = vld [vmem:[#allocation8 + $0x7d8] sm:$0xff]
      %v692 = vld [vmem:[#allocation8 + $0x7e0] sm:$0xff]
      %v693 = vld [vmem:[#allocation8 + $0x7e8] sm:$0xff]
      %v694 = vld [vmem:[#allocation8 + $0x7f0] sm:$0xff]
      %v695 = vld [vmem:[#allocation8 + $0x7f8] sm:$0xff]
      %v696 = vld [vmem:[%s4] sm:$0xff]
      %v698 = vlaneseq
      %v699 = vshrl.u32 %v698, 7
      %v700 = vsub.s32 0, %v699
      %v701 = vrot.slane %v696, %v700
      %v702 = vlaneseq
      %v703 = vshrl.u32 %v702, 7
      %v704 = vsub.s32 1, %v703
      %v705 = vrot.slane %v696, %v704
      %v706 = vlaneseq
      %v707 = vshrl.u32 %v706, 7
      %v708 = vsub.s32 2, %v707
      %v709 = vrot.slane %v696, %v708
      %v710 = vlaneseq
      %v711 = vshrl.u32 %v710, 7
      %v712 = vsub.s32 3, %v711
      %v713 = vrot.slane %v696, %v712
      %v714 = vlaneseq
      %v715 = vshrl.u32 %v714, 7
      %v716 = vsub.s32 4, %v715
      %v717 = vrot.slane %v696, %v716
      %v718 = vlaneseq
      %v719 = vshrl.u32 %v718, 7
      %v720 = vsub.s32 5, %v719
      %v721 = vrot.slane %v696, %v720
      %v722 = vlaneseq
      %v723 = vshrl.u32 %v722, 7
      %v724 = vsub.s32 6, %v723
      %v725 = vrot.slane %v696, %v724
      %v726 = vlaneseq
      %v727 = vshrl.u32 %v726, 7
      %v728 = vsub.s32 7, %v727
      %v729 = vrot.slane %v696, %v728
      %v994 = vunpack.c.l.b16 %v440
      %v995 = vunpack.c.h.b16 %v440
      %v996 = vunpack.c.l.b16 %v441
      %v997 = vunpack.c.h.b16 %v441
      %v998 = vunpack.c.l.b16 %v442
      %v999 = vunpack.c.h.b16 %v442
      %v1000 = vunpack.c.l.b16 %v443
      %v1001 = vunpack.c.h.b16 %v443
      %v1002 = vunpack.c.l.b16 %v444
      %v1003 = vunpack.c.h.b16 %v444
      %v1004 = vunpack.c.l.b16 %v445
      %v1005 = vunpack.c.h.b16 %v445
      %v1006 = vunpack.c.l.b16 %v446
      %v1007 = vunpack.c.h.b16 %v446
      %v1008 = vunpack.c.l.b16 %v447
      %v1009 = vunpack.c.h.b16 %v447
      %v1010 = vunpack.c.l.b16 %v448
      %v1011 = vunpack.c.h.b16 %v448
      %v1012 = vunpack.c.l.b16 %v449
      %v1013 = vunpack.c.h.b16 %v449
      %v1014 = vunpack.c.l.b16 %v450
      %v1015 = vunpack.c.h.b16 %v450
      %v1016 = vunpack.c.l.b16 %v451
      %v1017 = vunpack.c.h.b16 %v451
      %v1018 = vunpack.c.l.b16 %v452
      %v1019 = vunpack.c.h.b16 %v452
      %v1020 = vunpack.c.l.b16 %v453
      %v1021 = vunpack.c.h.b16 %v453
      %v1022 = vunpack.c.l.b16 %v454
      %v1023 = vunpack.c.h.b16 %v454
      %v1024 = vunpack.c.l.b16 %v455
      %v1025 = vunpack.c.h.b16 %v455
      %v1026 = vunpack.c.l.b16 %v456
      %v1027 = vunpack.c.h.b16 %v456
      %v1028 = vunpack.c.l.b16 %v457
      %v1029 = vunpack.c.h.b16 %v457
      %v1030 = vunpack.c.l.b16 %v458
      %v1031 = vunpack.c.h.b16 %v458
      %v1032 = vunpack.c.l.b16 %v459
      %v1033 = vunpack.c.h.b16 %v459
      %v1034 = vunpack.c.l.b16 %v460
      %v1035 = vunpack.c.h.b16 %v460
      %v1036 = vunpack.c.l.b16 %v461
      %v1037 = vunpack.c.h.b16 %v461
      %v1038 = vunpack.c.l.b16 %v462
      %v1039 = vunpack.c.h.b16 %v462
      %v1040 = vunpack.c.l.b16 %v463
      %v1041 = vunpack.c.h.b16 %v463
      %v1042 = vunpack.c.l.b16 %v464
      %v1043 = vunpack.c.h.b16 %v464
      %v1044 = vunpack.c.l.b16 %v465
      %v1045 = vunpack.c.h.b16 %v465
      %v1046 = vunpack.c.l.b16 %v466
      %v1047 = vunpack.c.h.b16 %v466
      %v1048 = vunpack.c.l.b16 %v467
      %v1049 = vunpack.c.h.b16 %v467
      %v1050 = vunpack.c.l.b16 %v468
      %v1051 = vunpack.c.h.b16 %v468
      %v1052 = vunpack.c.l.b16 %v469
      %v1053 = vunpack.c.h.b16 %v469
      %v1054 = vunpack.c.l.b16 %v470
      %v1055 = vunpack.c.h.b16 %v470
      %v1056 = vunpack.c.l.b16 %v471
      %v1057 = vunpack.c.h.b16 %v471
      %v1058 = vunpack.c.l.b16 %v472
      %v1059 = vunpack.c.h.b16 %v472
      %v1060 = vunpack.c.l.b16 %v473
      %v1061 = vunpack.c.h.b16 %v473
      %v1062 = vunpack.c.l.b16 %v474
      %v1063 = vunpack.c.h.b16 %v474
      %v1064 = vunpack.c.l.b16 %v475
      %v1065 = vunpack.c.h.b16 %v475
      %v1066 = vunpack.c.l.b16 %v476
      %v1067 = vunpack.c.h.b16 %v476
      %v1068 = vunpack.c.l.b16 %v477
      %v1069 = vunpack.c.h.b16 %v477
      %v1070 = vunpack.c.l.b16 %v478
      %v1071 = vunpack.c.h.b16 %v478
      %v1072 = vunpack.c.l.b16 %v479
      %v1073 = vunpack.c.h.b16 %v479
      %v1074 = vunpack.c.l.b16 %v480
      %v1075 = vunpack.c.h.b16 %v480
      %v1076 = vunpack.c.l.b16 %v481
      %v1077 = vunpack.c.h.b16 %v481
      %v1078 = vunpack.c.l.b16 %v482
      %v1079 = vunpack.c.h.b16 %v482
      %v1080 = vunpack.c.l.b16 %v483
      %v1081 = vunpack.c.h.b16 %v483
      %v1082 = vunpack.c.l.b16 %v484
      %v1083 = vunpack.c.h.b16 %v484
      %v1084 = vunpack.c.l.b16 %v485
      %v1085 = vunpack.c.h.b16 %v485
      %v1086 = vunpack.c.l.b16 %v486
      %v1087 = vunpack.c.h.b16 %v486
      %v1088 = vunpack.c.l.b16 %v487
      %v1089 = vunpack.c.h.b16 %v487
      %v1090 = vunpack.c.l.b16 %v488
      %v1091 = vunpack.c.h.b16 %v488
      %v1092 = vunpack.c.l.b16 %v489
      %v1093 = vunpack.c.h.b16 %v489
      %v1094 = vunpack.c.l.b16 %v490
      %v1095 = vunpack.c.h.b16 %v490
      %v1096 = vunpack.c.l.b16 %v491
      %v1097 = vunpack.c.h.b16 %v491
      %v1098 = vunpack.c.l.b16 %v492
      %v1099 = vunpack.c.h.b16 %v492
      %v1100 = vunpack.c.l.b16 %v493
      %v1101 = vunpack.c.h.b16 %v493
      %v1102 = vunpack.c.l.b16 %v494
      %v1103 = vunpack.c.h.b16 %v494
      %v1104 = vunpack.c.l.b16 %v495
      %v1105 = vunpack.c.h.b16 %v495
      %v1106 = vunpack.c.l.b16 %v496
      %v1107 = vunpack.c.h.b16 %v496
      %v1108 = vunpack.c.l.b16 %v497
      %v1109 = vunpack.c.h.b16 %v497
      %v1110 = vunpack.c.l.b16 %v498
      %v1111 = vunpack.c.h.b16 %v498
      %v1112 = vunpack.c.l.b16 %v499
      %v1113 = vunpack.c.h.b16 %v499
      %v1114 = vunpack.c.l.b16 %v500
      %v1115 = vunpack.c.h.b16 %v500
      %v1116 = vunpack.c.l.b16 %v501
      %v1117 = vunpack.c.h.b16 %v501
      %v1118 = vunpack.c.l.b16 %v502
      %v1119 = vunpack.c.h.b16 %v502
      %v1120 = vunpack.c.l.b16 %v503
      %v1121 = vunpack.c.h.b16 %v503
      %v1122 = vunpack.c.l.b16 %v504
      %v1123 = vunpack.c.h.b16 %v504
      %v1124 = vunpack.c.l.b16 %v505
      %v1125 = vunpack.c.h.b16 %v505
      %v1126 = vunpack.c.l.b16 %v506
      %v1127 = vunpack.c.h.b16 %v506
      %v1128 = vunpack.c.l.b16 %v507
      %v1129 = vunpack.c.h.b16 %v507
      %v1130 = vunpack.c.l.b16 %v508
      %v1131 = vunpack.c.h.b16 %v508
      %v1132 = vunpack.c.l.b16 %v509
      %v1133 = vunpack.c.h.b16 %v509
      %v1134 = vunpack.c.l.b16 %v510
      %v1135 = vunpack.c.h.b16 %v510
      %v1136 = vunpack.c.l.b16 %v511
      %v1137 = vunpack.c.h.b16 %v511
      %v1138 = vunpack.c.l.b16 %v512
      %v1139 = vunpack.c.h.b16 %v512
      %v1140 = vunpack.c.l.b16 %v513
      %v1141 = vunpack.c.h.b16 %v513
      %v1142 = vunpack.c.l.b16 %v514
      %v1143 = vunpack.c.h.b16 %v514
      %v1144 = vunpack.c.l.b16 %v515
      %v1145 = vunpack.c.h.b16 %v515
      %v1146 = vunpack.c.l.b16 %v516
      %v1147 = vunpack.c.h.b16 %v516
      %v1148 = vunpack.c.l.b16 %v517
      %v1149 = vunpack.c.h.b16 %v517
      %v1150 = vunpack.c.l.b16 %v518
      %v1151 = vunpack.c.h.b16 %v518
      %v1152 = vunpack.c.l.b16 %v519
      %v1153 = vunpack.c.h.b16 %v519
      %v1154 = vunpack.c.l.b16 %v520
      %v1155 = vunpack.c.h.b16 %v520
      %v1156 = vunpack.c.l.b16 %v521
      %v1157 = vunpack.c.h.b16 %v521
      %v1158 = vunpack.c.l.b16 %v522
      %v1159 = vunpack.c.h.b16 %v522
      %v1160 = vunpack.c.l.b16 %v523
      %v1161 = vunpack.c.h.b16 %v523
      %v1162 = vunpack.c.l.b16 %v524
      %v1163 = vunpack.c.h.b16 %v524
      %v1164 = vunpack.c.l.b16 %v525
      %v1165 = vunpack.c.h.b16 %v525
      %v1166 = vunpack.c.l.b16 %v526
      %v1167 = vunpack.c.h.b16 %v526
      %v1168 = vunpack.c.l.b16 %v527
      %v1169 = vunpack.c.h.b16 %v527
      %v1170 = vunpack.c.l.b16 %v528
      %v1171 = vunpack.c.h.b16 %v528
      %v1172 = vunpack.c.l.b16 %v529
      %v1173 = vunpack.c.h.b16 %v529
      %v1174 = vunpack.c.l.b16 %v530
      %v1175 = vunpack.c.h.b16 %v530
      %v1176 = vunpack.c.l.b16 %v531
      %v1177 = vunpack.c.h.b16 %v531
      %v1178 = vunpack.c.l.b16 %v532
      %v1179 = vunpack.c.h.b16 %v532
      %v1180 = vunpack.c.l.b16 %v533
      %v1181 = vunpack.c.h.b16 %v533
      %v1182 = vunpack.c.l.b16 %v534
      %v1183 = vunpack.c.h.b16 %v534
      %v1184 = vunpack.c.l.b16 %v535
      %v1185 = vunpack.c.h.b16 %v535
      %v1186 = vunpack.c.l.b16 %v536
      %v1187 = vunpack.c.h.b16 %v536
      %v1188 = vunpack.c.l.b16 %v537
      %v1189 = vunpack.c.h.b16 %v537
      %v1190 = vunpack.c.l.b16 %v538
      %v1191 = vunpack.c.h.b16 %v538
      %v1192 = vunpack.c.l.b16 %v539
      %v1193 = vunpack.c.h.b16 %v539
      %v1194 = vunpack.c.l.b16 %v540
      %v1195 = vunpack.c.h.b16 %v540
      %v1196 = vunpack.c.l.b16 %v541
      %v1197 = vunpack.c.h.b16 %v541
      %v1198 = vunpack.c.l.b16 %v542
      %v1199 = vunpack.c.h.b16 %v542
      %v1200 = vunpack.c.l.b16 %v543
      %v1201 = vunpack.c.h.b16 %v543
      %v1202 = vunpack.c.l.b16 %v544
      %v1203 = vunpack.c.h.b16 %v544
      %v1204 = vunpack.c.l.b16 %v545
      %v1205 = vunpack.c.h.b16 %v545
      %v1206 = vunpack.c.l.b16 %v546
      %v1207 = vunpack.c.h.b16 %v546
      %v1208 = vunpack.c.l.b16 %v547
      %v1209 = vunpack.c.h.b16 %v547
      %v1210 = vunpack.c.l.b16 %v548
      %v1211 = vunpack.c.h.b16 %v548
      %v1212 = vunpack.c.l.b16 %v549
      %v1213 = vunpack.c.h.b16 %v549
      %v1214 = vunpack.c.l.b16 %v550
      %v1215 = vunpack.c.h.b16 %v550
      %v1216 = vunpack.c.l.b16 %v551
      %v1217 = vunpack.c.h.b16 %v551
      %v1218 = vunpack.c.l.b16 %v552
      %v1219 = vunpack.c.h.b16 %v552
      %v1220 = vunpack.c.l.b16 %v553
      %v1221 = vunpack.c.h.b16 %v553
      %v1222 = vunpack.c.l.b16 %v554
      %v1223 = vunpack.c.h.b16 %v554
      %v1224 = vunpack.c.l.b16 %v555
      %v1225 = vunpack.c.h.b16 %v555
      %v1226 = vunpack.c.l.b16 %v556
      %v1227 = vunpack.c.h.b16 %v556
      %v1228 = vunpack.c.l.b16 %v557
      %v1229 = vunpack.c.h.b16 %v557
      %v1230 = vunpack.c.l.b16 %v558
      %v1231 = vunpack.c.h.b16 %v558
      %v1232 = vunpack.c.l.b16 %v559
      %v1233 = vunpack.c.h.b16 %v559
      %v1234 = vunpack.c.l.b16 %v560
      %v1235 = vunpack.c.h.b16 %v560
      %v1236 = vunpack.c.l.b16 %v561
      %v1237 = vunpack.c.h.b16 %v561
      %v1238 = vunpack.c.l.b16 %v562
      %v1239 = vunpack.c.h.b16 %v562
      %v1240 = vunpack.c.l.b16 %v563
      %v1241 = vunpack.c.h.b16 %v563
      %v1242 = vunpack.c.l.b16 %v564
      %v1243 = vunpack.c.h.b16 %v564
      %v1244 = vunpack.c.l.b16 %v565
      %v1245 = vunpack.c.h.b16 %v565
      %v1246 = vunpack.c.l.b16 %v566
      %v1247 = vunpack.c.h.b16 %v566
      %v1248 = vunpack.c.l.b16 %v567
      %v1249 = vunpack.c.h.b16 %v567
      %v1250 = vunpack.c.l.b16 %v568
      %v1251 = vunpack.c.h.b16 %v568
      %v1252 = vunpack.c.l.b16 %v569
      %v1253 = vunpack.c.h.b16 %v569
      %v1254 = vunpack.c.l.b16 %v570
      %v1255 = vunpack.c.h.b16 %v570
      %v1256 = vunpack.c.l.b16 %v571
      %v1257 = vunpack.c.h.b16 %v571
      %v1258 = vunpack.c.l.b16 %v572
      %v1259 = vunpack.c.h.b16 %v572
      %v1260 = vunpack.c.l.b16 %v573
      %v1261 = vunpack.c.h.b16 %v573
      %v1262 = vunpack.c.l.b16 %v574
      %v1263 = vunpack.c.h.b16 %v574
      %v1264 = vunpack.c.l.b16 %v575
      %v1265 = vunpack.c.h.b16 %v575
      %v1266 = vunpack.c.l.b16 %v576
      %v1267 = vunpack.c.h.b16 %v576
      %v1268 = vunpack.c.l.b16 %v577
      %v1269 = vunpack.c.h.b16 %v577
      %v1270 = vunpack.c.l.b16 %v578
      %v1271 = vunpack.c.h.b16 %v578
      %v1272 = vunpack.c.l.b16 %v579
      %v1273 = vunpack.c.h.b16 %v579
      %v1274 = vunpack.c.l.b16 %v580
      %v1275 = vunpack.c.h.b16 %v580
      %v1276 = vunpack.c.l.b16 %v581
      %v1277 = vunpack.c.h.b16 %v581
      %v1278 = vunpack.c.l.b16 %v582
      %v1279 = vunpack.c.h.b16 %v582
      %v1280 = vunpack.c.l.b16 %v583
      %v1281 = vunpack.c.h.b16 %v583
      %v1282 = vunpack.c.l.b16 %v584
      %v1283 = vunpack.c.h.b16 %v584
      %v1284 = vunpack.c.l.b16 %v585
      %v1285 = vunpack.c.h.b16 %v585
      %v1286 = vunpack.c.l.b16 %v586
      %v1287 = vunpack.c.h.b16 %v586
      %v1288 = vunpack.c.l.b16 %v587
      %v1289 = vunpack.c.h.b16 %v587
      %v1290 = vunpack.c.l.b16 %v588
      %v1291 = vunpack.c.h.b16 %v588
      %v1292 = vunpack.c.l.b16 %v589
      %v1293 = vunpack.c.h.b16 %v589
      %v1294 = vunpack.c.l.b16 %v590
      %v1295 = vunpack.c.h.b16 %v590
      %v1296 = vunpack.c.l.b16 %v591
      %v1297 = vunpack.c.h.b16 %v591
      %v1298 = vunpack.c.l.b16 %v592
      %v1299 = vunpack.c.h.b16 %v592
      %v1300 = vunpack.c.l.b16 %v593
      %v1301 = vunpack.c.h.b16 %v593
      %v1302 = vunpack.c.l.b16 %v594
      %v1303 = vunpack.c.h.b16 %v594
      %v1304 = vunpack.c.l.b16 %v595
      %v1305 = vunpack.c.h.b16 %v595
      %v1306 = vunpack.c.l.b16 %v596
      %v1307 = vunpack.c.h.b16 %v596
      %v1308 = vunpack.c.l.b16 %v597
      %v1309 = vunpack.c.h.b16 %v597
      %v1310 = vunpack.c.l.b16 %v598
      %v1311 = vunpack.c.h.b16 %v598
      %v1312 = vunpack.c.l.b16 %v599
      %v1313 = vunpack.c.h.b16 %v599
      %v1314 = vunpack.c.l.b16 %v600
      %v1315 = vunpack.c.h.b16 %v600
      %v1316 = vunpack.c.l.b16 %v601
      %v1317 = vunpack.c.h.b16 %v601
      %v1318 = vunpack.c.l.b16 %v602
      %v1319 = vunpack.c.h.b16 %v602
      %v1320 = vunpack.c.l.b16 %v603
      %v1321 = vunpack.c.h.b16 %v603
      %v1322 = vunpack.c.l.b16 %v604
      %v1323 = vunpack.c.h.b16 %v604
      %v1324 = vunpack.c.l.b16 %v605
      %v1325 = vunpack.c.h.b16 %v605
      %v1326 = vunpack.c.l.b16 %v606
      %v1327 = vunpack.c.h.b16 %v606
      %v1328 = vunpack.c.l.b16 %v607
      %v1329 = vunpack.c.h.b16 %v607
      %v1330 = vunpack.c.l.b16 %v608
      %v1331 = vunpack.c.h.b16 %v608
      %v1332 = vunpack.c.l.b16 %v609
      %v1333 = vunpack.c.h.b16 %v609
      %v1334 = vunpack.c.l.b16 %v610
      %v1335 = vunpack.c.h.b16 %v610
      %v1336 = vunpack.c.l.b16 %v611
      %v1337 = vunpack.c.h.b16 %v611
      %v1338 = vunpack.c.l.b16 %v612
      %v1339 = vunpack.c.h.b16 %v612
      %v1340 = vunpack.c.l.b16 %v613
      %v1341 = vunpack.c.h.b16 %v613
      %v1342 = vunpack.c.l.b16 %v614
      %v1343 = vunpack.c.h.b16 %v614
      %v1344 = vunpack.c.l.b16 %v615
      %v1345 = vunpack.c.h.b16 %v615
      %v1346 = vunpack.c.l.b16 %v616
      %v1347 = vunpack.c.h.b16 %v616
      %v1348 = vunpack.c.l.b16 %v617
      %v1349 = vunpack.c.h.b16 %v617
      %v1350 = vunpack.c.l.b16 %v618
      %v1351 = vunpack.c.h.b16 %v618
      %v1352 = vunpack.c.l.b16 %v619
      %v1353 = vunpack.c.h.b16 %v619
      %v1354 = vunpack.c.l.b16 %v620
      %v1355 = vunpack.c.h.b16 %v620
      %v1356 = vunpack.c.l.b16 %v621
      %v1357 = vunpack.c.h.b16 %v621
      %v1358 = vunpack.c.l.b16 %v622
      %v1359 = vunpack.c.h.b16 %v622
      %v1360 = vunpack.c.l.b16 %v623
      %v1361 = vunpack.c.h.b16 %v623
      %v1362 = vunpack.c.l.b16 %v624
      %v1363 = vunpack.c.h.b16 %v624
      %v1364 = vunpack.c.l.b16 %v625
      %v1365 = vunpack.c.h.b16 %v625
      %v1366 = vunpack.c.l.b16 %v626
      %v1367 = vunpack.c.h.b16 %v626
      %v1368 = vunpack.c.l.b16 %v627
      %v1369 = vunpack.c.h.b16 %v627
      %v1370 = vunpack.c.l.b16 %v628
      %v1371 = vunpack.c.h.b16 %v628
      %v1372 = vunpack.c.l.b16 %v629
      %v1373 = vunpack.c.h.b16 %v629
      %v1374 = vunpack.c.l.b16 %v630
      %v1375 = vunpack.c.h.b16 %v630
      %v1376 = vunpack.c.l.b16 %v631
      %v1377 = vunpack.c.h.b16 %v631
      %v1378 = vunpack.c.l.b16 %v632
      %v1379 = vunpack.c.h.b16 %v632
      %v1380 = vunpack.c.l.b16 %v633
      %v1381 = vunpack.c.h.b16 %v633
      %v1382 = vunpack.c.l.b16 %v634
      %v1383 = vunpack.c.h.b16 %v634
      %v1384 = vunpack.c.l.b16 %v635
      %v1385 = vunpack.c.h.b16 %v635
      %v1386 = vunpack.c.l.b16 %v636
      %v1387 = vunpack.c.h.b16 %v636
      %v1388 = vunpack.c.l.b16 %v637
      %v1389 = vunpack.c.h.b16 %v637
      %v1390 = vunpack.c.l.b16 %v638
      %v1391 = vunpack.c.h.b16 %v638
      %v1392 = vunpack.c.l.b16 %v639
      %v1393 = vunpack.c.h.b16 %v639
      %v1394 = vunpack.c.l.b16 %v640
      %v1395 = vunpack.c.h.b16 %v640
      %v1396 = vunpack.c.l.b16 %v641
      %v1397 = vunpack.c.h.b16 %v641
      %v1398 = vunpack.c.l.b16 %v642
      %v1399 = vunpack.c.h.b16 %v642
      %v1400 = vunpack.c.l.b16 %v643
      %v1401 = vunpack.c.h.b16 %v643
      %v1402 = vunpack.c.l.b16 %v644
      %v1403 = vunpack.c.h.b16 %v644
      %v1404 = vunpack.c.l.b16 %v645
      %v1405 = vunpack.c.h.b16 %v645
      %v1406 = vunpack.c.l.b16 %v646
      %v1407 = vunpack.c.h.b16 %v646
      %v1408 = vunpack.c.l.b16 %v647
      %v1409 = vunpack.c.h.b16 %v647
      %v1410 = vunpack.c.l.b16 %v648
      %v1411 = vunpack.c.h.b16 %v648
      %v1412 = vunpack.c.l.b16 %v649
      %v1413 = vunpack.c.h.b16 %v649
      %v1414 = vunpack.c.l.b16 %v650
      %v1415 = vunpack.c.h.b16 %v650
      %v1416 = vunpack.c.l.b16 %v651
      %v1417 = vunpack.c.h.b16 %v651
      %v1418 = vunpack.c.l.b16 %v652
      %v1419 = vunpack.c.h.b16 %v652
      %v1420 = vunpack.c.l.b16 %v653
      %v1421 = vunpack.c.h.b16 %v653
      %v1422 = vunpack.c.l.b16 %v654
      %v1423 = vunpack.c.h.b16 %v654
      %v1424 = vunpack.c.l.b16 %v655
      %v1425 = vunpack.c.h.b16 %v655
      %v1426 = vunpack.c.l.b16 %v656
      %v1427 = vunpack.c.h.b16 %v656
      %v1428 = vunpack.c.l.b16 %v657
      %v1429 = vunpack.c.h.b16 %v657
      %v1430 = vunpack.c.l.b16 %v658
      %v1431 = vunpack.c.h.b16 %v658
      %v1432 = vunpack.c.l.b16 %v659
      %v1433 = vunpack.c.h.b16 %v659
      %v1434 = vunpack.c.l.b16 %v660
      %v1435 = vunpack.c.h.b16 %v660
      %v1436 = vunpack.c.l.b16 %v661
      %v1437 = vunpack.c.h.b16 %v661
      %v1438 = vunpack.c.l.b16 %v662
      %v1439 = vunpack.c.h.b16 %v662
      %v1440 = vunpack.c.l.b16 %v663
      %v1441 = vunpack.c.h.b16 %v663
      %v1442 = vunpack.c.l.b16 %v664
      %v1443 = vunpack.c.h.b16 %v664
      %v1444 = vunpack.c.l.b16 %v665
      %v1445 = vunpack.c.h.b16 %v665
      %v1446 = vunpack.c.l.b16 %v666
      %v1447 = vunpack.c.h.b16 %v666
      %v1448 = vunpack.c.l.b16 %v667
      %v1449 = vunpack.c.h.b16 %v667
      %v1450 = vunpack.c.l.b16 %v668
      %v1451 = vunpack.c.h.b16 %v668
      %v1452 = vunpack.c.l.b16 %v669
      %v1453 = vunpack.c.h.b16 %v669
      %v1454 = vunpack.c.l.b16 %v670
      %v1455 = vunpack.c.h.b16 %v670
      %v1456 = vunpack.c.l.b16 %v671
      %v1457 = vunpack.c.h.b16 %v671
      %v1458 = vunpack.c.l.b16 %v672
      %v1459 = vunpack.c.h.b16 %v672
      %v1460 = vunpack.c.l.b16 %v673
      %v1461 = vunpack.c.h.b16 %v673
      %v1462 = vunpack.c.l.b16 %v674
      %v1463 = vunpack.c.h.b16 %v674
      %v1464 = vunpack.c.l.b16 %v675
      %v1465 = vunpack.c.h.b16 %v675
      %v1466 = vunpack.c.l.b16 %v676
      %v1467 = vunpack.c.h.b16 %v676
      %v1468 = vunpack.c.l.b16 %v677
      %v1469 = vunpack.c.h.b16 %v677
      %v1470 = vunpack.c.l.b16 %v678
      %v1471 = vunpack.c.h.b16 %v678
      %v1472 = vunpack.c.l.b16 %v679
      %v1473 = vunpack.c.h.b16 %v679
      %v1474 = vunpack.c.l.b16 %v680
      %v1475 = vunpack.c.h.b16 %v680
      %v1476 = vunpack.c.l.b16 %v681
      %v1477 = vunpack.c.h.b16 %v681
      %v1478 = vunpack.c.l.b16 %v682
      %v1479 = vunpack.c.h.b16 %v682
      %v1480 = vunpack.c.l.b16 %v683
      %v1481 = vunpack.c.h.b16 %v683
      %v1482 = vunpack.c.l.b16 %v684
      %v1483 = vunpack.c.h.b16 %v684
      %v1484 = vunpack.c.l.b16 %v685
      %v1485 = vunpack.c.h.b16 %v685
      %v1486 = vunpack.c.l.b16 %v686
      %v1487 = vunpack.c.h.b16 %v686
      %v1488 = vunpack.c.l.b16 %v687
      %v1489 = vunpack.c.h.b16 %v687
      %v1490 = vunpack.c.l.b16 %v688
      %v1491 = vunpack.c.h.b16 %v688
      %v1492 = vunpack.c.l.b16 %v689
      %v1493 = vunpack.c.h.b16 %v689
      %v1494 = vunpack.c.l.b16 %v690
      %v1495 = vunpack.c.h.b16 %v690
      %v1496 = vunpack.c.l.b16 %v691
      %v1497 = vunpack.c.h.b16 %v691
      %v1498 = vunpack.c.l.b16 %v692
      %v1499 = vunpack.c.h.b16 %v692
      %v1500 = vunpack.c.l.b16 %v693
      %v1501 = vunpack.c.h.b16 %v693
      %v1502 = vunpack.c.l.b16 %v694
      %v1503 = vunpack.c.h.b16 %v694
      %v1504 = vunpack.c.l.b16 %v695
      %v1505 = vunpack.c.h.b16 %v695
      %v1506 = vpack.c.b16 %v1002, %v994
      %v1507 = vpack.c.b16 %v1003, %v995
      %v1508 = vpack.c.b16 %v1004, %v996
      %v1509 = vpack.c.b16 %v1005, %v997
      %v1510 = vpack.c.b16 %v1006, %v998
      %v1511 = vpack.c.b16 %v1007, %v999
      %v1512 = vpack.c.b16 %v1008, %v1000
      %v1513 = vpack.c.b16 %v1009, %v1001
      %v1514 = vpack.c.b16 %v1018, %v1010
      %v1515 = vpack.c.b16 %v1019, %v1011
      %v1516 = vpack.c.b16 %v1020, %v1012
      %v1517 = vpack.c.b16 %v1021, %v1013
      %v1518 = vpack.c.b16 %v1022, %v1014
      %v1519 = vpack.c.b16 %v1023, %v1015
      %v1520 = vpack.c.b16 %v1024, %v1016
      %v1521 = vpack.c.b16 %v1025, %v1017
      %v1522 = vpack.c.b16 %v1034, %v1026
      %v1523 = vpack.c.b16 %v1035, %v1027
      %v1524 = vpack.c.b16 %v1036, %v1028
      %v1525 = vpack.c.b16 %v1037, %v1029
      %v1526 = vpack.c.b16 %v1038, %v1030
      %v1527 = vpack.c.b16 %v1039, %v1031
      %v1528 = vpack.c.b16 %v1040, %v1032
      %v1529 = vpack.c.b16 %v1041, %v1033
      %v1530 = vpack.c.b16 %v1050, %v1042
      %v1531 = vpack.c.b16 %v1051, %v1043
      %v1532 = vpack.c.b16 %v1052, %v1044
      %v1533 = vpack.c.b16 %v1053, %v1045
      %v1534 = vpack.c.b16 %v1054, %v1046
      %v1535 = vpack.c.b16 %v1055, %v1047
      %v1536 = vpack.c.b16 %v1056, %v1048
      %v1537 = vpack.c.b16 %v1057, %v1049
      %v1538 = vpack.c.b16 %v1066, %v1058
      %v1539 = vpack.c.b16 %v1067, %v1059
      %v1540 = vpack.c.b16 %v1068, %v1060
      %v1541 = vpack.c.b16 %v1069, %v1061
      %v1542 = vpack.c.b16 %v1070, %v1062
      %v1543 = vpack.c.b16 %v1071, %v1063
      %v1544 = vpack.c.b16 %v1072, %v1064
      %v1545 = vpack.c.b16 %v1073, %v1065
      %v1546 = vpack.c.b16 %v1082, %v1074
      %v1547 = vpack.c.b16 %v1083, %v1075
      %v1548 = vpack.c.b16 %v1084, %v1076
      %v1549 = vpack.c.b16 %v1085, %v1077
      %v1550 = vpack.c.b16 %v1086, %v1078
      %v1551 = vpack.c.b16 %v1087, %v1079
      %v1552 = vpack.c.b16 %v1088, %v1080
      %v1553 = vpack.c.b16 %v1089, %v1081
      %v1554 = vpack.c.b16 %v1098, %v1090
      %v1555 = vpack.c.b16 %v1099, %v1091
      %v1556 = vpack.c.b16 %v1100, %v1092
      %v1557 = vpack.c.b16 %v1101, %v1093
      %v1558 = vpack.c.b16 %v1102, %v1094
      %v1559 = vpack.c.b16 %v1103, %v1095
      %v1560 = vpack.c.b16 %v1104, %v1096
      %v1561 = vpack.c.b16 %v1105, %v1097
      %v1562 = vpack.c.b16 %v1114, %v1106
      %v1563 = vpack.c.b16 %v1115, %v1107
      %v1564 = vpack.c.b16 %v1116, %v1108
      %v1565 = vpack.c.b16 %v1117, %v1109
      %v1566 = vpack.c.b16 %v1118, %v1110
      %v1567 = vpack.c.b16 %v1119, %v1111
      %v1568 = vpack.c.b16 %v1120, %v1112
      %v1569 = vpack.c.b16 %v1121, %v1113
      %v1570 = vpack.c.b16 %v1130, %v1122
      %v1571 = vpack.c.b16 %v1131, %v1123
      %v1572 = vpack.c.b16 %v1132, %v1124
      %v1573 = vpack.c.b16 %v1133, %v1125
      %v1574 = vpack.c.b16 %v1134, %v1126
      %v1575 = vpack.c.b16 %v1135, %v1127
      %v1576 = vpack.c.b16 %v1136, %v1128
      %v1577 = vpack.c.b16 %v1137, %v1129
      %v1578 = vpack.c.b16 %v1146, %v1138
      %v1579 = vpack.c.b16 %v1147, %v1139
      %v1580 = vpack.c.b16 %v1148, %v1140
      %v1581 = vpack.c.b16 %v1149, %v1141
      %v1582 = vpack.c.b16 %v1150, %v1142
      %v1583 = vpack.c.b16 %v1151, %v1143
      %v1584 = vpack.c.b16 %v1152, %v1144
      %v1585 = vpack.c.b16 %v1153, %v1145
      %v1586 = vpack.c.b16 %v1162, %v1154
      %v1587 = vpack.c.b16 %v1163, %v1155
      %v1588 = vpack.c.b16 %v1164, %v1156
      %v1589 = vpack.c.b16 %v1165, %v1157
      %v1590 = vpack.c.b16 %v1166, %v1158
      %v1591 = vpack.c.b16 %v1167, %v1159
      %v1592 = vpack.c.b16 %v1168, %v1160
      %v1593 = vpack.c.b16 %v1169, %v1161
      %v1594 = vpack.c.b16 %v1178, %v1170
      %v1595 = vpack.c.b16 %v1179, %v1171
      %v1596 = vpack.c.b16 %v1180, %v1172
      %v1597 = vpack.c.b16 %v1181, %v1173
      %v1598 = vpack.c.b16 %v1182, %v1174
      %v1599 = vpack.c.b16 %v1183, %v1175
      %v1600 = vpack.c.b16 %v1184, %v1176
      %v1601 = vpack.c.b16 %v1185, %v1177
      %v1602 = vpack.c.b16 %v1194, %v1186
      %v1603 = vpack.c.b16 %v1195, %v1187
      %v1604 = vpack.c.b16 %v1196, %v1188
      %v1605 = vpack.c.b16 %v1197, %v1189
      %v1606 = vpack.c.b16 %v1198, %v1190
      %v1607 = vpack.c.b16 %v1199, %v1191
      %v1608 = vpack.c.b16 %v1200, %v1192
      %v1609 = vpack.c.b16 %v1201, %v1193
      %v1610 = vpack.c.b16 %v1210, %v1202
      %v1611 = vpack.c.b16 %v1211, %v1203
      %v1612 = vpack.c.b16 %v1212, %v1204
      %v1613 = vpack.c.b16 %v1213, %v1205
      %v1614 = vpack.c.b16 %v1214, %v1206
      %v1615 = vpack.c.b16 %v1215, %v1207
      %v1616 = vpack.c.b16 %v1216, %v1208
      %v1617 = vpack.c.b16 %v1217, %v1209
      %v1618 = vpack.c.b16 %v1226, %v1218
      %v1619 = vpack.c.b16 %v1227, %v1219
      %v1620 = vpack.c.b16 %v1228, %v1220
      %v1621 = vpack.c.b16 %v1229, %v1221
      %v1622 = vpack.c.b16 %v1230, %v1222
      %v1623 = vpack.c.b16 %v1231, %v1223
      %v1624 = vpack.c.b16 %v1232, %v1224
      %v1625 = vpack.c.b16 %v1233, %v1225
      %v1626 = vpack.c.b16 %v1242, %v1234
      %v1627 = vpack.c.b16 %v1243, %v1235
      %v1628 = vpack.c.b16 %v1244, %v1236
      %v1629 = vpack.c.b16 %v1245, %v1237
      %v1630 = vpack.c.b16 %v1246, %v1238
      %v1631 = vpack.c.b16 %v1247, %v1239
      %v1632 = vpack.c.b16 %v1248, %v1240
      %v1633 = vpack.c.b16 %v1249, %v1241
      %v1634 = vpack.c.b16 %v1258, %v1250
      %v1635 = vpack.c.b16 %v1259, %v1251
      %v1636 = vpack.c.b16 %v1260, %v1252
      %v1637 = vpack.c.b16 %v1261, %v1253
      %v1638 = vpack.c.b16 %v1262, %v1254
      %v1639 = vpack.c.b16 %v1263, %v1255
      %v1640 = vpack.c.b16 %v1264, %v1256
      %v1641 = vpack.c.b16 %v1265, %v1257
      %v1642 = vpack.c.b16 %v1274, %v1266
      %v1643 = vpack.c.b16 %v1275, %v1267
      %v1644 = vpack.c.b16 %v1276, %v1268
      %v1645 = vpack.c.b16 %v1277, %v1269
      %v1646 = vpack.c.b16 %v1278, %v1270
      %v1647 = vpack.c.b16 %v1279, %v1271
      %v1648 = vpack.c.b16 %v1280, %v1272
      %v1649 = vpack.c.b16 %v1281, %v1273
      %v1650 = vpack.c.b16 %v1290, %v1282
      %v1651 = vpack.c.b16 %v1291, %v1283
      %v1652 = vpack.c.b16 %v1292, %v1284
      %v1653 = vpack.c.b16 %v1293, %v1285
      %v1654 = vpack.c.b16 %v1294, %v1286
      %v1655 = vpack.c.b16 %v1295, %v1287
      %v1656 = vpack.c.b16 %v1296, %v1288
      %v1657 = vpack.c.b16 %v1297, %v1289
      %v1658 = vpack.c.b16 %v1306, %v1298
      %v1659 = vpack.c.b16 %v1307, %v1299
      %v1660 = vpack.c.b16 %v1308, %v1300
      %v1661 = vpack.c.b16 %v1309, %v1301
      %v1662 = vpack.c.b16 %v1310, %v1302
      %v1663 = vpack.c.b16 %v1311, %v1303
      %v1664 = vpack.c.b16 %v1312, %v1304
      %v1665 = vpack.c.b16 %v1313, %v1305
      %v1666 = vpack.c.b16 %v1322, %v1314
      %v1667 = vpack.c.b16 %v1323, %v1315
      %v1668 = vpack.c.b16 %v1324, %v1316
      %v1669 = vpack.c.b16 %v1325, %v1317
      %v1670 = vpack.c.b16 %v1326, %v1318
      %v1671 = vpack.c.b16 %v1327, %v1319
      %v1672 = vpack.c.b16 %v1328, %v1320
      %v1673 = vpack.c.b16 %v1329, %v1321
      %v1674 = vpack.c.b16 %v1338, %v1330
      %v1675 = vpack.c.b16 %v1339, %v1331
      %v1676 = vpack.c.b16 %v1340, %v1332
      %v1677 = vpack.c.b16 %v1341, %v1333
      %v1678 = vpack.c.b16 %v1342, %v1334
      %v1679 = vpack.c.b16 %v1343, %v1335
      %v1680 = vpack.c.b16 %v1344, %v1336
      %v1681 = vpack.c.b16 %v1345, %v1337
      %v1682 = vpack.c.b16 %v1354, %v1346
      %v1683 = vpack.c.b16 %v1355, %v1347
      %v1684 = vpack.c.b16 %v1356, %v1348
      %v1685 = vpack.c.b16 %v1357, %v1349
      %v1686 = vpack.c.b16 %v1358, %v1350
      %v1687 = vpack.c.b16 %v1359, %v1351
      %v1688 = vpack.c.b16 %v1360, %v1352
      %v1689 = vpack.c.b16 %v1361, %v1353
      %v1690 = vpack.c.b16 %v1370, %v1362
      %v1691 = vpack.c.b16 %v1371, %v1363
      %v1692 = vpack.c.b16 %v1372, %v1364
      %v1693 = vpack.c.b16 %v1373, %v1365
      %v1694 = vpack.c.b16 %v1374, %v1366
      %v1695 = vpack.c.b16 %v1375, %v1367
      %v1696 = vpack.c.b16 %v1376, %v1368
      %v1697 = vpack.c.b16 %v1377, %v1369
      %v1698 = vpack.c.b16 %v1386, %v1378
      %v1699 = vpack.c.b16 %v1387, %v1379
      %v1700 = vpack.c.b16 %v1388, %v1380
      %v1701 = vpack.c.b16 %v1389, %v1381
      %v1702 = vpack.c.b16 %v1390, %v1382
      %v1703 = vpack.c.b16 %v1391, %v1383
      %v1704 = vpack.c.b16 %v1392, %v1384
      %v1705 = vpack.c.b16 %v1393, %v1385
      %v1706 = vpack.c.b16 %v1402, %v1394
      %v1707 = vpack.c.b16 %v1403, %v1395
      %v1708 = vpack.c.b16 %v1404, %v1396
      %v1709 = vpack.c.b16 %v1405, %v1397
      %v1710 = vpack.c.b16 %v1406, %v1398
      %v1711 = vpack.c.b16 %v1407, %v1399
      %v1712 = vpack.c.b16 %v1408, %v1400
      %v1713 = vpack.c.b16 %v1409, %v1401
      %v1714 = vpack.c.b16 %v1418, %v1410
      %v1715 = vpack.c.b16 %v1419, %v1411
      %v1716 = vpack.c.b16 %v1420, %v1412
      %v1717 = vpack.c.b16 %v1421, %v1413
      %v1718 = vpack.c.b16 %v1422, %v1414
      %v1719 = vpack.c.b16 %v1423, %v1415
      %v1720 = vpack.c.b16 %v1424, %v1416
      %v1721 = vpack.c.b16 %v1425, %v1417
      %v1722 = vpack.c.b16 %v1434, %v1426
      %v1723 = vpack.c.b16 %v1435, %v1427
      %v1724 = vpack.c.b16 %v1436, %v1428
      %v1725 = vpack.c.b16 %v1437, %v1429
      %v1726 = vpack.c.b16 %v1438, %v1430
      %v1727 = vpack.c.b16 %v1439, %v1431
      %v1728 = vpack.c.b16 %v1440, %v1432
      %v1729 = vpack.c.b16 %v1441, %v1433
      %v1730 = vpack.c.b16 %v1450, %v1442
      %v1731 = vpack.c.b16 %v1451, %v1443
      %v1732 = vpack.c.b16 %v1452, %v1444
      %v1733 = vpack.c.b16 %v1453, %v1445
      %v1734 = vpack.c.b16 %v1454, %v1446
      %v1735 = vpack.c.b16 %v1455, %v1447
      %v1736 = vpack.c.b16 %v1456, %v1448
      %v1737 = vpack.c.b16 %v1457, %v1449
      %v1738 = vpack.c.b16 %v1466, %v1458
      %v1739 = vpack.c.b16 %v1467, %v1459
      %v1740 = vpack.c.b16 %v1468, %v1460
      %v1741 = vpack.c.b16 %v1469, %v1461
      %v1742 = vpack.c.b16 %v1470, %v1462
      %v1743 = vpack.c.b16 %v1471, %v1463
      %v1744 = vpack.c.b16 %v1472, %v1464
      %v1745 = vpack.c.b16 %v1473, %v1465
      %v1746 = vpack.c.b16 %v1482, %v1474
      %v1747 = vpack.c.b16 %v1483, %v1475
      %v1748 = vpack.c.b16 %v1484, %v1476
      %v1749 = vpack.c.b16 %v1485, %v1477
      %v1750 = vpack.c.b16 %v1486, %v1478
      %v1751 = vpack.c.b16 %v1487, %v1479
      %v1752 = vpack.c.b16 %v1488, %v1480
      %v1753 = vpack.c.b16 %v1489, %v1481
      %v1754 = vpack.c.b16 %v1498, %v1490
      %v1755 = vpack.c.b16 %v1499, %v1491
      %v1756 = vpack.c.b16 %v1500, %v1492
      %v1757 = vpack.c.b16 %v1501, %v1493
      %v1758 = vpack.c.b16 %v1502, %v1494
      %v1759 = vpack.c.b16 %v1503, %v1495
      %v1760 = vpack.c.b16 %v1504, %v1496
      %v1761 = vpack.c.b16 %v1505, %v1497
      %2018 = vmatprep.subr.bf16.mxu0 %v1507
      %2019 = vmatpush1.bf16.msra.mxu0 %v1506
      %2020 = vmatprep.subr.bf16.mxu0 %v1515
      %2021 = vmatpush1.bf16.msra.mxu0 %v1514
      %2022 = vmatprep.subr.bf16.mxu0 %v1523
      %2023 = vmatpush1.bf16.msra.mxu0 %v1522
      %2024 = vmatprep.subr.bf16.mxu0 %v1531
      %2025 = vmatpush1.bf16.msra.mxu0 %v1530
      %2026 = vmatprep.subr.bf16.mxu0 %v1539
      %2027 = vmatpush1.bf16.msra.mxu0 %v1538
      %2028 = vmatprep.subr.bf16.mxu0 %v1547
      %2029 = vmatpush1.bf16.msra.mxu0 %v1546
      %2030 = vmatprep.subr.bf16.mxu0 %v1555
      %2031 = vmatpush1.bf16.msra.mxu0 %v1554
      %2032 = vmatprep.subr.bf16.mxu0 %v1563
      %2033 = vmatpush1.bf16.msra.mxu0 %v1562
      %2034 = vmatprep.subr.bf16.mxu0 %v1571
      %2035 = vmatpush1.bf16.msra.mxu0 %v1570
      %2036 = vmatprep.subr.bf16.mxu0 %v1579
      %2037 = vmatpush1.bf16.msra.mxu0 %v1578
      %2038 = vmatprep.subr.bf16.mxu0 %v1587
      %2039 = vmatpush1.bf16.msra.mxu0 %v1586
      %2040 = vmatprep.subr.bf16.mxu0 %v1595
      %2041 = vmatpush1.bf16.msra.mxu0 %v1594
      %2042 = vmatprep.subr.bf16.mxu0 %v1603
      %2043 = vmatpush1.bf16.msra.mxu0 %v1602
      %2044 = vmatprep.subr.bf16.mxu0 %v1611
      %2045 = vmatpush1.bf16.msra.mxu0 %v1610
      %2046 = vmatprep.subr.bf16.mxu0 %v1619
      %2047 = vmatpush1.bf16.msra.mxu0 %v1618
      %2048 = vmatprep.subr.bf16.mxu0 %v1627
      %2049 = vmatpush1.bf16.msra.mxu0 %v1626
      %2050 = vmatprep.mubr.bf16.mxu0 %v425
      %2051 = vmatmul.mubr.bf16.gmra.mrb[0].mxu0 %v424
      %v2052 = vpop.f32.mrb[0].mxu0
      %v2053 = vadd.f32 %v701, %v2052
      %v2054 = vpop.f32.mrb[0].mxu0
      %v2055 = vadd.f32 %v705, %v2054
      %v2056 = vpop.f32.mrb[0].mxu0
      %v2057 = vadd.f32 %v701, %v2056
      %v2058 = vpop.f32.mrb[0].mxu0
      %v2059 = vadd.f32 %v705, %v2058
      %2060 = vmatprep.mubr.bf16.mxu0 %v429
      %2061 = vmatmul.mubr.bf16.gmra.mrb[0].mxu0 %v428
      %v2062 = vpop.f32.mrb[0].mxu0
      %v2063 = vadd.f32 %v701, %v2062
      %v2064 = vpop.f32.mrb[0].mxu0
      %v2065 = vadd.f32 %v705, %v2064
      %v2066 = vpop.f32.mrb[0].mxu0
      %v2067 = vadd.f32 %v701, %v2066
      %v2068 = vpop.f32.mrb[0].mxu0
      %v2069 = vadd.f32 %v705, %v2068
      %2070 = vmatprep.mubr.bf16.mxu0 %v433
      %2071 = vmatmul.mubr.bf16.gmra.mrb[0].mxu0 %v432
      %v2072 = vpop.f32.mrb[0].mxu0
      %v2073 = vadd.f32 %v701, %v2072
      %v2074 = vpop.f32.mrb[0].mxu0
      %v2075 = vadd.f32 %v705, %v2074
      %v2076 = vpop.f32.mrb[0].mxu0
      %v2077 = vadd.f32 %v701, %v2076
      %v2078 = vpop.f32.mrb[0].mxu0
      %v2079 = vadd.f32 %v705, %v2078
      %2080 = vmatprep.mubr.bf16.mxu0 %v437
      %2081 = vmatmul.mubr.bf16.gmra.mrb[0].mxu0 %v436
      %v2082 = vpop.f32.mrb[0].mxu0
      %v2083 = vadd.f32 %v701, %v2082
      %v2084 = vpop.f32.mrb[0].mxu0
      %v2085 = vadd.f32 %v705, %v2084
      %v2086 = vpop.f32.mrb[0].mxu0
      %v2087 = vadd.f32 %v701, %v2086
      %v2088 = vpop.f32.mrb[0].mxu0
      %v2089 = vadd.f32 %v705, %v2088
      %2090 = vdwg.mxu0
      %2091 = vmatprep.subr.bf16.mxu0 %v1635
      %2092 = vmatpush1.bf16.msra.mxu0 %v1634
      %2093 = vmatprep.subr.bf16.mxu0 %v1643
      %2094 = vmatpush1.bf16.msra.mxu0 %v1642
      %2095 = vmatprep.subr.bf16.mxu0 %v1651
      %2096 = vmatpush1.bf16.msra.mxu0 %v1650
      %2097 = vmatprep.subr.bf16.mxu0 %v1659
      %2098 = vmatpush1.bf16.msra.mxu0 %v1658
      %2099 = vmatprep.subr.bf16.mxu0 %v1667
      %2100 = vmatpush1.bf16.msra.mxu0 %v1666
      %2101 = vmatprep.subr.bf16.mxu0 %v1675
      %2102 = vmatpush1.bf16.msra.mxu0 %v1674
      %2103 = vmatprep.subr.bf16.mxu0 %v1683
      %2104 = vmatpush1.bf16.msra.mxu0 %v1682
      %2105 = vmatprep.subr.bf16.mxu0 %v1691
      %2106 = vmatpush1.bf16.msra.mxu0 %v1690
      %2107 = vmatprep.subr.bf16.mxu0 %v1699
      %2108 = vmatpush1.bf16.msra.mxu0 %v1698
      %2109 = vmatprep.subr.bf16.mxu0 %v1707
      %2110 = vmatpush1.bf16.msra.mxu0 %v1706
      %2111 = vmatprep.subr.bf16.mxu0 %v1715
      %2112 = vmatpush1.bf16.msra.mxu0 %v1714
      %2113 = vmatprep.subr.bf16.mxu0 %v1723
      %2114 = vmatpush1.bf16.msra.mxu0 %v1722
      %2115 = vmatprep.subr.bf16.mxu0 %v1731
      %2116 = vmatpush1.bf16.msra.mxu0 %v1730
      %2117 = vmatprep.subr.bf16.mxu0 %v1739
      %2118 = vmatpush1.bf16.msra.mxu0 %v1738
      %2119 = vmatprep.subr.bf16.mxu0 %v1747
      %2120 = vmatpush1.bf16.msra.mxu0 %v1746
      %2121 = vmatprep.subr.bf16.mxu0 %v1755
      %2122 = vmatpush1.bf16.msra.mxu0 %v1754
      %2123 = vmatprep.mubr.bf16.mxu0 %v427
      %2124 = vmatmul.mubr.bf16.gmra.mrb[0].mxu0 %v426
      %v2125 = vpop.f32.mrb[0].mxu0
      %v2126 = vadd.f32 %v2053, %v2125
      %v2127 = vpop.f32.mrb[0].mxu0
      %v2128 = vadd.f32 %v2055, %v2127
      %v2129 = vpop.f32.mrb[0].mxu0
      %v2130 = vadd.f32 %v2057, %v2129
      %v2131 = vpop.f32.mrb[0].mxu0
      %v2132 = vadd.f32 %v2059, %v2131
      %2133 = vmatprep.mubr.bf16.mxu0 %v431
      %2134 = vmatmul.mubr.bf16.gmra.mrb[0].mxu0 %v430
      %v2135 = vpop.f32.mrb[0].mxu0
      %v2136 = vadd.f32 %v2063, %v2135
      %v2137 = vpop.f32.mrb[0].mxu0
      %v2138 = vadd.f32 %v2065, %v2137
      %v2139 = vpop.f32.mrb[0].mxu0
      %v2140 = vadd.f32 %v2067, %v2139
      %v2141 = vpop.f32.mrb[0].mxu0
      %v2142 = vadd.f32 %v2069, %v2141
      %2143 = vmatprep.mubr.bf16.mxu0 %v435
      %2144 = vmatmul.mubr.bf16.gmra.mrb[0].mxu0 %v434
      %v2145 = vpop.f32.mrb[0].mxu0
      %v2146 = vadd.f32 %v2073, %v2145
      %v2147 = vpop.f32.mrb[0].mxu0
      %v2148 = vadd.f32 %v2075, %v2147
      %v2149 = vpop.f32.mrb[0].mxu0
      %v2150 = vadd.f32 %v2077, %v2149
      %v2151 = vpop.f32.mrb[0].mxu0
      %v2152 = vadd.f32 %v2079, %v2151
      %2153 = vmatprep.mubr.bf16.mxu0 %v439
      %2154 = vmatmul.mubr.bf16.gmra.mrb[0].mxu0 %v438
      %v2155 = vpop.f32.mrb[0].mxu0
      %v2156 = vadd.f32 %v2083, %v2155
      %v2157 = vpop.f32.mrb[0].mxu0
      %v2158 = vadd.f32 %v2085, %v2157
      %v2159 = vpop.f32.mrb[0].mxu0
      %v2160 = vadd.f32 %v2087, %v2159
      %v2161 = vpop.f32.mrb[0].mxu0
      %v2162 = vadd.f32 %v2089, %v2161
      %2163 = vdwg.mxu0
      %2164 = vmatprep.subr.bf16.mxu0 %v1509
      %2165 = vmatpush1.bf16.msra.mxu0 %v1508
      %2166 = vmatprep.subr.bf16.mxu0 %v1517
      %2167 = vmatpush1.bf16.msra.mxu0 %v1516
      %2168 = vmatprep.subr.bf16.mxu0 %v1525
      %2169 = vmatpush1.bf16.msra.mxu0 %v1524
      %2170 = vmatprep.subr.bf16.mxu0 %v1533
      %2171 = vmatpush1.bf16.msra.mxu0 %v1532
      %2172 = vmatprep.subr.bf16.mxu0 %v1541
      %2173 = vmatpush1.bf16.msra.mxu0 %v1540
      %2174 = vmatprep.subr.bf16.mxu0 %v1549
      %2175 = vmatpush1.bf16.msra.mxu0 %v1548
      %2176 = vmatprep.subr.bf16.mxu0 %v1557
      %2177 = vmatpush1.bf16.msra.mxu0 %v1556
      %2178 = vmatprep.subr.bf16.mxu0 %v1565
      %2179 = vmatpush1.bf16.msra.mxu0 %v1564
      %2180 = vmatprep.subr.bf16.mxu0 %v1573
      %2181 = vmatpush1.bf16.msra.mxu0 %v1572
      %2182 = vmatprep.subr.bf16.mxu0 %v1581
      %2183 = vmatpush1.bf16.msra.mxu0 %v1580
      %2184 = vmatprep.subr.bf16.mxu0 %v1589
      %2185 = vmatpush1.bf16.msra.mxu0 %v1588
      %2186 = vmatprep.subr.bf16.mxu0 %v1597
      %2187 = vmatpush1.bf16.msra.mxu0 %v1596
      %2188 = vmatprep.subr.bf16.mxu0 %v1605
      %2189 = vmatpush1.bf16.msra.mxu0 %v1604
      %2190 = vmatprep.subr.bf16.mxu0 %v1613
      %2191 = vmatpush1.bf16.msra.mxu0 %v1612
      %2192 = vmatprep.subr.bf16.mxu0 %v1621
      %2193 = vmatpush1.bf16.msra.mxu0 %v1620
      %2194 = vmatprep.subr.bf16.mxu0 %v1629
      %2195 = vmatpush1.bf16.msra.mxu0 %v1628
      %2196 = vmatprep.mubr.bf16.mxu0 %v425
      %2197 = vmatmul.mubr.bf16.gmra.mrb[0].mxu0 %v424
      %v2198 = vpop.f32.mrb[0].mxu0
      %v2199 = vadd.f32 %v709, %v2198
      %v2200 = vpop.f32.mrb[0].mxu0
      %v2201 = vadd.f32 %v713, %v2200
      %v2202 = vpop.f32.mrb[0].mxu0
      %v2203 = vadd.f32 %v709, %v2202
      %v2204 = vpop.f32.mrb[0].mxu0
      %v2205 = vadd.f32 %v713, %v2204
      %2206 = vmatprep.mubr.bf16.mxu0 %v429
      %2207 = vmatmul.mubr.bf16.gmra.mrb[0].mxu0 %v428
      %v2208 = vpop.f32.mrb[0].mxu0
      %v2209 = vadd.f32 %v709, %v2208
      %v2210 = vpop.f32.mrb[0].mxu0
      %v2211 = vadd.f32 %v713, %v2210
      %v2212 = vpop.f32.mrb[0].mxu0
      %v2213 = vadd.f32 %v709, %v2212
      %v2214 = vpop.f32.mrb[0].mxu0
      %v2215 = vadd.f32 %v713, %v2214
      %2216 = vmatprep.mubr.bf16.mxu0 %v433
      %2217 = vmatmul.mubr.bf16.gmra.mrb[0].mxu0 %v432
      %v2218 = vpop.f32.mrb[0].mxu0
      %v2219 = vadd.f32 %v709, %v2218
      %v2220 = vpop.f32.mrb[0].mxu0
      %v2221 = vadd.f32 %v713, %v2220
      %v2222 = vpop.f32.mrb[0].mxu0
      %v2223 = vadd.f32 %v709, %v2222
      %v2224 = vpop.f32.mrb[0].mxu0
      %v2225 = vadd.f32 %v713, %v2224
      %2226 = vmatprep.mubr.bf16.mxu0 %v437
      %2227 = vmatmul.mubr.bf16.gmra.mrb[0].mxu0 %v436
      %v2228 = vpop.f32.mrb[0].mxu0
      %v2229 = vadd.f32 %v709, %v2228
      %v2230 = vpop.f32.mrb[0].mxu0
      %v2231 = vadd.f32 %v713, %v2230
      %v2232 = vpop.f32.mrb[0].mxu0
      %v2233 = vadd.f32 %v709, %v2232
      %v2234 = vpop.f32.mrb[0].mxu0
      %v2235 = vadd.f32 %v713, %v2234
      %2236 = vdwg.mxu0
      %2237 = vmatprep.subr.bf16.mxu0 %v1637
      %2238 = vmatpush1.bf16.msra.mxu0 %v1636
      %2239 = vmatprep.subr.bf16.mxu0 %v1645
      %2240 = vmatpush1.bf16.msra.mxu0 %v1644
      %2241 = vmatprep.subr.bf16.mxu0 %v1653
      %2242 = vmatpush1.bf16.msra.mxu0 %v1652
      %2243 = vmatprep.subr.bf16.mxu0 %v1661
      %2244 = vmatpush1.bf16.msra.mxu0 %v1660
      %2245 = vmatprep.subr.bf16.mxu0 %v1669
      %2246 = vmatpush1.bf16.msra.mxu0 %v1668
      %2247 = vmatprep.subr.bf16.mxu0 %v1677
      %2248 = vmatpush1.bf16.msra.mxu0 %v1676
      %2249 = vmatprep.subr.bf16.mxu0 %v1685
      %2250 = vmatpush1.bf16.msra.mxu0 %v1684
      %2251 = vmatprep.subr.bf16.mxu0 %v1693
      %2252 = vmatpush1.bf16.msra.mxu0 %v1692
      %2253 = vmatprep.subr.bf16.mxu0 %v1701
      %2254 = vmatpush1.bf16.msra.mxu0 %v1700
      %2255 = vmatprep.subr.bf16.mxu0 %v1709
      %2256 = vmatpush1.bf16.msra.mxu0 %v1708
      %2257 = vmatprep.subr.bf16.mxu0 %v1717
      %2258 = vmatpush1.bf16.msra.mxu0 %v1716
      %2259 = vmatprep.subr.bf16.mxu0 %v1725
      %2260 = vmatpush1.bf16.msra.mxu0 %v1724
      %2261 = vmatprep.subr.bf16.mxu0 %v1733
      %2262 = vmatpush1.bf16.msra.mxu0 %v1732
      %2263 = vmatprep.subr.bf16.mxu0 %v1741
      %2264 = vmatpush1.bf16.msra.mxu0 %v1740
      %2265 = vmatprep.subr.bf16.mxu0 %v1749
      %2266 = vmatpush1.bf16.msra.mxu0 %v1748
      %2267 = vmatprep.subr.bf16.mxu0 %v1757
      %2268 = vmatpush1.bf16.msra.mxu0 %v1756
      %2269 = vmatprep.mubr.bf16.mxu0 %v427
      %2270 = vmatmul.mubr.bf16.gmra.mrb[0].mxu0 %v426
      %v2271 = vpop.f32.mrb[0].mxu0
      %v2272 = vadd.f32 %v2199, %v2271
      %v2273 = vpop.f32.mrb[0].mxu0
      %v2274 = vadd.f32 %v2201, %v2273
      %v2275 = vpop.f32.mrb[0].mxu0
      %v2276 = vadd.f32 %v2203, %v2275
      %v2277 = vpop.f32.mrb[0].mxu0
      %v2278 = vadd.f32 %v2205, %v2277
      %2279 = vmatprep.mubr.bf16.mxu0 %v431
      %2280 = vmatmul.mubr.bf16.gmra.mrb[0].mxu0 %v430
      %v2281 = vpop.f32.mrb[0].mxu0
      %v2282 = vadd.f32 %v2209, %v2281
      %v2283 = vpop.f32.mrb[0].mxu0
      %v2284 = vadd.f32 %v2211, %v2283
      %v2285 = vpop.f32.mrb[0].mxu0
      %v2286 = vadd.f32 %v2213, %v2285
      %v2287 = vpop.f32.mrb[0].mxu0
      %v2288 = vadd.f32 %v2215, %v2287
      %2289 = vmatprep.mubr.bf16.mxu0 %v435
      %2290 = vmatmul.mubr.bf16.gmra.mrb[0].mxu0 %v434
      %v2291 = vpop.f32.mrb[0].mxu0
      %v2292 = vadd.f32 %v2219, %v2291
      %v2293 = vpop.f32.mrb[0].mxu0
      %v2294 = vadd.f32 %v2221, %v2293
      %v2295 = vpop.f32.mrb[0].mxu0
      %v2296 = vadd.f32 %v2223, %v2295
      %v2297 = vpop.f32.mrb[0].mxu0
      %v2298 = vadd.f32 %v2225, %v2297
      %2299 = vmatprep.mubr.bf16.mxu0 %v439
      %2300 = vmatmul.mubr.bf16.gmra.mrb[0].mxu0 %v438
      %v2301 = vpop.f32.mrb[0].mxu0
      %v2302 = vadd.f32 %v2229, %v2301
      %v2303 = vpop.f32.mrb[0].mxu0
      %v2304 = vadd.f32 %v2231, %v2303
      %v2305 = vpop.f32.mrb[0].mxu0
      %v2306 = vadd.f32 %v2233, %v2305
      %v2307 = vpop.f32.mrb[0].mxu0
      %v2308 = vadd.f32 %v2235, %v2307
      %2309 = vdwg.mxu0
      %2310 = vmatprep.subr.bf16.mxu0 %v1511
      %2311 = vmatpush1.bf16.msra.mxu0 %v1510
      %2312 = vmatprep.subr.bf16.mxu0 %v1519
      %2313 = vmatpush1.bf16.msra.mxu0 %v1518
      %2314 = vmatprep.subr.bf16.mxu0 %v1527
      %2315 = vmatpush1.bf16.msra.mxu0 %v1526
      %2316 = vmatprep.subr.bf16.mxu0 %v1535
      %2317 = vmatpush1.bf16.msra.mxu0 %v1534
      %2318 = vmatprep.subr.bf16.mxu0 %v1543
      %2319 = vmatpush1.bf16.msra.mxu0 %v1542
      %2320 = vmatprep.subr.bf16.mxu0 %v1551
      %2321 = vmatpush1.bf16.msra.mxu0 %v1550
      %2322 = vmatprep.subr.bf16.mxu0 %v1559
      %2323 = vmatpush1.bf16.msra.mxu0 %v1558
      %2324 = vmatprep.subr.bf16.mxu0 %v1567
      %2325 = vmatpush1.bf16.msra.mxu0 %v1566
      %2326 = vmatprep.subr.bf16.mxu0 %v1575
      %2327 = vmatpush1.bf16.msra.mxu0 %v1574
      %2328 = vmatprep.subr.bf16.mxu0 %v1583
      %2329 = vmatpush1.bf16.msra.mxu0 %v1582
      %2330 = vmatprep.subr.bf16.mxu0 %v1591
      %2331 = vmatpush1.bf16.msra.mxu0 %v1590
      %2332 = vmatprep.subr.bf16.mxu0 %v1599
      %2333 = vmatpush1.bf16.msra.mxu0 %v1598
      %2334 = vmatprep.subr.bf16.mxu0 %v1607
      %2335 = vmatpush1.bf16.msra.mxu0 %v1606
      %2336 = vmatprep.subr.bf16.mxu0 %v1615
      %2337 = vmatpush1.bf16.msra.mxu0 %v1614
      %2338 = vmatprep.subr.bf16.mxu0 %v1623
      %2339 = vmatpush1.bf16.msra.mxu0 %v1622
      %2340 = vmatprep.subr.bf16.mxu0 %v1631
      %2341 = vmatpush1.bf16.msra.mxu0 %v1630
      %2342 = vmatprep.mubr.bf16.mxu0 %v425
      %2343 = vmatmul.mubr.bf16.gmra.mrb[0].mxu0 %v424
      %v2344 = vpop.f32.mrb[0].mxu0
      %v2345 = vadd.f32 %v717, %v2344
      %v2346 = vpop.f32.mrb[0].mxu0
      %v2347 = vadd.f32 %v721, %v2346
      %v2348 = vpop.f32.mrb[0].mxu0
      %v2349 = vadd.f32 %v717, %v2348
      %v2350 = vpop.f32.mrb[0].mxu0
      %v2351 = vadd.f32 %v721, %v2350
      %2352 = vmatprep.mubr.bf16.mxu0 %v429
      %2353 = vmatmul.mubr.bf16.gmra.mrb[0].mxu0 %v428
      %v2354 = vpop.f32.mrb[0].mxu0
      %v2355 = vadd.f32 %v717, %v2354
      %v2356 = vpop.f32.mrb[0].mxu0
      %v2357 = vadd.f32 %v721, %v2356
      %v2358 = vpop.f32.mrb[0].mxu0
      %v2359 = vadd.f32 %v717, %v2358
      %v2360 = vpop.f32.mrb[0].mxu0
      %v2361 = vadd.f32 %v721, %v2360
      %2362 = vmatprep.mubr.bf16.mxu0 %v433
      %2363 = vmatmul.mubr.bf16.gmra.mrb[0].mxu0 %v432
      %v2364 = vpop.f32.mrb[0].mxu0
      %v2365 = vadd.f32 %v717, %v2364
      %v2366 = vpop.f32.mrb[0].mxu0
      %v2367 = vadd.f32 %v721, %v2366
      %v2368 = vpop.f32.mrb[0].mxu0
      %v2369 = vadd.f32 %v717, %v2368
      %v2370 = vpop.f32.mrb[0].mxu0
      %v2371 = vadd.f32 %v721, %v2370
      %2372 = vmatprep.mubr.bf16.mxu0 %v437
      %2373 = vmatmul.mubr.bf16.gmra.mrb[0].mxu0 %v436
      %v2374 = vpop.f32.mrb[0].mxu0
      %v2375 = vadd.f32 %v717, %v2374
      %v2376 = vpop.f32.mrb[0].mxu0
      %v2377 = vadd.f32 %v721, %v2376
      %v2378 = vpop.f32.mrb[0].mxu0
      %v2379 = vadd.f32 %v717, %v2378
      %v2380 = vpop.f32.mrb[0].mxu0
      %v2381 = vadd.f32 %v721, %v2380
      %2382 = vdwg.mxu0
      %2383 = vmatprep.subr.bf16.mxu0 %v1639
      %2384 = vmatpush1.bf16.msra.mxu0 %v1638
      %2385 = vmatprep.subr.bf16.mxu0 %v1647
      %2386 = vmatpush1.bf16.msra.mxu0 %v1646
      %2387 = vmatprep.subr.bf16.mxu0 %v1655
      %2388 = vmatpush1.bf16.msra.mxu0 %v1654
      %2389 = vmatprep.subr.bf16.mxu0 %v1663
      %2390 = vmatpush1.bf16.msra.mxu0 %v1662
      %2391 = vmatprep.subr.bf16.mxu0 %v1671
      %2392 = vmatpush1.bf16.msra.mxu0 %v1670
      %2393 = vmatprep.subr.bf16.mxu0 %v1679
      %2394 = vmatpush1.bf16.msra.mxu0 %v1678
      %2395 = vmatprep.subr.bf16.mxu0 %v1687
      %2396 = vmatpush1.bf16.msra.mxu0 %v1686
      %2397 = vmatprep.subr.bf16.mxu0 %v1695
      %2398 = vmatpush1.bf16.msra.mxu0 %v1694
      %2399 = vmatprep.subr.bf16.mxu0 %v1703
      %2400 = vmatpush1.bf16.msra.mxu0 %v1702
      %2401 = vmatprep.subr.bf16.mxu0 %v1711
      %2402 = vmatpush1.bf16.msra.mxu0 %v1710
      %2403 = vmatprep.subr.bf16.mxu0 %v1719
      %2404 = vmatpush1.bf16.msra.mxu0 %v1718
      %2405 = vmatprep.subr.bf16.mxu0 %v1727
      %2406 = vmatpush1.bf16.msra.mxu0 %v1726
      %2407 = vmatprep.subr.bf16.mxu0 %v1735
      %2408 = vmatpush1.bf16.msra.mxu0 %v1734
      %2409 = vmatprep.subr.bf16.mxu0 %v1743
      %2410 = vmatpush1.bf16.msra.mxu0 %v1742
      %2411 = vmatprep.subr.bf16.mxu0 %v1751
      %2412 = vmatpush1.bf16.msra.mxu0 %v1750
      %2413 = vmatprep.subr.bf16.mxu0 %v1759
      %2414 = vmatpush1.bf16.msra.mxu0 %v1758
      %2415 = vmatprep.mubr.bf16.mxu0 %v427
      %2416 = vmatmul.mubr.bf16.gmra.mrb[0].mxu0 %v426
      %v2417 = vpop.f32.mrb[0].mxu0
      %v2418 = vadd.f32 %v2345, %v2417
      %v2419 = vpop.f32.mrb[0].mxu0
      %v2420 = vadd.f32 %v2347, %v2419
      %v2421 = vpop.f32.mrb[0].mxu0
      %v2422 = vadd.f32 %v2349, %v2421
      %v2423 = vpop.f32.mrb[0].mxu0
      %v2424 = vadd.f32 %v2351, %v2423
      %2425 = vmatprep.mubr.bf16.mxu0 %v431
      %2426 = vmatmul.mubr.bf16.gmra.mrb[0].mxu0 %v430
      %v2427 = vpop.f32.mrb[0].mxu0
      %v2428 = vadd.f32 %v2355, %v2427
      %v2429 = vpop.f32.mrb[0].mxu0
      %v2430 = vadd.f32 %v2357, %v2429
      %v2431 = vpop.f32.mrb[0].mxu0
      %v2432 = vadd.f32 %v2359, %v2431
      %v2433 = vpop.f32.mrb[0].mxu0
      %v2434 = vadd.f32 %v2361, %v2433
      %2435 = vmatprep.mubr.bf16.mxu0 %v435
      %2436 = vmatmul.mubr.bf16.gmra.mrb[0].mxu0 %v434
      %v2437 = vpop.f32.mrb[0].mxu0
      %v2438 = vadd.f32 %v2365, %v2437
      %v2439 = vpop.f32.mrb[0].mxu0
      %v2440 = vadd.f32 %v2367, %v2439
      %v2441 = vpop.f32.mrb[0].mxu0
      %v2442 = vadd.f32 %v2369, %v2441
      %v2443 = vpop.f32.mrb[0].mxu0
      %v2444 = vadd.f32 %v2371, %v2443
      %2445 = vmatprep.mubr.bf16.mxu0 %v439
      %2446 = vmatmul.mubr.bf16.gmra.mrb[0].mxu0 %v438
      %v2447 = vpop.f32.mrb[0].mxu0
      %v2448 = vadd.f32 %v2375, %v2447
      %v2449 = vpop.f32.mrb[0].mxu0
      %v2450 = vadd.f32 %v2377, %v2449
      %v2451 = vpop.f32.mrb[0].mxu0
      %v2452 = vadd.f32 %v2379, %v2451
      %v2453 = vpop.f32.mrb[0].mxu0
      %v2454 = vadd.f32 %v2381, %v2453
      %2455 = vdwg.mxu0
      %2456 = vmatprep.subr.bf16.mxu0 %v1513
      %2457 = vmatpush1.bf16.msra.mxu0 %v1512
      %2458 = vmatprep.subr.bf16.mxu0 %v1521
      %2459 = vmatpush1.bf16.msra.mxu0 %v1520
      %2460 = vmatprep.subr.bf16.mxu0 %v1529
      %2461 = vmatpush1.bf16.msra.mxu0 %v1528
      %2462 = vmatprep.subr.bf16.mxu0 %v1537
      %2463 = vmatpush1.bf16.msra.mxu0 %v1536
      %2464 = vmatprep.subr.bf16.mxu0 %v1545
      %2465 = vmatpush1.bf16.msra.mxu0 %v1544
      %2466 = vmatprep.subr.bf16.mxu0 %v1553
      %2467 = vmatpush1.bf16.msra.mxu0 %v1552
      %2468 = vmatprep.subr.bf16.mxu0 %v1561
      %2469 = vmatpush1.bf16.msra.mxu0 %v1560
      %2470 = vmatprep.subr.bf16.mxu0 %v1569
      %2471 = vmatpush1.bf16.msra.mxu0 %v1568
      %2472 = vmatprep.subr.bf16.mxu0 %v1577
      %2473 = vmatpush1.bf16.msra.mxu0 %v1576
      %2474 = vmatprep.subr.bf16.mxu0 %v1585
      %2475 = vmatpush1.bf16.msra.mxu0 %v1584
      %2476 = vmatprep.subr.bf16.mxu0 %v1593
      %2477 = vmatpush1.bf16.msra.mxu0 %v1592
      %2478 = vmatprep.subr.bf16.mxu0 %v1601
      %2479 = vmatpush1.bf16.msra.mxu0 %v1600
      %2480 = vmatprep.subr.bf16.mxu0 %v1609
      %2481 = vmatpush1.bf16.msra.mxu0 %v1608
      %2482 = vmatprep.subr.bf16.mxu0 %v1617
      %2483 = vmatpush1.bf16.msra.mxu0 %v1616
      %2484 = vmatprep.subr.bf16.mxu0 %v1625
      %2485 = vmatpush1.bf16.msra.mxu0 %v1624
      %2486 = vmatprep.subr.bf16.mxu0 %v1633
      %2487 = vmatpush1.bf16.msra.mxu0 %v1632
      %2488 = vmatprep.mubr.bf16.mxu0 %v425
      %2489 = vmatmul.mubr.bf16.gmra.mrb[0].mxu0 %v424
      %v2490 = vpop.f32.mrb[0].mxu0
      %v2491 = vadd.f32 %v725, %v2490
      %v2492 = vpop.f32.mrb[0].mxu0
      %v2493 = vadd.f32 %v729, %v2492
      %v2494 = vpop.f32.mrb[0].mxu0
      %v2495 = vadd.f32 %v725, %v2494
      %v2496 = vpop.f32.mrb[0].mxu0
      %v2497 = vadd.f32 %v729, %v2496
      %2498 = vmatprep.mubr.bf16.mxu0 %v429
      %2499 = vmatmul.mubr.bf16.gmra.mrb[0].mxu0 %v428
      %v2500 = vpop.f32.mrb[0].mxu0
      %v2501 = vadd.f32 %v725, %v2500
      %v2502 = vpop.f32.mrb[0].mxu0
      %v2503 = vadd.f32 %v729, %v2502
      %v2504 = vpop.f32.mrb[0].mxu0
      %v2505 = vadd.f32 %v725, %v2504
      %v2506 = vpop.f32.mrb[0].mxu0
      %v2507 = vadd.f32 %v729, %v2506
      %2508 = vmatprep.mubr.bf16.mxu0 %v433
      %2509 = vmatmul.mubr.bf16.gmra.mrb[0].mxu0 %v432
      %v2510 = vpop.f32.mrb[0].mxu0
      %v2511 = vadd.f32 %v725, %v2510
      %v2512 = vpop.f32.mrb[0].mxu0
      %v2513 = vadd.f32 %v729, %v2512
      %v2514 = vpop.f32.mrb[0].mxu0
      %v2515 = vadd.f32 %v725, %v2514
      %v2516 = vpop.f32.mrb[0].mxu0
      %v2517 = vadd.f32 %v729, %v2516
      %2518 = vmatprep.mubr.bf16.mxu0 %v437
      %2519 = vmatmul.mubr.bf16.gmra.mrb[0].mxu0 %v436
      %v2520 = vpop.f32.mrb[0].mxu0
      %v2521 = vadd.f32 %v725, %v2520
      %v2522 = vpop.f32.mrb[0].mxu0
      %v2523 = vadd.f32 %v729, %v2522
      %v2524 = vpop.f32.mrb[0].mxu0
      %v2525 = vadd.f32 %v725, %v2524
      %v2526 = vpop.f32.mrb[0].mxu0
      %v2527 = vadd.f32 %v729, %v2526
      %2528 = vdwg.mxu0
      %2529 = vmatprep.subr.bf16.mxu0 %v1641
      %2530 = vmatpush1.bf16.msra.mxu0 %v1640
      %2531 = vmatprep.subr.bf16.mxu0 %v1649
      %2532 = vmatpush1.bf16.msra.mxu0 %v1648
      %2533 = vmatprep.subr.bf16.mxu0 %v1657
      %2534 = vmatpush1.bf16.msra.mxu0 %v1656
      %2535 = vmatprep.subr.bf16.mxu0 %v1665
      %2536 = vmatpush1.bf16.msra.mxu0 %v1664
      %2537 = vmatprep.subr.bf16.mxu0 %v1673
      %2538 = vmatpush1.bf16.msra.mxu0 %v1672
      %2539 = vmatprep.subr.bf16.mxu0 %v1681
      %2540 = vmatpush1.bf16.msra.mxu0 %v1680
      %2541 = vmatprep.subr.bf16.mxu0 %v1689
      %2542 = vmatpush1.bf16.msra.mxu0 %v1688
      %2543 = vmatprep.subr.bf16.mxu0 %v1697
      %2544 = vmatpush1.bf16.msra.mxu0 %v1696
      %2545 = vmatprep.subr.bf16.mxu0 %v1705
      %2546 = vmatpush1.bf16.msra.mxu0 %v1704
      %2547 = vmatprep.subr.bf16.mxu0 %v1713
      %2548 = vmatpush1.bf16.msra.mxu0 %v1712
      %2549 = vmatprep.subr.bf16.mxu0 %v1721
      %2550 = vmatpush1.bf16.msra.mxu0 %v1720
      %2551 = vmatprep.subr.bf16.mxu0 %v1729
      %2552 = vmatpush1.bf16.msra.mxu0 %v1728
      %2553 = vmatprep.subr.bf16.mxu0 %v1737
      %2554 = vmatpush1.bf16.msra.mxu0 %v1736
      %2555 = vmatprep.subr.bf16.mxu0 %v1745
      %2556 = vmatpush1.bf16.msra.mxu0 %v1744
      %2557 = vmatprep.subr.bf16.mxu0 %v1753
      %2558 = vmatpush1.bf16.msra.mxu0 %v1752
      %2559 = vmatprep.subr.bf16.mxu0 %v1761
      %2560 = vmatpush1.bf16.msra.mxu0 %v1760
      %2561 = vmatprep.mubr.bf16.mxu0 %v427
      %2562 = vmatmul.mubr.bf16.gmra.mrb[0].mxu0 %v426
      %v2563 = vpop.f32.mrb[0].mxu0
      %v2564 = vadd.f32 %v2491, %v2563
      %v2565 = vpop.f32.mrb[0].mxu0
      %v2566 = vadd.f32 %v2493, %v2565
      %v2567 = vpop.f32.mrb[0].mxu0
      %v2568 = vadd.f32 %v2495, %v2567
      %v2569 = vpop.f32.mrb[0].mxu0
      %v2570 = vadd.f32 %v2497, %v2569
      %2571 = vmatprep.mubr.bf16.mxu0 %v431
      %2572 = vmatmul.mubr.bf16.gmra.mrb[0].mxu0 %v430
      %v2573 = vpop.f32.mrb[0].mxu0
      %v2574 = vadd.f32 %v2501, %v2573
      %v2575 = vpop.f32.mrb[0].mxu0
      %v2576 = vadd.f32 %v2503, %v2575
      %v2577 = vpop.f32.mrb[0].mxu0
      %v2578 = vadd.f32 %v2505, %v2577
      %v2579 = vpop.f32.mrb[0].mxu0
      %v2580 = vadd.f32 %v2507, %v2579
      %2581 = vmatprep.mubr.bf16.mxu0 %v435
      %2582 = vmatmul.mubr.bf16.gmra.mrb[0].mxu0 %v434
      %v2583 = vpop.f32.mrb[0].mxu0
      %v2584 = vadd.f32 %v2511, %v2583
      %v2585 = vpop.f32.mrb[0].mxu0
      %v2586 = vadd.f32 %v2513, %v2585
      %v2587 = vpop.f32.mrb[0].mxu0
      %v2588 = vadd.f32 %v2515, %v2587
      %v2589 = vpop.f32.mrb[0].mxu0
      %v2590 = vadd.f32 %v2517, %v2589
      %2591 = vmatprep.mubr.bf16.mxu0 %v439
      %2592 = vmatmul.mubr.bf16.gmra.mrb[0].mxu0 %v438
      %v2593 = vpop.f32.mrb[0].mxu0
      %v2594 = vadd.f32 %v2521, %v2593
      %v2595 = vpop.f32.mrb[0].mxu0
      %v2596 = vadd.f32 %v2523, %v2595
      %v2597 = vpop.f32.mrb[0].mxu0
      %v2598 = vadd.f32 %v2525, %v2597
      %v2599 = vpop.f32.mrb[0].mxu0
      %v2600 = vadd.f32 %v2527, %v2599
      %2601 = vdwg.mxu0
      %v2602 = vmax.f32 %v2126, 0.0
      %v2603 = vmax.f32 %v2128, 0.0
      %v2604 = vmax.f32 %v2272, 0.0
      %v2605 = vmax.f32 %v2274, 0.0
      %v2606 = vmax.f32 %v2418, 0.0
      %v2607 = vmax.f32 %v2420, 0.0
      %v2608 = vmax.f32 %v2564, 0.0
      %v2609 = vmax.f32 %v2566, 0.0
      %v2610 = vmax.f32 %v2130, 0.0
      %v2611 = vmax.f32 %v2132, 0.0
      %v2612 = vmax.f32 %v2276, 0.0
      %v2613 = vmax.f32 %v2278, 0.0
      %v2614 = vmax.f32 %v2422, 0.0
      %v2615 = vmax.f32 %v2424, 0.0
      %v2616 = vmax.f32 %v2568, 0.0
      %v2617 = vmax.f32 %v2570, 0.0
      %v2618 = vmax.f32 %v2136, 0.0
      %v2619 = vmax.f32 %v2138, 0.0
      %v2620 = vmax.f32 %v2282, 0.0
      %v2621 = vmax.f32 %v2284, 0.0
      %v2622 = vmax.f32 %v2428, 0.0
      %v2623 = vmax.f32 %v2430, 0.0
      %v2624 = vmax.f32 %v2574, 0.0
      %v2625 = vmax.f32 %v2576, 0.0
      %v2626 = vmax.f32 %v2140, 0.0
      %v2627 = vmax.f32 %v2142, 0.0
      %v2628 = vmax.f32 %v2286, 0.0
      %v2629 = vmax.f32 %v2288, 0.0
      %v2630 = vmax.f32 %v2432, 0.0
      %v2631 = vmax.f32 %v2434, 0.0
      %v2632 = vmax.f32 %v2578, 0.0
      %v2633 = vmax.f32 %v2580, 0.0
      %v2634 = vmax.f32 %v2146, 0.0
      %v2635 = vmax.f32 %v2148, 0.0
      %v2636 = vmax.f32 %v2292, 0.0
      %v2637 = vmax.f32 %v2294, 0.0
      %v2638 = vmax.f32 %v2438, 0.0
      %v2639 = vmax.f32 %v2440, 0.0
      %v2640 = vmax.f32 %v2584, 0.0
      %v2641 = vmax.f32 %v2586, 0.0
      %v2642 = vmax.f32 %v2150, 0.0
      %v2643 = vmax.f32 %v2152, 0.0
      %v2644 = vmax.f32 %v2296, 0.0
      %v2645 = vmax.f32 %v2298, 0.0
      %v2646 = vmax.f32 %v2442, 0.0
      %v2647 = vmax.f32 %v2444, 0.0
      %v2648 = vmax.f32 %v2588, 0.0
      %v2649 = vmax.f32 %v2590, 0.0
      %v2650 = vmax.f32 %v2156, 0.0
      %v2651 = vmax.f32 %v2158, 0.0
      %v2652 = vmax.f32 %v2302, 0.0
      %v2653 = vmax.f32 %v2304, 0.0
      %v2654 = vmax.f32 %v2448, 0.0
      %v2655 = vmax.f32 %v2450, 0.0
      %v2656 = vmax.f32 %v2594, 0.0
      %v2657 = vmax.f32 %v2596, 0.0
      %v2658 = vmax.f32 %v2160, 0.0
      %v2659 = vmax.f32 %v2162, 0.0
      %v2660 = vmax.f32 %v2306, 0.0
      %v2661 = vmax.f32 %v2308, 0.0
      %v2662 = vmax.f32 %v2452, 0.0
      %v2663 = vmax.f32 %v2454, 0.0
      %v2664 = vmax.f32 %v2598, 0.0
      %v2665 = vmax.f32 %v2600, 0.0
      %v2666 = vpack.c.bf16 %v2610, %v2602
      %v2667 = vpack.c.bf16 %v2611, %v2603
      %v2668 = vpack.c.bf16 %v2612, %v2604
      %v2669 = vpack.c.bf16 %v2613, %v2605
      %v2670 = vpack.c.bf16 %v2614, %v2606
      %v2671 = vpack.c.bf16 %v2615, %v2607
      %v2672 = vpack.c.bf16 %v2616, %v2608
      %v2673 = vpack.c.bf16 %v2617, %v2609
      %v2674 = vpack.c.bf16 %v2626, %v2618
      %v2675 = vpack.c.bf16 %v2627, %v2619
      %v2676 = vpack.c.bf16 %v2628, %v2620
      %v2677 = vpack.c.bf16 %v2629, %v2621
      %v2678 = vpack.c.bf16 %v2630, %v2622
      %v2679 = vpack.c.bf16 %v2631, %v2623
      %v2680 = vpack.c.bf16 %v2632, %v2624
      %v2681 = vpack.c.bf16 %v2633, %v2625
      %v2682 = vpack.c.bf16 %v2642, %v2634
      %v2683 = vpack.c.bf16 %v2643, %v2635
      %v2684 = vpack.c.bf16 %v2644, %v2636
      %v2685 = vpack.c.bf16 %v2645, %v2637
      %v2686 = vpack.c.bf16 %v2646, %v2638
      %v2687 = vpack.c.bf16 %v2647, %v2639
      %v2688 = vpack.c.bf16 %v2648, %v2640
      %v2689 = vpack.c.bf16 %v2649, %v2641
      %v2690 = vpack.c.bf16 %v2658, %v2650
      %v2691 = vpack.c.bf16 %v2659, %v2651
      %v2692 = vpack.c.bf16 %v2660, %v2652
      %v2693 = vpack.c.bf16 %v2661, %v2653
      %v2694 = vpack.c.bf16 %v2662, %v2654
      %v2695 = vpack.c.bf16 %v2663, %v2655
      %v2696 = vpack.c.bf16 %v2664, %v2656
      %v2697 = vpack.c.bf16 %v2665, %v2657
      %2698 = vst [vmem:[#allocation2] sm:$0xff] %v2666
      %2699 = vst [vmem:[#allocation2 + $0x8] sm:$0xff] %v2667
      %2700 = vst [vmem:[#allocation2 + $0x10] sm:$0xff] %v2668
      %2701 = vst [vmem:[#allocation2 + $0x18] sm:$0xff] %v2669
      %2702 = vst [vmem:[#allocation2 + $0x20] sm:$0xff] %v2670
      %2703 = vst [vmem:[#allocation2 + $0x28] sm:$0xff] %v2671
      %2704 = vst [vmem:[#allocation2 + $0x30] sm:$0xff] %v2672
      %2705 = vst [vmem:[#allocation2 + $0x38] sm:$0xff] %v2673
      %2706 = vst [vmem:[#allocation2 + $0x40] sm:$0xff] %v2674
      %2707 = vst [vmem:[#allocation2 + $0x48] sm:$0xff] %v2675
      %2708 = vst [vmem:[#allocation2 + $0x50] sm:$0xff] %v2676
      %2709 = vst [vmem:[#allocation2 + $0x58] sm:$0xff] %v2677
      %2710 = vst [vmem:[#allocation2 + $0x60] sm:$0xff] %v2678
      %2711 = vst [vmem:[#allocation2 + $0x68] sm:$0xff] %v2679
      %2712 = vst [vmem:[#allocation2 + $0x70] sm:$0xff] %v2680
      %2713 = vst [vmem:[#allocation2 + $0x78] sm:$0xff] %v2681
      %2714 = vst [vmem:[#allocation2 + $0x80] sm:$0xff] %v2682
      %2715 = vst [vmem:[#allocation2 + $0x88] sm:$0xff] %v2683
      %2716 = vst [vmem:[#allocation2 + $0x90] sm:$0xff] %v2684
      %2717 = vst [vmem:[#allocation2 + $0x98] sm:$0xff] %v2685
      %2718 = vst [vmem:[#allocation2 + $0xa0] sm:$0xff] %v2686
      %2719 = vst [vmem:[#allocation2 + $0xa8] sm:$0xff] %v2687
      %2720 = vst [vmem:[#allocation2 + $0xb0] sm:$0xff] %v2688
      %2721 = vst [vmem:[#allocation2 + $0xb8] sm:$0xff] %v2689
      %2722 = vst [vmem:[#allocation2 + $0xc0] sm:$0xff] %v2690
      %2723 = vst [vmem:[#allocation2 + $0xc8] sm:$0xff] %v2691
      %2724 = vst [vmem:[#allocation2 + $0xd0] sm:$0xff] %v2692
      %2725 = vst [vmem:[#allocation2 + $0xd8] sm:$0xff] %v2693
      %2726 = vst [vmem:[#allocation2 + $0xe0] sm:$0xff] %v2694
      %2727 = vst [vmem:[#allocation2 + $0xe8] sm:$0xff] %v2695
      %2728 = vst [vmem:[#allocation2 + $0xf0] sm:$0xff] %v2696
      %2729 = vst [vmem:[#allocation2 + $0xf8] sm:$0xff] %v2697
    $region49: #{tpu_custom_call.1} parent=1 // pred_fallthru
      _
    %v2730 = vld [vmem:[#allocation2] sm:$0xff]
    %v2731 = vld [vmem:[#allocation2 + $0x8] sm:$0xff]
    %v2732 = vld [vmem:[#allocation2 + $0x10] sm:$0xff]
    %v2733 = vld [vmem:[#allocation2 + $0x18] sm:$0xff]
    %v2734 = vld [vmem:[#allocation2 + $0x20] sm:$0xff]
    %v2735 = vld [vmem:[#allocation2 + $0x28] sm:$0xff]
    %v2736 = vld [vmem:[#allocation2 + $0x30] sm:$0xff]
    %v2737 = vld [vmem:[#allocation2 + $0x38] sm:$0xff]
    %v2738 = vld [vmem:[#allocation2 + $0x40] sm:$0xff]
    %v2739 = vld [vmem:[#allocation2 + $0x48] sm:$0xff]
    %v2740 = vld [vmem:[#allocation2 + $0x50] sm:$0xff]
    %v2741 = vld [vmem:[#allocation2 + $0x58] sm:$0xff]
    %v2742 = vld [vmem:[#allocation2 + $0x60] sm:$0xff]
    %v2743 = vld [vmem:[#allocation2 + $0x68] sm:$0xff]
    %v2744 = vld [vmem:[#allocation2 + $0x70] sm:$0xff]
    %v2745 = vld [vmem:[#allocation2 + $0x78] sm:$0xff]
    %v2746 = vld [vmem:[#allocation2 + $0x80] sm:$0xff]
    %v2747 = vld [vmem:[#allocation2 + $0x88] sm:$0xff]
    %v2748 = vld [vmem:[#allocation2 + $0x90] sm:$0xff]
    %v2749 = vld [vmem:[#allocation2 + $0x98] sm:$0xff]
    %v2750 = vld [vmem:[#allocation2 + $0xa0] sm:$0xff]
    %v2751 = vld [vmem:[#allocation2 + $0xa8] sm:$0xff]
    %v2752 = vld [vmem:[#allocation2 + $0xb0] sm:$0xff]
    %v2753 = vld [vmem:[#allocation2 + $0xb8] sm:$0xff]
    %v2754 = vld [vmem:[#allocation2 + $0xc0] sm:$0xff]
    %v2755 = vld [vmem:[#allocation2 + $0xc8] sm:$0xff]
    %v2756 = vld [vmem:[#allocation2 + $0xd0] sm:$0xff]
    %v2757 = vld [vmem:[#allocation2 + $0xd8] sm:$0xff]
    %v2758 = vld [vmem:[#allocation2 + $0xe0] sm:$0xff]
    %v2759 = vld [vmem:[#allocation2 + $0xe8] sm:$0xff]
    %v2760 = vld [vmem:[#allocation2 + $0xf0] sm:$0xff]
    %v2761 = vld [vmem:[#allocation2 + $0xf8] sm:$0xff]
    %v2762 = vld [vmem:[#allocation9] sm:$0xff]
    %v2763 = vld [vmem:[#allocation9 + $0x8] sm:$0xff]
    %v2764 = vld [vmem:[#allocation9 + $0x10] sm:$0xff]
    %v2765 = vld [vmem:[#allocation9 + $0x18] sm:$0xff]
    %v2766 = vld [vmem:[#allocation9 + $0x20] sm:$0xff]
    %v2767 = vld [vmem:[#allocation9 + $0x28] sm:$0xff]
    %v2768 = vld [vmem:[#allocation9 + $0x30] sm:$0xff]
    %v2769 = vld [vmem:[#allocation9 + $0x38] sm:$0xff]
    %v2770 = vld [vmem:[#allocation9 + $0x40] sm:$0xff]
    %v2771 = vld [vmem:[#allocation9 + $0x48] sm:$0xff]
    %v2772 = vld [vmem:[#allocation9 + $0x50] sm:$0xff]
    %v2773 = vld [vmem:[#allocation9 + $0x58] sm:$0xff]
    %v2774 = vld [vmem:[#allocation9 + $0x60] sm:$0xff]
    %v2775 = vld [vmem:[#allocation9 + $0x68] sm:$0xff]
    %v2776 = vld [vmem:[#allocation9 + $0x70] sm:$0xff]
    %v2777 = vld [vmem:[#allocation9 + $0x78] sm:$0xff]
    %v2778 = vld [vmem:[#allocation9 + $0x80] sm:$0xff]
    %v2779 = vld [vmem:[#allocation9 + $0x88] sm:$0xff]
    %v2780 = vld [vmem:[#allocation9 + $0x90] sm:$0xff]
    %v2781 = vld [vmem:[#allocation9 + $0x98] sm:$0xff]
    %v2782 = vld [vmem:[#allocation9 + $0xa0] sm:$0xff]
    %v2783 = vld [vmem:[#allocation9 + $0xa8] sm:$0xff]
    %v2784 = vld [vmem:[#allocation9 + $0xb0] sm:$0xff]
    %v2785 = vld [vmem:[#allocation9 + $0xb8] sm:$0xff]
    %v2786 = vld [vmem:[#allocation9 + $0xc0] sm:$0xff]
    %v2787 = vld [vmem:[#allocation9 + $0xc8] sm:$0xff]
    %v2788 = vld [vmem:[#allocation9 + $0xd0] sm:$0xff]
    %v2789 = vld [vmem:[#allocation9 + $0xd8] sm:$0xff]
    %v2790 = vld [vmem:[#allocation9 + $0xe0] sm:$0xff]
    %v2791 = vld [vmem:[#allocation9 + $0xe8] sm:$0xff]
    %v2792 = vld [vmem:[#allocation9 + $0xf0] sm:$0xff]
    %v2793 = vld [vmem:[#allocation9 + $0xf8] sm:$0xff]
    %v2794 = vld [vmem:[#allocation9 + $0x100] sm:$0xff]
    %v2795 = vld [vmem:[#allocation9 + $0x108] sm:$0xff]
    %v2796 = vld [vmem:[#allocation9 + $0x110] sm:$0xff]
    %v2797 = vld [vmem:[#allocation9 + $0x118] sm:$0xff]
    %v2798 = vld [vmem:[#allocation9 + $0x120] sm:$0xff]
    %v2799 = vld [vmem:[#allocation9 + $0x128] sm:$0xff]
    %v2800 = vld [vmem:[#allocation9 + $0x130] sm:$0xff]
    %v2801 = vld [vmem:[#allocation9 + $0x138] sm:$0xff]
    %v2802 = vld [vmem:[#allocation9 + $0x140] sm:$0xff]
    %v2803 = vld [vmem:[#allocation9 + $0x148] sm:$0xff]
    %v2804 = vld [vmem:[#allocation9 + $0x150] sm:$0xff]
    %v2805 = vld [vmem:[#allocation9 + $0x158] sm:$0xff]
    %v2806 = vld [vmem:[#allocation9 + $0x160] sm:$0xff]
    %v2807 = vld [vmem:[#allocation9 + $0x168] sm:$0xff]
    %v2808 = vld [vmem:[#allocation9 + $0x170] sm:$0xff]
    %v2809 = vld [vmem:[#allocation9 + $0x178] sm:$0xff]
    %v2810 = vld [vmem:[#allocation9 + $0x180] sm:$0xff]
    %v2811 = vld [vmem:[#allocation9 + $0x188] sm:$0xff]
    %v2812 = vld [vmem:[#allocation9 + $0x190] sm:$0xff]
    %v2813 = vld [vmem:[#allocation9 + $0x198] sm:$0xff]
    %v2814 = vld [vmem:[#allocation9 + $0x1a0] sm:$0xff]
    %v2815 = vld [vmem:[#allocation9 + $0x1a8] sm:$0xff]
    %v2816 = vld [vmem:[#allocation9 + $0x1b0] sm:$0xff]
    %v2817 = vld [vmem:[#allocation9 + $0x1b8] sm:$0xff]
    %v2818 = vld [vmem:[#allocation9 + $0x1c0] sm:$0xff]
    %v2819 = vld [vmem:[#allocation9 + $0x1c8] sm:$0xff]
    %v2820 = vld [vmem:[#allocation9 + $0x1d0] sm:$0xff]
    %v2821 = vld [vmem:[#allocation9 + $0x1d8] sm:$0xff]
    %v2822 = vld [vmem:[#allocation9 + $0x1e0] sm:$0xff]
    %v2823 = vld [vmem:[#allocation9 + $0x1e8] sm:$0xff]
    %v2824 = vld [vmem:[#allocation9 + $0x1f0] sm:$0xff]
    %v2825 = vld [vmem:[#allocation9 + $0x1f8] sm:$0xff]
    %v2826 = vld [vmem:[#allocation9 + $0x200] sm:$0xff]
    %v2827 = vld [vmem:[#allocation9 + $0x208] sm:$0xff]
    %v2828 = vld [vmem:[#allocation9 + $0x210] sm:$0xff]
    %v2829 = vld [vmem:[#allocation9 + $0x218] sm:$0xff]
    %v2830 = vld [vmem:[#allocation9 + $0x220] sm:$0xff]
    %v2831 = vld [vmem:[#allocation9 + $0x228] sm:$0xff]
    %v2832 = vld [vmem:[#allocation9 + $0x230] sm:$0xff]
    %v2833 = vld [vmem:[#allocation9 + $0x238] sm:$0xff]
    %v2834 = vld [vmem:[#allocation9 + $0x240] sm:$0xff]
    %v2835 = vld [vmem:[#allocation9 + $0x248] sm:$0xff]
    %v2836 = vld [vmem:[#allocation9 + $0x250] sm:$0xff]
    %v2837 = vld [vmem:[#allocation9 + $0x258] sm:$0xff]
    %v2838 = vld [vmem:[#allocation9 + $0x260] sm:$0xff]
    %v2839 = vld [vmem:[#allocation9 + $0x268] sm:$0xff]
    %v2840 = vld [vmem:[#allocation9 + $0x270] sm:$0xff]
    %v2841 = vld [vmem:[#allocation9 + $0x278] sm:$0xff]
    %v2842 = vld [vmem:[#allocation9 + $0x280] sm:$0xff]
    %v2843 = vld [vmem:[#allocation9 + $0x288] sm:$0xff]
    %v2844 = vld [vmem:[#allocation9 + $0x290] sm:$0xff]
    %v2845 = vld [vmem:[#allocation9 + $0x298] sm:$0xff]
    %v2846 = vld [vmem:[#allocation9 + $0x2a0] sm:$0xff]
    %v2847 = vld [vmem:[#allocation9 + $0x2a8] sm:$0xff]
    %v2848 = vld [vmem:[#allocation9 + $0x2b0] sm:$0xff]
    %v2849 = vld [vmem:[#allocation9 + $0x2b8] sm:$0xff]
    %v2850 = vld [vmem:[#allocation9 + $0x2c0] sm:$0xff]
    %v2851 = vld [vmem:[#allocation9 + $0x2c8] sm:$0xff]
    %v2852 = vld [vmem:[#allocation9 + $0x2d0] sm:$0xff]
    %v2853 = vld [vmem:[#allocation9 + $0x2d8] sm:$0xff]
    %v2854 = vld [vmem:[#allocation9 + $0x2e0] sm:$0xff]
    %v2855 = vld [vmem:[#allocation9 + $0x2e8] sm:$0xff]
    %v2856 = vld [vmem:[#allocation9 + $0x2f0] sm:$0xff]
    %v2857 = vld [vmem:[#allocation9 + $0x2f8] sm:$0xff]
    %v2858 = vld [vmem:[#allocation9 + $0x300] sm:$0xff]
    %v2859 = vld [vmem:[#allocation9 + $0x308] sm:$0xff]
    %v2860 = vld [vmem:[#allocation9 + $0x310] sm:$0xff]
    %v2861 = vld [vmem:[#allocation9 + $0x318] sm:$0xff]
    %v2862 = vld [vmem:[#allocation9 + $0x320] sm:$0xff]
    %v2863 = vld [vmem:[#allocation9 + $0x328] sm:$0xff]
    %v2864 = vld [vmem:[#allocation9 + $0x330] sm:$0xff]
    %v2865 = vld [vmem:[#allocation9 + $0x338] sm:$0xff]
    %v2866 = vld [vmem:[#allocation9 + $0x340] sm:$0xff]
    %v2867 = vld [vmem:[#allocation9 + $0x348] sm:$0xff]
    %v2868 = vld [vmem:[#allocation9 + $0x350] sm:$0xff]
    %v2869 = vld [vmem:[#allocation9 + $0x358] sm:$0xff]
    %v2870 = vld [vmem:[#allocation9 + $0x360] sm:$0xff]
    %v2871 = vld [vmem:[#allocation9 + $0x368] sm:$0xff]
    %v2872 = vld [vmem:[#allocation9 + $0x370] sm:$0xff]
    %v2873 = vld [vmem:[#allocation9 + $0x378] sm:$0xff]
    %v2874 = vld [vmem:[#allocation9 + $0x380] sm:$0xff]
    %v2875 = vld [vmem:[#allocation9 + $0x388] sm:$0xff]
    %v2876 = vld [vmem:[#allocation9 + $0x390] sm:$0xff]
    %v2877 = vld [vmem:[#allocation9 + $0x398] sm:$0xff]
    %v2878 = vld [vmem:[#allocation9 + $0x3a0] sm:$0xff]
    %v2879 = vld [vmem:[#allocation9 + $0x3a8] sm:$0xff]
    %v2880 = vld [vmem:[#allocation9 + $0x3b0] sm:$0xff]
    %v2881 = vld [vmem:[#allocation9 + $0x3b8] sm:$0xff]
    %v2882 = vld [vmem:[#allocation9 + $0x3c0] sm:$0xff]
    %v2883 = vld [vmem:[#allocation9 + $0x3c8] sm:$0xff]
    %v2884 = vld [vmem:[#allocation9 + $0x3d0] sm:$0xff]
    %v2885 = vld [vmem:[#allocation9 + $0x3d8] sm:$0xff]
    %v2886 = vld [vmem:[#allocation9 + $0x3e0] sm:$0xff]
    %v2887 = vld [vmem:[#allocation9 + $0x3e8] sm:$0xff]
    %v2888 = vld [vmem:[#allocation9 + $0x3f0] sm:$0xff]
    %v2889 = vld [vmem:[#allocation9 + $0x3f8] sm:$0xff]
    %v2890 = vld [vmem:[%s6] sm:$0x3]
    %v2892 = vlaneseq
    %v2893 = vshrl.u32 %v2892, 7
    %v2894 = vsub.s32 0, %v2893
    %v2895 = vrot.slane %v2890, %v2894
    %v2896 = vlaneseq
    %v2897 = vshrl.u32 %v2896, 7
    %v2898 = vsub.s32 1, %v2897
    %v2899 = vrot.slane %v2890, %v2898
    %v3030 = vunpack.c.l.b16 %v2762
    %v3031 = vunpack.c.h.b16 %v2762
    %v3032 = vunpack.c.l.b16 %v2763
    %v3033 = vunpack.c.h.b16 %v2763
    %v3034 = vunpack.c.l.b16 %v2764
    %v3035 = vunpack.c.h.b16 %v2764
    %v3036 = vunpack.c.l.b16 %v2765
    %v3037 = vunpack.c.h.b16 %v2765
    %v3038 = vunpack.c.l.b16 %v2766
    %v3039 = vunpack.c.h.b16 %v2766
    %v3040 = vunpack.c.l.b16 %v2767
    %v3041 = vunpack.c.h.b16 %v2767
    %v3042 = vunpack.c.l.b16 %v2768
    %v3043 = vunpack.c.h.b16 %v2768
    %v3044 = vunpack.c.l.b16 %v2769
    %v3045 = vunpack.c.h.b16 %v2769
    %v3046 = vunpack.c.l.b16 %v2770
    %v3047 = vunpack.c.h.b16 %v2770
    %v3048 = vunpack.c.l.b16 %v2771
    %v3049 = vunpack.c.h.b16 %v2771
    %v3050 = vunpack.c.l.b16 %v2772
    %v3051 = vunpack.c.h.b16 %v2772
    %v3052 = vunpack.c.l.b16 %v2773
    %v3053 = vunpack.c.h.b16 %v2773
    %v3054 = vunpack.c.l.b16 %v2774
    %v3055 = vunpack.c.h.b16 %v2774
    %v3056 = vunpack.c.l.b16 %v2775
    %v3057 = vunpack.c.h.b16 %v2775
    %v3058 = vunpack.c.l.b16 %v2776
    %v3059 = vunpack.c.h.b16 %v2776
    %v3060 = vunpack.c.l.b16 %v2777
    %v3061 = vunpack.c.h.b16 %v2777
    %v3062 = vunpack.c.l.b16 %v2778
    %v3063 = vunpack.c.h.b16 %v2778
    %v3064 = vunpack.c.l.b16 %v2779
    %v3065 = vunpack.c.h.b16 %v2779
    %v3066 = vunpack.c.l.b16 %v2780
    %v3067 = vunpack.c.h.b16 %v2780
    %v3068 = vunpack.c.l.b16 %v2781
    %v3069 = vunpack.c.h.b16 %v2781
    %v3070 = vunpack.c.l.b16 %v2782
    %v3071 = vunpack.c.h.b16 %v2782
    %v3072 = vunpack.c.l.b16 %v2783
    %v3073 = vunpack.c.h.b16 %v2783
    %v3074 = vunpack.c.l.b16 %v2784
    %v3075 = vunpack.c.h.b16 %v2784
    %v3076 = vunpack.c.l.b16 %v2785
    %v3077 = vunpack.c.h.b16 %v2785
    %v3078 = vunpack.c.l.b16 %v2786
    %v3079 = vunpack.c.h.b16 %v2786
    %v3080 = vunpack.c.l.b16 %v2787
    %v3081 = vunpack.c.h.b16 %v2787
    %v3082 = vunpack.c.l.b16 %v2788
    %v3083 = vunpack.c.h.b16 %v2788
    %v3084 = vunpack.c.l.b16 %v2789
    %v3085 = vunpack.c.h.b16 %v2789
    %v3086 = vunpack.c.l.b16 %v2790
    %v3087 = vunpack.c.h.b16 %v2790
    %v3088 = vunpack.c.l.b16 %v2791
    %v3089 = vunpack.c.h.b16 %v2791
    %v3090 = vunpack.c.l.b16 %v2792
    %v3091 = vunpack.c.h.b16 %v2792
    %v3092 = vunpack.c.l.b16 %v2793
    %v3093 = vunpack.c.h.b16 %v2793
    %v3094 = vunpack.c.l.b16 %v2794
    %v3095 = vunpack.c.h.b16 %v2794
    %v3096 = vunpack.c.l.b16 %v2795
    %v3097 = vunpack.c.h.b16 %v2795
    %v3098 = vunpack.c.l.b16 %v2796
    %v3099 = vunpack.c.h.b16 %v2796
    %v3100 = vunpack.c.l.b16 %v2797
    %v3101 = vunpack.c.h.b16 %v2797
    %v3102 = vunpack.c.l.b16 %v2798
    %v3103 = vunpack.c.h.b16 %v2798
    %v3104 = vunpack.c.l.b16 %v2799
    %v3105 = vunpack.c.h.b16 %v2799
    %v3106 = vunpack.c.l.b16 %v2800
    %v3107 = vunpack.c.h.b16 %v2800
    %v3108 = vunpack.c.l.b16 %v2801
    %v3109 = vunpack.c.h.b16 %v2801
    %v3110 = vunpack.c.l.b16 %v2802
    %v3111 = vunpack.c.h.b16 %v2802
    %v3112 = vunpack.c.l.b16 %v2803
    %v3113 = vunpack.c.h.b16 %v2803
    %v3114 = vunpack.c.l.b16 %v2804
    %v3115 = vunpack.c.h.b16 %v2804
    %v3116 = vunpack.c.l.b16 %v2805
    %v3117 = vunpack.c.h.b16 %v2805
    %v3118 = vunpack.c.l.b16 %v2806
    %v3119 = vunpack.c.h.b16 %v2806
    %v3120 = vunpack.c.l.b16 %v2807
    %v3121 = vunpack.c.h.b16 %v2807
    %v3122 = vunpack.c.l.b16 %v2808
    %v3123 = vunpack.c.h.b16 %v2808
    %v3124 = vunpack.c.l.b16 %v2809
    %v3125 = vunpack.c.h.b16 %v2809
    %v3126 = vunpack.c.l.b16 %v2810
    %v3127 = vunpack.c.h.b16 %v2810
    %v3128 = vunpack.c.l.b16 %v2811
    %v3129 = vunpack.c.h.b16 %v2811
    %v3130 = vunpack.c.l.b16 %v2812
    %v3131 = vunpack.c.h.b16 %v2812
    %v3132 = vunpack.c.l.b16 %v2813
    %v3133 = vunpack.c.h.b16 %v2813
    %v3134 = vunpack.c.l.b16 %v2814
    %v3135 = vunpack.c.h.b16 %v2814
    %v3136 = vunpack.c.l.b16 %v2815
    %v3137 = vunpack.c.h.b16 %v2815
    %v3138 = vunpack.c.l.b16 %v2816
    %v3139 = vunpack.c.h.b16 %v2816
    %v3140 = vunpack.c.l.b16 %v2817
    %v3141 = vunpack.c.h.b16 %v2817
    %v3142 = vunpack.c.l.b16 %v2818
    %v3143 = vunpack.c.h.b16 %v2818
    %v3144 = vunpack.c.l.b16 %v2819
    %v3145 = vunpack.c.h.b16 %v2819
    %v3146 = vunpack.c.l.b16 %v2820
    %v3147 = vunpack.c.h.b16 %v2820
    %v3148 = vunpack.c.l.b16 %v2821
    %v3149 = vunpack.c.h.b16 %v2821
    %v3150 = vunpack.c.l.b16 %v2822
    %v3151 = vunpack.c.h.b16 %v2822
    %v3152 = vunpack.c.l.b16 %v2823
    %v3153 = vunpack.c.h.b16 %v2823
    %v3154 = vunpack.c.l.b16 %v2824
    %v3155 = vunpack.c.h.b16 %v2824
    %v3156 = vunpack.c.l.b16 %v2825
    %v3157 = vunpack.c.h.b16 %v2825
    %v3158 = vunpack.c.l.b16 %v2826
    %v3159 = vunpack.c.h.b16 %v2826
    %v3160 = vunpack.c.l.b16 %v2827
    %v3161 = vunpack.c.h.b16 %v2827
    %v3162 = vunpack.c.l.b16 %v2828
    %v3163 = vunpack.c.h.b16 %v2828
    %v3164 = vunpack.c.l.b16 %v2829
    %v3165 = vunpack.c.h.b16 %v2829
    %v3166 = vunpack.c.l.b16 %v2830
    %v3167 = vunpack.c.h.b16 %v2830
    %v3168 = vunpack.c.l.b16 %v2831
    %v3169 = vunpack.c.h.b16 %v2831
    %v3170 = vunpack.c.l.b16 %v2832
    %v3171 = vunpack.c.h.b16 %v2832
    %v3172 = vunpack.c.l.b16 %v2833
    %v3173 = vunpack.c.h.b16 %v2833
    %v3174 = vunpack.c.l.b16 %v2834
    %v3175 = vunpack.c.h.b16 %v2834
    %v3176 = vunpack.c.l.b16 %v2835
    %v3177 = vunpack.c.h.b16 %v2835
    %v3178 = vunpack.c.l.b16 %v2836
    %v3179 = vunpack.c.h.b16 %v2836
    %v3180 = vunpack.c.l.b16 %v2837
    %v3181 = vunpack.c.h.b16 %v2837
    %v3182 = vunpack.c.l.b16 %v2838
    %v3183 = vunpack.c.h.b16 %v2838
    %v3184 = vunpack.c.l.b16 %v2839
    %v3185 = vunpack.c.h.b16 %v2839
    %v3186 = vunpack.c.l.b16 %v2840
    %v3187 = vunpack.c.h.b16 %v2840
    %v3188 = vunpack.c.l.b16 %v2841
    %v3189 = vunpack.c.h.b16 %v2841
    %v3190 = vunpack.c.l.b16 %v2842
    %v3191 = vunpack.c.h.b16 %v2842
    %v3192 = vunpack.c.l.b16 %v2843
    %v3193 = vunpack.c.h.b16 %v2843
    %v3194 = vunpack.c.l.b16 %v2844
    %v3195 = vunpack.c.h.b16 %v2844
    %v3196 = vunpack.c.l.b16 %v2845
    %v3197 = vunpack.c.h.b16 %v2845
    %v3198 = vunpack.c.l.b16 %v2846
    %v3199 = vunpack.c.h.b16 %v2846
    %v3200 = vunpack.c.l.b16 %v2847
    %v3201 = vunpack.c.h.b16 %v2847
    %v3202 = vunpack.c.l.b16 %v2848
    %v3203 = vunpack.c.h.b16 %v2848
    %v3204 = vunpack.c.l.b16 %v2849
    %v3205 = vunpack.c.h.b16 %v2849
    %v3206 = vunpack.c.l.b16 %v2850
    %v3207 = vunpack.c.h.b16 %v2850
    %v3208 = vunpack.c.l.b16 %v2851
    %v3209 = vunpack.c.h.b16 %v2851
    %v3210 = vunpack.c.l.b16 %v2852
    %v3211 = vunpack.c.h.b16 %v2852
    %v3212 = vunpack.c.l.b16 %v2853
    %v3213 = vunpack.c.h.b16 %v2853
    %v3214 = vunpack.c.l.b16 %v2854
    %v3215 = vunpack.c.h.b16 %v2854
    %v3216 = vunpack.c.l.b16 %v2855
    %v3217 = vunpack.c.h.b16 %v2855
    %v3218 = vunpack.c.l.b16 %v2856
    %v3219 = vunpack.c.h.b16 %v2856
    %v3220 = vunpack.c.l.b16 %v2857
    %v3221 = vunpack.c.h.b16 %v2857
    %v3222 = vunpack.c.l.b16 %v2858
    %v3223 = vunpack.c.h.b16 %v2858
    %v3224 = vunpack.c.l.b16 %v2859
    %v3225 = vunpack.c.h.b16 %v2859
    %v3226 = vunpack.c.l.b16 %v2860
    %v3227 = vunpack.c.h.b16 %v2860
    %v3228 = vunpack.c.l.b16 %v2861
    %v3229 = vunpack.c.h.b16 %v2861
    %v3230 = vunpack.c.l.b16 %v2862
    %v3231 = vunpack.c.h.b16 %v2862
    %v3232 = vunpack.c.l.b16 %v2863
    %v3233 = vunpack.c.h.b16 %v2863
    %v3234 = vunpack.c.l.b16 %v2864
    %v3235 = vunpack.c.h.b16 %v2864
    %v3236 = vunpack.c.l.b16 %v2865
    %v3237 = vunpack.c.h.b16 %v2865
    %v3238 = vunpack.c.l.b16 %v2866
    %v3239 = vunpack.c.h.b16 %v2866
    %v3240 = vunpack.c.l.b16 %v2867
    %v3241 = vunpack.c.h.b16 %v2867
    %v3242 = vunpack.c.l.b16 %v2868
    %v3243 = vunpack.c.h.b16 %v2868
    %v3244 = vunpack.c.l.b16 %v2869
    %v3245 = vunpack.c.h.b16 %v2869
    %v3246 = vunpack.c.l.b16 %v2870
    %v3247 = vunpack.c.h.b16 %v2870
    %v3248 = vunpack.c.l.b16 %v2871
    %v3249 = vunpack.c.h.b16 %v2871
    %v3250 = vunpack.c.l.b16 %v2872
    %v3251 = vunpack.c.h.b16 %v2872
    %v3252 = vunpack.c.l.b16 %v2873
    %v3253 = vunpack.c.h.b16 %v2873
    %v3254 = vunpack.c.l.b16 %v2874
    %v3255 = vunpack.c.h.b16 %v2874
    %v3256 = vunpack.c.l.b16 %v2875
    %v3257 = vunpack.c.h.b16 %v2875
    %v3258 = vunpack.c.l.b16 %v2876
    %v3259 = vunpack.c.h.b16 %v2876
    %v3260 = vunpack.c.l.b16 %v2877
    %v3261 = vunpack.c.h.b16 %v2877
    %v3262 = vunpack.c.l.b16 %v2878
    %v3263 = vunpack.c.h.b16 %v2878
    %v3264 = vunpack.c.l.b16 %v2879
    %v3265 = vunpack.c.h.b16 %v2879
    %v3266 = vunpack.c.l.b16 %v2880
    %v3267 = vunpack.c.h.b16 %v2880
    %v3268 = vunpack.c.l.b16 %v2881
    %v3269 = vunpack.c.h.b16 %v2881
    %v3270 = vunpack.c.l.b16 %v2882
    %v3271 = vunpack.c.h.b16 %v2882
    %v3272 = vunpack.c.l.b16 %v2883
    %v3273 = vunpack.c.h.b16 %v2883
    %v3274 = vunpack.c.l.b16 %v2884
    %v3275 = vunpack.c.h.b16 %v2884
    %v3276 = vunpack.c.l.b16 %v2885
    %v3277 = vunpack.c.h.b16 %v2885
    %v3278 = vunpack.c.l.b16 %v2886
    %v3279 = vunpack.c.h.b16 %v2886
    %v3280 = vunpack.c.l.b16 %v2887
    %v3281 = vunpack.c.h.b16 %v2887
    %v3282 = vunpack.c.l.b16 %v2888
    %v3283 = vunpack.c.h.b16 %v2888
    %v3284 = vunpack.c.l.b16 %v2889
    %v3285 = vunpack.c.h.b16 %v2889
    %v3286 = vpack.c.b16 %v3032, %v3030
    %v3287 = vpack.c.b16 %v3033, %v3031
    %v3288 = vpack.c.b16 %v3036, %v3034
    %v3289 = vpack.c.b16 %v3037, %v3035
    %v3290 = vpack.c.b16 %v3040, %v3038
    %v3291 = vpack.c.b16 %v3041, %v3039
    %v3292 = vpack.c.b16 %v3044, %v3042
    %v3293 = vpack.c.b16 %v3045, %v3043
    %v3294 = vpack.c.b16 %v3048, %v3046
    %v3295 = vpack.c.b16 %v3049, %v3047
    %v3296 = vpack.c.b16 %v3052, %v3050
    %v3297 = vpack.c.b16 %v3053, %v3051
    %v3298 = vpack.c.b16 %v3056, %v3054
    %v3299 = vpack.c.b16 %v3057, %v3055
    %v3300 = vpack.c.b16 %v3060, %v3058
    %v3301 = vpack.c.b16 %v3061, %v3059
    %v3302 = vpack.c.b16 %v3064, %v3062
    %v3303 = vpack.c.b16 %v3065, %v3063
    %v3304 = vpack.c.b16 %v3068, %v3066
    %v3305 = vpack.c.b16 %v3069, %v3067
    %v3306 = vpack.c.b16 %v3072, %v3070
    %v3307 = vpack.c.b16 %v3073, %v3071
    %v3308 = vpack.c.b16 %v3076, %v3074
    %v3309 = vpack.c.b16 %v3077, %v3075
    %v3310 = vpack.c.b16 %v3080, %v3078
    %v3311 = vpack.c.b16 %v3081, %v3079
    %v3312 = vpack.c.b16 %v3084, %v3082
    %v3313 = vpack.c.b16 %v3085, %v3083
    %v3314 = vpack.c.b16 %v3088, %v3086
    %v3315 = vpack.c.b16 %v3089, %v3087
    %v3316 = vpack.c.b16 %v3092, %v3090
    %v3317 = vpack.c.b16 %v3093, %v3091
    %v3318 = vpack.c.b16 %v3096, %v3094
    %v3319 = vpack.c.b16 %v3097, %v3095
    %v3320 = vpack.c.b16 %v3100, %v3098
    %v3321 = vpack.c.b16 %v3101, %v3099
    %v3322 = vpack.c.b16 %v3104, %v3102
    %v3323 = vpack.c.b16 %v3105, %v3103
    %v3324 = vpack.c.b16 %v3108, %v3106
    %v3325 = vpack.c.b16 %v3109, %v3107
    %v3326 = vpack.c.b16 %v3112, %v3110
    %v3327 = vpack.c.b16 %v3113, %v3111
    %v3328 = vpack.c.b16 %v3116, %v3114
    %v3329 = vpack.c.b16 %v3117, %v3115
    %v3330 = vpack.c.b16 %v3120, %v3118
    %v3331 = vpack.c.b16 %v3121, %v3119
    %v3332 = vpack.c.b16 %v3124, %v3122
    %v3333 = vpack.c.b16 %v3125, %v3123
    %v3334 = vpack.c.b16 %v3128, %v3126
    %v3335 = vpack.c.b16 %v3129, %v3127
    %v3336 = vpack.c.b16 %v3132, %v3130
    %v3337 = vpack.c.b16 %v3133, %v3131
    %v3338 = vpack.c.b16 %v3136, %v3134
    %v3339 = vpack.c.b16 %v3137, %v3135
    %v3340 = vpack.c.b16 %v3140, %v3138
    %v3341 = vpack.c.b16 %v3141, %v3139
    %v3342 = vpack.c.b16 %v3144, %v3142
    %v3343 = vpack.c.b16 %v3145, %v3143
    %v3344 = vpack.c.b16 %v3148, %v3146
    %v3345 = vpack.c.b16 %v3149, %v3147
    %v3346 = vpack.c.b16 %v3152, %v3150
    %v3347 = vpack.c.b16 %v3153, %v3151
    %v3348 = vpack.c.b16 %v3156, %v3154
    %v3349 = vpack.c.b16 %v3157, %v3155
    %v3350 = vpack.c.b16 %v3160, %v3158
    %v3351 = vpack.c.b16 %v3161, %v3159
    %v3352 = vpack.c.b16 %v3164, %v3162
    %v3353 = vpack.c.b16 %v3165, %v3163
    %v3354 = vpack.c.b16 %v3168, %v3166
    %v3355 = vpack.c.b16 %v3169, %v3167
    %v3356 = vpack.c.b16 %v3172, %v3170
    %v3357 = vpack.c.b16 %v3173, %v3171
    %v3358 = vpack.c.b16 %v3176, %v3174
    %v3359 = vpack.c.b16 %v3177, %v3175
    %v3360 = vpack.c.b16 %v3180, %v3178
    %v3361 = vpack.c.b16 %v3181, %v3179
    %v3362 = vpack.c.b16 %v3184, %v3182
    %v3363 = vpack.c.b16 %v3185, %v3183
    %v3364 = vpack.c.b16 %v3188, %v3186
    %v3365 = vpack.c.b16 %v3189, %v3187
    %v3366 = vpack.c.b16 %v3192, %v3190
    %v3367 = vpack.c.b16 %v3193, %v3191
    %v3368 = vpack.c.b16 %v3196, %v3194
    %v3369 = vpack.c.b16 %v3197, %v3195
    %v3370 = vpack.c.b16 %v3200, %v3198
    %v3371 = vpack.c.b16 %v3201, %v3199
    %v3372 = vpack.c.b16 %v3204, %v3202
    %v3373 = vpack.c.b16 %v3205, %v3203
    %v3374 = vpack.c.b16 %v3208, %v3206
    %v3375 = vpack.c.b16 %v3209, %v3207
    %v3376 = vpack.c.b16 %v3212, %v3210
    %v3377 = vpack.c.b16 %v3213, %v3211
    %v3378 = vpack.c.b16 %v3216, %v3214
    %v3379 = vpack.c.b16 %v3217, %v3215
    %v3380 = vpack.c.b16 %v3220, %v3218
    %v3381 = vpack.c.b16 %v3221, %v3219
    %v3382 = vpack.c.b16 %v3224, %v3222
    %v3383 = vpack.c.b16 %v3225, %v3223
    %v3384 = vpack.c.b16 %v3228, %v3226
    %v3385 = vpack.c.b16 %v3229, %v3227
    %v3386 = vpack.c.b16 %v3232, %v3230
    %v3387 = vpack.c.b16 %v3233, %v3231
    %v3388 = vpack.c.b16 %v3236, %v3234
    %v3389 = vpack.c.b16 %v3237, %v3235
    %v3390 = vpack.c.b16 %v3240, %v3238
    %v3391 = vpack.c.b16 %v3241, %v3239
    %v3392 = vpack.c.b16 %v3244, %v3242
    %v3393 = vpack.c.b16 %v3245, %v3243
    %v3394 = vpack.c.b16 %v3248, %v3246
    %v3395 = vpack.c.b16 %v3249, %v3247
    %v3396 = vpack.c.b16 %v3252, %v3250
    %v3397 = vpack.c.b16 %v3253, %v3251
    %v3398 = vpack.c.b16 %v3256, %v3254
    %v3399 = vpack.c.b16 %v3257, %v3255
    %v3400 = vpack.c.b16 %v3260, %v3258
    %v3401 = vpack.c.b16 %v3261, %v3259
    %v3402 = vpack.c.b16 %v3264, %v3262
    %v3403 = vpack.c.b16 %v3265, %v3263
    %v3404 = vpack.c.b16 %v3268, %v3266
    %v3405 = vpack.c.b16 %v3269, %v3267
    %v3406 = vpack.c.b16 %v3272, %v3270
    %v3407 = vpack.c.b16 %v3273, %v3271
    %v3408 = vpack.c.b16 %v3276, %v3274
    %v3409 = vpack.c.b16 %v3277, %v3275
    %v3410 = vpack.c.b16 %v3280, %v3278
    %v3411 = vpack.c.b16 %v3281, %v3279
    %v3412 = vpack.c.b16 %v3284, %v3282
    %v3413 = vpack.c.b16 %v3285, %v3283
    %3542 = vmatprep.subr.bf16.mxu0 %v3287
    %3543 = vmatpush1.bf16.msra.mxu0 %v3286
    %3544 = vmatprep.subr.bf16.mxu0 %v3289
    %3545 = vmatpush1.bf16.msra.mxu0 %v3288
    %3546 = vmatprep.subr.bf16.mxu0 %v3291
    %3547 = vmatpush1.bf16.msra.mxu0 %v3290
    %3548 = vmatprep.subr.bf16.mxu0 %v3293
    %3549 = vmatpush1.bf16.msra.mxu0 %v3292
    %3550 = vmatprep.subr.bf16.mxu0 %v3295
    %3551 = vmatpush1.bf16.msra.mxu0 %v3294
    %3552 = vmatprep.subr.bf16.mxu0 %v3297
    %3553 = vmatpush1.bf16.msra.mxu0 %v3296
    %3554 = vmatprep.subr.bf16.mxu0 %v3299
    %3555 = vmatpush1.bf16.msra.mxu0 %v3298
    %3556 = vmatprep.subr.bf16.mxu0 %v3301
    %3557 = vmatpush1.bf16.msra.mxu0 %v3300
    %3558 = vmatprep.subr.bf16.mxu0 %v3303
    %3559 = vmatpush1.bf16.msra.mxu0 %v3302
    %3560 = vmatprep.subr.bf16.mxu0 %v3305
    %3561 = vmatpush1.bf16.msra.mxu0 %v3304
    %3562 = vmatprep.subr.bf16.mxu0 %v3307
    %3563 = vmatpush1.bf16.msra.mxu0 %v3306
    %3564 = vmatprep.subr.bf16.mxu0 %v3309
    %3565 = vmatpush1.bf16.msra.mxu0 %v3308
    %3566 = vmatprep.subr.bf16.mxu0 %v3311
    %3567 = vmatpush1.bf16.msra.mxu0 %v3310
    %3568 = vmatprep.subr.bf16.mxu0 %v3313
    %3569 = vmatpush1.bf16.msra.mxu0 %v3312
    %3570 = vmatprep.subr.bf16.mxu0 %v3315
    %3571 = vmatpush1.bf16.msra.mxu0 %v3314
    %3572 = vmatprep.subr.bf16.mxu0 %v3317
    %3573 = vmatpush1.bf16.msra.mxu0 %v3316
    %3574 = vmatprep.mubr.bf16.mxu0 %v2731
    %3575 = vmatmul.mubr.bf16.gmra.mrb[0].mxu0 %v2730
    %v3576 = vpop.f32.mrb[0].mxu0
    %v3577 = vadd.f32 %v2895, %v3576
    %v3578 = vpop.f32.mrb[0].mxu0
    %v3579 = vadd.f32 %v2899, %v3578
    %v3580 = vpop.f32.mrb[0].mxu0
    %v3581 = vadd.f32 %v2895, %v3580
    %v3582 = vpop.f32.mrb[0].mxu0
    %v3583 = vadd.f32 %v2899, %v3582
    %3584 = vmatprep.mubr.bf16.mxu0 %v2739
    %3585 = vmatmul.mubr.bf16.gmra.mrb[0].mxu0 %v2738
    %v3586 = vpop.f32.mrb[0].mxu0
    %v3587 = vadd.f32 %v2895, %v3586
    %v3588 = vpop.f32.mrb[0].mxu0
    %v3589 = vadd.f32 %v2899, %v3588
    %v3590 = vpop.f32.mrb[0].mxu0
    %v3591 = vadd.f32 %v2895, %v3590
    %v3592 = vpop.f32.mrb[0].mxu0
    %v3593 = vadd.f32 %v2899, %v3592
    %3594 = vmatprep.mubr.bf16.mxu0 %v2747
    %3595 = vmatmul.mubr.bf16.gmra.mrb[0].mxu0 %v2746
    %v3596 = vpop.f32.mrb[0].mxu0
    %v3597 = vadd.f32 %v2895, %v3596
    %v3598 = vpop.f32.mrb[0].mxu0
    %v3599 = vadd.f32 %v2899, %v3598
    %v3600 = vpop.f32.mrb[0].mxu0
    %v3601 = vadd.f32 %v2895, %v3600
    %v3602 = vpop.f32.mrb[0].mxu0
    %v3603 = vadd.f32 %v2899, %v3602
    %3604 = vmatprep.mubr.bf16.mxu0 %v2755
    %3605 = vmatmul.mubr.bf16.gmra.mrb[0].mxu0 %v2754
    %v3606 = vpop.f32.mrb[0].mxu0
    %v3607 = vadd.f32 %v2895, %v3606
    %v3608 = vpop.f32.mrb[0].mxu0
    %v3609 = vadd.f32 %v2899, %v3608
    %v3610 = vpop.f32.mrb[0].mxu0
    %v3611 = vadd.f32 %v2895, %v3610
    %v3612 = vpop.f32.mrb[0].mxu0
    %v3613 = vadd.f32 %v2899, %v3612
    %3614 = vdwg.mxu0
    %3615 = vmatprep.subr.bf16.mxu0 %v3319
    %3616 = vmatpush1.bf16.msra.mxu0 %v3318
    %3617 = vmatprep.subr.bf16.mxu0 %v3321
    %3618 = vmatpush1.bf16.msra.mxu0 %v3320
    %3619 = vmatprep.subr.bf16.mxu0 %v3323
    %3620 = vmatpush1.bf16.msra.mxu0 %v3322
    %3621 = vmatprep.subr.bf16.mxu0 %v3325
    %3622 = vmatpush1.bf16.msra.mxu0 %v3324
    %3623 = vmatprep.subr.bf16.mxu0 %v3327
    %3624 = vmatpush1.bf16.msra.mxu0 %v3326
    %3625 = vmatprep.subr.bf16.mxu0 %v3329
    %3626 = vmatpush1.bf16.msra.mxu0 %v3328
    %3627 = vmatprep.subr.bf16.mxu0 %v3331
    %3628 = vmatpush1.bf16.msra.mxu0 %v3330
    %3629 = vmatprep.subr.bf16.mxu0 %v3333
    %3630 = vmatpush1.bf16.msra.mxu0 %v3332
    %3631 = vmatprep.subr.bf16.mxu0 %v3335
    %3632 = vmatpush1.bf16.msra.mxu0 %v3334
    %3633 = vmatprep.subr.bf16.mxu0 %v3337
    %3634 = vmatpush1.bf16.msra.mxu0 %v3336
    %3635 = vmatprep.subr.bf16.mxu0 %v3339
    %3636 = vmatpush1.bf16.msra.mxu0 %v3338
    %3637 = vmatprep.subr.bf16.mxu0 %v3341
    %3638 = vmatpush1.bf16.msra.mxu0 %v3340
    %3639 = vmatprep.subr.bf16.mxu0 %v3343
    %3640 = vmatpush1.bf16.msra.mxu0 %v3342
    %3641 = vmatprep.subr.bf16.mxu0 %v3345
    %3642 = vmatpush1.bf16.msra.mxu0 %v3344
    %3643 = vmatprep.subr.bf16.mxu0 %v3347
    %3644 = vmatpush1.bf16.msra.mxu0 %v3346
    %3645 = vmatprep.subr.bf16.mxu0 %v3349
    %3646 = vmatpush1.bf16.msra.mxu0 %v3348
    %3647 = vmatprep.mubr.bf16.mxu0 %v2733
    %3648 = vmatmul.mubr.bf16.gmra.mrb[0].mxu0 %v2732
    %v3649 = vpop.f32.mrb[0].mxu0
    %v3650 = vadd.f32 %v3577, %v3649
    %v3651 = vpop.f32.mrb[0].mxu0
    %v3652 = vadd.f32 %v3579, %v3651
    %v3653 = vpop.f32.mrb[0].mxu0
    %v3654 = vadd.f32 %v3581, %v3653
    %v3655 = vpop.f32.mrb[0].mxu0
    %v3656 = vadd.f32 %v3583, %v3655
    %3657 = vmatprep.mubr.bf16.mxu0 %v2741
    %3658 = vmatmul.mubr.bf16.gmra.mrb[0].mxu0 %v2740
    %v3659 = vpop.f32.mrb[0].mxu0
    %v3660 = vadd.f32 %v3587, %v3659
    %v3661 = vpop.f32.mrb[0].mxu0
    %v3662 = vadd.f32 %v3589, %v3661
    %v3663 = vpop.f32.mrb[0].mxu0
    %v3664 = vadd.f32 %v3591, %v3663
    %v3665 = vpop.f32.mrb[0].mxu0
    %v3666 = vadd.f32 %v3593, %v3665
    %3667 = vmatprep.mubr.bf16.mxu0 %v2749
    %3668 = vmatmul.mubr.bf16.gmra.mrb[0].mxu0 %v2748
    %v3669 = vpop.f32.mrb[0].mxu0
    %v3670 = vadd.f32 %v3597, %v3669
    %v3671 = vpop.f32.mrb[0].mxu0
    %v3672 = vadd.f32 %v3599, %v3671
    %v3673 = vpop.f32.mrb[0].mxu0
    %v3674 = vadd.f32 %v3601, %v3673
    %v3675 = vpop.f32.mrb[0].mxu0
    %v3676 = vadd.f32 %v3603, %v3675
    %3677 = vmatprep.mubr.bf16.mxu0 %v2757
    %3678 = vmatmul.mubr.bf16.gmra.mrb[0].mxu0 %v2756
    %v3679 = vpop.f32.mrb[0].mxu0
    %v3680 = vadd.f32 %v3607, %v3679
    %v3681 = vpop.f32.mrb[0].mxu0
    %v3682 = vadd.f32 %v3609, %v3681
    %v3683 = vpop.f32.mrb[0].mxu0
    %v3684 = vadd.f32 %v3611, %v3683
    %v3685 = vpop.f32.mrb[0].mxu0
    %v3686 = vadd.f32 %v3613, %v3685
    %3687 = vdwg.mxu0
    %3688 = vmatprep.subr.bf16.mxu0 %v3351
    %3689 = vmatpush1.bf16.msra.mxu0 %v3350
    %3690 = vmatprep.subr.bf16.mxu0 %v3353
    %3691 = vmatpush1.bf16.msra.mxu0 %v3352
    %3692 = vmatprep.subr.bf16.mxu0 %v3355
    %3693 = vmatpush1.bf16.msra.mxu0 %v3354
    %3694 = vmatprep.subr.bf16.mxu0 %v3357
    %3695 = vmatpush1.bf16.msra.mxu0 %v3356
    %3696 = vmatprep.subr.bf16.mxu0 %v3359
    %3697 = vmatpush1.bf16.msra.mxu0 %v3358
    %3698 = vmatprep.subr.bf16.mxu0 %v3361
    %3699 = vmatpush1.bf16.msra.mxu0 %v3360
    %3700 = vmatprep.subr.bf16.mxu0 %v3363
    %3701 = vmatpush1.bf16.msra.mxu0 %v3362
    %3702 = vmatprep.subr.bf16.mxu0 %v3365
    %3703 = vmatpush1.bf16.msra.mxu0 %v3364
    %3704 = vmatprep.subr.bf16.mxu0 %v3367
    %3705 = vmatpush1.bf16.msra.mxu0 %v3366
    %3706 = vmatprep.subr.bf16.mxu0 %v3369
    %3707 = vmatpush1.bf16.msra.mxu0 %v3368
    %3708 = vmatprep.subr.bf16.mxu0 %v3371
    %3709 = vmatpush1.bf16.msra.mxu0 %v3370
    %3710 = vmatprep.subr.bf16.mxu0 %v3373
    %3711 = vmatpush1.bf16.msra.mxu0 %v3372
    %3712 = vmatprep.subr.bf16.mxu0 %v3375
    %3713 = vmatpush1.bf16.msra.mxu0 %v3374
    %3714 = vmatprep.subr.bf16.mxu0 %v3377
    %3715 = vmatpush1.bf16.msra.mxu0 %v3376
    %3716 = vmatprep.subr.bf16.mxu0 %v3379
    %3717 = vmatpush1.bf16.msra.mxu0 %v3378
    %3718 = vmatprep.subr.bf16.mxu0 %v3381
    %3719 = vmatpush1.bf16.msra.mxu0 %v3380
    %3720 = vmatprep.mubr.bf16.mxu0 %v2735
    %3721 = vmatmul.mubr.bf16.gmra.mrb[0].mxu0 %v2734
    %v3722 = vpop.f32.mrb[0].mxu0
    %v3723 = vadd.f32 %v3650, %v3722
    %v3724 = vpop.f32.mrb[0].mxu0
    %v3725 = vadd.f32 %v3652, %v3724
    %v3726 = vpop.f32.mrb[0].mxu0
    %v3727 = vadd.f32 %v3654, %v3726
    %v3728 = vpop.f32.mrb[0].mxu0
    %v3729 = vadd.f32 %v3656, %v3728
    %3730 = vmatprep.mubr.bf16.mxu0 %v2743
    %3731 = vmatmul.mubr.bf16.gmra.mrb[0].mxu0 %v2742
    %v3732 = vpop.f32.mrb[0].mxu0
    %v3733 = vadd.f32 %v3660, %v3732
    %v3734 = vpop.f32.mrb[0].mxu0
    %v3735 = vadd.f32 %v3662, %v3734
    %v3736 = vpop.f32.mrb[0].mxu0
    %v3737 = vadd.f32 %v3664, %v3736
    %v3738 = vpop.f32.mrb[0].mxu0
    %v3739 = vadd.f32 %v3666, %v3738
    %3740 = vmatprep.mubr.bf16.mxu0 %v2751
    %3741 = vmatmul.mubr.bf16.gmra.mrb[0].mxu0 %v2750
    %v3742 = vpop.f32.mrb[0].mxu0
    %v3743 = vadd.f32 %v3670, %v3742
    %v3744 = vpop.f32.mrb[0].mxu0
    %v3745 = vadd.f32 %v3672, %v3744
    %v3746 = vpop.f32.mrb[0].mxu0
    %v3747 = vadd.f32 %v3674, %v3746
    %v3748 = vpop.f32.mrb[0].mxu0
    %v3749 = vadd.f32 %v3676, %v3748
    %3750 = vmatprep.mubr.bf16.mxu0 %v2759
    %3751 = vmatmul.mubr.bf16.gmra.mrb[0].mxu0 %v2758
    %v3752 = vpop.f32.mrb[0].mxu0
    %v3753 = vadd.f32 %v3680, %v3752
    %v3754 = vpop.f32.mrb[0].mxu0
    %v3755 = vadd.f32 %v3682, %v3754
    %v3756 = vpop.f32.mrb[0].mxu0
    %v3757 = vadd.f32 %v3684, %v3756
    %v3758 = vpop.f32.mrb[0].mxu0
    %v3759 = vadd.f32 %v3686, %v3758
    %3760 = vdwg.mxu0
    %3761 = vmatprep.subr.bf16.mxu0 %v3383
    %3762 = vmatpush1.bf16.msra.mxu0 %v3382
    %3763 = vmatprep.subr.bf16.mxu0 %v3385
    %3764 = vmatpush1.bf16.msra.mxu0 %v3384
    %3765 = vmatprep.subr.bf16.mxu0 %v3387
    %3766 = vmatpush1.bf16.msra.mxu0 %v3386
    %3767 = vmatprep.subr.bf16.mxu0 %v3389
    %3768 = vmatpush1.bf16.msra.mxu0 %v3388
    %3769 = vmatprep.subr.bf16.mxu0 %v3391
    %3770 = vmatpush1.bf16.msra.mxu0 %v3390
    %3771 = vmatprep.subr.bf16.mxu0 %v3393
    %3772 = vmatpush1.bf16.msra.mxu0 %v3392
    %3773 = vmatprep.subr.bf16.mxu0 %v3395
    %3774 = vmatpush1.bf16.msra.mxu0 %v3394
    %3775 = vmatprep.subr.bf16.mxu0 %v3397
    %3776 = vmatpush1.bf16.msra.mxu0 %v3396
    %3777 = vmatprep.subr.bf16.mxu0 %v3399
    %3778 = vmatpush1.bf16.msra.mxu0 %v3398
    %3779 = vmatprep.subr.bf16.mxu0 %v3401
    %3780 = vmatpush1.bf16.msra.mxu0 %v3400
    %3781 = vmatprep.subr.bf16.mxu0 %v3403
    %3782 = vmatpush1.bf16.msra.mxu0 %v3402
    %3783 = vmatprep.subr.bf16.mxu0 %v3405
    %3784 = vmatpush1.bf16.msra.mxu0 %v3404
    %3785 = vmatprep.subr.bf16.mxu0 %v3407
    %3786 = vmatpush1.bf16.msra.mxu0 %v3406
    %3787 = vmatprep.subr.bf16.mxu0 %v3409
    %3788 = vmatpush1.bf16.msra.mxu0 %v3408
    %3789 = vmatprep.subr.bf16.mxu0 %v3411
    %3790 = vmatpush1.bf16.msra.mxu0 %v3410
    %3791 = vmatprep.subr.bf16.mxu0 %v3413
    %3792 = vmatpush1.bf16.msra.mxu0 %v3412
    %3793 = vmatprep.mubr.bf16.mxu0 %v2737
    %3794 = vmatmul.mubr.bf16.gmra.mrb[0].mxu0 %v2736
    %v3795 = vpop.f32.mrb[0].mxu0
    %v3796 = vadd.f32 %v3723, %v3795
    %v3797 = vpop.f32.mrb[0].mxu0
    %v3798 = vadd.f32 %v3725, %v3797
    %v3799 = vpop.f32.mrb[0].mxu0
    %v3800 = vadd.f32 %v3727, %v3799
    %v3801 = vpop.f32.mrb[0].mxu0
    %v3802 = vadd.f32 %v3729, %v3801
    %3803 = vmatprep.mubr.bf16.mxu0 %v2745
    %3804 = vmatmul.mubr.bf16.gmra.mrb[0].mxu0 %v2744
    %v3805 = vpop.f32.mrb[0].mxu0
    %v3806 = vadd.f32 %v3733, %v3805
    %v3807 = vpop.f32.mrb[0].mxu0
    %v3808 = vadd.f32 %v3735, %v3807
    %v3809 = vpop.f32.mrb[0].mxu0
    %v3810 = vadd.f32 %v3737, %v3809
    %v3811 = vpop.f32.mrb[0].mxu0
    %v3812 = vadd.f32 %v3739, %v3811
    %3813 = vmatprep.mubr.bf16.mxu0 %v2753
    %3814 = vmatmul.mubr.bf16.gmra.mrb[0].mxu0 %v2752
    %v3815 = vpop.f32.mrb[0].mxu0
    %v3816 = vadd.f32 %v3743, %v3815
    %v3817 = vpop.f32.mrb[0].mxu0
    %v3818 = vadd.f32 %v3745, %v3817
    %v3819 = vpop.f32.mrb[0].mxu0
    %v3820 = vadd.f32 %v3747, %v3819
    %v3821 = vpop.f32.mrb[0].mxu0
    %v3822 = vadd.f32 %v3749, %v3821
    %3823 = vmatprep.mubr.bf16.mxu0 %v2761
    %3824 = vmatmul.mubr.bf16.gmra.mrb[0].mxu0 %v2760
    %v3825 = vpop.f32.mrb[0].mxu0
    %v3826 = vadd.f32 %v3753, %v3825
    %v3827 = vpop.f32.mrb[0].mxu0
    %v3828 = vadd.f32 %v3755, %v3827
    %v3829 = vpop.f32.mrb[0].mxu0
    %v3830 = vadd.f32 %v3757, %v3829
    %v3831 = vpop.f32.mrb[0].mxu0
    %v3832 = vadd.f32 %v3759, %v3831
    %3833 = vdwg.mxu0
    %v3834 = vtanh.pop %v3796
    %v3835 = vtanh.pop %v3798
    %v3836 = vtanh.pop %v3800
    %v3837 = vtanh.pop %v3802
    %v3838 = vtanh.pop %v3806
    %v3839 = vtanh.pop %v3808
    %v3840 = vtanh.pop %v3810
    %v3841 = vtanh.pop %v3812
    %v3842 = vtanh.pop %v3816
    %v3843 = vtanh.pop %v3818
    %v3844 = vtanh.pop %v3820
    %v3845 = vtanh.pop %v3822
    %v3846 = vtanh.pop %v3826
    %v3847 = vtanh.pop %v3828
    %v3848 = vtanh.pop %v3830
    %v3849 = vtanh.pop %v3832
    %v3850 = vpack.c.bf16 %v3836, %v3834
    %v3851 = vpack.c.bf16 %v3837, %v3835
    %v3852 = vpack.c.bf16 %v3840, %v3838
    %v3853 = vpack.c.bf16 %v3841, %v3839
    %v3854 = vpack.c.bf16 %v3844, %v3842
    %v3855 = vpack.c.bf16 %v3845, %v3843
    %v3856 = vpack.c.bf16 %v3848, %v3846
    %v3857 = vpack.c.bf16 %v3849, %v3847
    %v3866 = vunpack.c.l.b16 %v3850
    %v3867 = vunpack.c.l.b16 %v3851
    %v3868 = vunpack.c.h.b16 %v3850
    %v3869 = vunpack.c.h.b16 %v3851
    %v3870 = vunpack.c.l.b16 %v3852
    %v3871 = vunpack.c.l.b16 %v3853
    %v3872 = vunpack.c.h.b16 %v3852
    %v3873 = vunpack.c.h.b16 %v3853
    %v3874 = vunpack.c.l.b16 %v3854
    %v3875 = vunpack.c.l.b16 %v3855
    %v3876 = vunpack.c.h.b16 %v3854
    %v3877 = vunpack.c.h.b16 %v3855
    %v3878 = vunpack.c.l.b16 %v3856
    %v3879 = vunpack.c.l.b16 %v3857
    %v3880 = vunpack.c.h.b16 %v3856
    %v3881 = vunpack.c.h.b16 %v3857
    %v3882 = vpack.c.b16 %v3867, %v3866
    %v3883 = vpack.c.b16 %v3869, %v3868
    %v3884 = vpack.c.b16 %v3871, %v3870
    %v3885 = vpack.c.b16 %v3873, %v3872
    %v3886 = vpack.c.b16 %v3875, %v3874
    %v3887 = vpack.c.b16 %v3877, %v3876
    %v3888 = vpack.c.b16 %v3879, %v3878
    %v3889 = vpack.c.b16 %v3881, %v3880
    %3898 = vst [vmem:[#allocation11] sm:$0xff] %v3882
    %3899 = vst [vmem:[#allocation11 + $0x8] sm:$0xff] %v3883
    %3900 = vst [vmem:[#allocation11 + $0x10] sm:$0xff] %v3884
    %3901 = vst [vmem:[#allocation11 + $0x18] sm:$0xff] %v3885
    %3902 = vst [vmem:[#allocation11 + $0x20] sm:$0xff] %v3886
    %3903 = vst [vmem:[#allocation11 + $0x28] sm:$0xff] %v3887
    %3904 = vst [vmem:[#allocation11 + $0x30] sm:$0xff] %v3888
    %3905 = vst [vmem:[#allocation11 + $0x38] sm:$0xff] %v3889
    // Predicated region
    $region50: #{tpu_custom_call.1} parent=1 // pred_check
      _
    $region51: #{tpu_custom_call.1} parent=1 // pred_check_branch
      %3907 = sbr.rel (0) target = $region53
    $region52: #{tpu_custom_call.1} parent=1 // pred_region
      %s3909 = ssub.s32 1024, 1024
      %3910 = vsyncadd [#allocation5], %s3909
      %s3911 = sshll.u32 [#allocation11], 4
      %s3912 = int_to_ptr.vmem [resolvable:$true] %s3911
      %3917 = dma.vmem_to_hbm [thread:$0]  %s3912, 1024, %s7, [#allocation5], 128, 128, 8
    $region53: #{tpu_custom_call.1} parent=1 // pred_fallthru
      _
    // Predicated region
    $region54: #{tpu_custom_call.1} parent=1 // pred_check
      _
    $region55: #{tpu_custom_call.1} parent=1 // pred_check_branch
      %3919 = sbr.rel (0) target = $region57
    $region56: #{tpu_custom_call.1} parent=1 // pred_region
      %3920 = dma.done [#allocation5], 1024
    $region57: #{tpu_custom_call.1} parent=1 // pred_fallthru
      _
    %3921 = vsyncpa [#allocation4], 1
    %3922 = vsyncpa [#allocation7], 1
    %3923 = vsyncpa [#allocation10], 1
    %3924 = vsyncpa [#allocation5], 1

</llo_original>
